<compile_context>
chip_gen: v6e
topology: v6e:2x2x1
jax: 0.10.0
libtpu: 0.0.40
codegen_flags: <defaults>
</compile_context>

<pallas_src>
import math
import functools

import numpy as np
import jax
import jax.numpy as jnp
from jax import lax
from jax.experimental import pallas as pl
from jax.experimental.pallas import tpu as pltpu


# --------------------------------------------------------------------------
# in-kernel helpers (f32 math; only ops with guaranteed Mosaic lowerings)
# --------------------------------------------------------------------------
def _erf(x):
    # Abramowitz & Stegun 7.1.26 rational approximation (max abs err ~1.5e-7).
    a1, a2, a3, a4, a5 = 0.254829592, -0.284496736, 1.421413741, -1.453152027, 1.061405429
    p = 0.3275911
    s = jnp.where(x >= 0.0, 1.0, -1.0)
    ax = jnp.abs(x)
    # EUP approx-reciprocal instead of a true divide (otherwise-idle slot).
    t = pl.reciprocal(1.0 + p * ax, approx=True)
    poly = ((((a5 * t + a4) * t + a3) * t + a2) * t + a1) * t
    return s * (1.0 - poly * jnp.exp(-ax * ax))


def _gelu_exact(x):
    # matches F.gelu default (erf-based "exact" gelu)
    return 0.5 * x * (1.0 + _erf(x * (1.0 / math.sqrt(2.0))))


def _layernorm(x, gamma, beta, eps=1e-5):
    mu = jnp.mean(x, axis=-1, keepdims=True)
    var = jnp.mean(jnp.square(x - mu), axis=-1, keepdims=True)
    return (x - mu) * lax.rsqrt(var + eps) * gamma + beta


# --------------------------------------------------------------------------
# fused Block kernel: whole (B*S, D) token slab in one grid step
# --------------------------------------------------------------------------
def _block_kernel(n_heads, batch, seq, has_mask, *refs):
    if has_mask:
        (x_ref, mask_ref, ln_ref, wqkv_ref, bqkv_ref,
         w1_ref, b1_ref, w2_ref, b2_ref, out_ref) = refs
    else:
        (x_ref, ln_ref, wqkv_ref, bqkv_ref,
         w1_ref, b1_ref, w2_ref, b2_ref, out_ref) = refs
        mask_ref = None

    x = x_ref[...]                        # (B*S, D) f32
    _, D = x.shape
    H = n_heads
    Dh = D // H
    scale = 1.0 / math.sqrt(Dh)

    lnp = ln_ref[...]                     # (4, D): [ln1_g, ln1_b, ln2_g, ln2_b]

    # ---- attention branch: out = x + SDPA(LN1(x)) ----
    h = _layernorm(x, lnp[0:1], lnp[1:2])                           # f32
    qkv = jnp.dot(h.astype(jnp.bfloat16), wqkv_ref[...],            # bf16 x bf16
                  preferred_element_type=jnp.float32) + bqkv_ref[...]   # (B*S, 3D) f32
    mask = mask_ref[...] if has_mask else None                      # (S, S) f32

    for b in range(batch):                # static unroll (per-batch attention)
        r0, r1 = b * seq, (b + 1) * seq
        for hd in range(H):               # static unroll over heads
            # torch view(B,S,H,3,Dh): per head, columns are [q | k | v]
            base = hd * 3 * Dh
            q = qkv[r0:r1, base:base + Dh].astype(jnp.bfloat16)          # (S, Dh)
            k = qkv[r0:r1, base + Dh:base + 2 * Dh].astype(jnp.bfloat16)
            v = qkv[r0:r1, base + 2 * Dh:base + 3 * Dh].astype(jnp.bfloat16)
            # scores = q @ k^T * scale (+ mask), accumulated in f32
            s = lax.dot_general(q, k, (((1,), (1,)), ((), ())),
                                preferred_element_type=jnp.float32) * scale
            if has_mask:
                s = s + mask
            s = s - jnp.max(s, axis=-1, keepdims=True)
            p = jnp.exp(s)
            p = p * pl.reciprocal(jnp.sum(p, axis=-1, keepdims=True), approx=True)
            ctx = jnp.dot(p.astype(jnp.bfloat16), v,
                          preferred_element_type=jnp.float32)            # (S, Dh) f32
            # fused residual: write x-slice + head context directly into the
            # 128-lane-aligned output slice (no concat / extra copies)
            out_ref[r0:r1, hd * Dh:(hd + 1) * Dh] = (
                x[r0:r1, hd * Dh:(hd + 1) * Dh] + ctx)

    # ---- MLP branch: out = x1 + fc2(gelu(fc1(LN2(x1)))) ----
    x1 = out_ref[...]                                                # (B*S, D) f32
    h2 = _layernorm(x1, lnp[2:3], lnp[3:4])
    z = jnp.dot(h2.astype(jnp.bfloat16), w1_ref[...],
                preferred_element_type=jnp.float32) + b1_ref[...]
    z = _gelu_exact(z)
    y = jnp.dot(z.astype(jnp.bfloat16), w2_ref[...],
                preferred_element_type=jnp.float32) + b2_ref[...]
    out_ref[...] = x1 + y


def block_forward(x, params, n_heads, mask=None):
    """x: (B, S, D) fp32. mask: optional (S, S) additive float mask."""
    B, S, D = x.shape
    x2d = x.reshape(B * S, D).astype(jnp.float32)       # fuse batch into rows

    # pre-transpose torch-convention (out, in) weights -> (in, out); cast bf16
    wqkv = params["Wqkv"].T.astype(jnp.bfloat16)
    w1 = params["W1"].T.astype(jnp.bfloat16)
    w2 = params["W2"].T.astype(jnp.bfloat16)
    bqkv = params["bqkv"].reshape(1, -1).astype(jnp.float32)
    b1 = params["b1"].reshape(1, -1).astype(jnp.float32)
    b2 = params["b2"].reshape(1, -1).astype(jnp.float32)
    # pack the four LayerNorm vectors into one (4, D) block
    ln_pack = jnp.stack([params["ln1_g"], params["ln1_b"],
                         params["ln2_g"], params["ln2_b"]]).astype(jnp.float32)

    has_mask = mask is not None
    full = lambda shape: pl.BlockSpec(shape, lambda i: tuple(0 for _ in shape))

    in_arrays = [x2d]
    in_specs = [full((B * S, D))]
    if has_mask:
        in_arrays.append(mask.astype(jnp.float32))
        in_specs.append(full((S, S)))
    in_arrays += [ln_pack, wqkv, bqkv, w1, b1, w2, b2]
    in_specs += [
        full((4, D)),
        full((D, 3 * D)), full((1, 3 * D)),
        full((D, 4 * D)), full((1, 4 * D)),
        full((4 * D, D)), full((1, D)),
    ]

    out2d = pl.pallas_call(
        functools.partial(_block_kernel, n_heads, B, S, has_mask),
        out_shape=jax.ShapeDtypeStruct((B * S, D), jnp.float32),
        grid=(1,),
        in_specs=in_specs,
        out_specs=full((B * S, D)),
        compiler_params=pltpu.CompilerParams(
            dimension_semantics=("arbitrary",)),
    )(*in_arrays)
    return out2d.reshape(B, S, D)


# --------------------------------------------------------------------------
# pure-JAX f32 reference mirroring the PyTorch forward (eval / no dropout)
# --------------------------------------------------------------------------
def block_reference(x, params, n_heads, mask=None):
    B, S, D = x.shape
    H = n_heads
    Dh = D // H

    def ln(v, g, b):
        mu = jnp.mean(v, axis=-1, keepdims=True)
        var = jnp.mean(jnp.square(v - mu), axis=-1, keepdims=True)
        return (v - mu) / jnp.sqrt(var + 1e-5) * g + b

    h = ln(x, params["ln1_g"], params["ln1_b"])
    qkv = h @ params["Wqkv"].T + params["bqkv"]                 # (B, S, 3D)
    qkv = qkv.reshape(B, S, H, 3, Dh).transpose(0, 2, 3, 1, 4)  # (B, H, 3, S, Dh)
    q, k, v = qkv[:, :, 0], qkv[:, :, 1], qkv[:, :, 2]
    scores = jnp.einsum("bhqd,bhkd->bhqk", q, k) / math.sqrt(Dh)
    if mask is not None:
        scores = scores + mask
    w = jax.nn.softmax(scores, axis=-1)
    ctx = jnp.einsum("bhqk,bhkd->bhqd", w, v)
    ctx = ctx.transpose(0, 2, 1, 3).reshape(B, S, D)
    x = x + ctx

    h2 = ln(x, params["ln2_g"], params["ln2_b"])
    z = jax.nn.gelu(h2 @ params["W1"].T + params["b1"], approximate=False)
    y = z @ params["W2"].T + params["b2"]
    return x + y


# --------------------------------------------------------------------------
def init_params(key, n_dim):
    D = n_dim
    ks = jax.random.split(key, 7)

    def linear(k, fan_in, fan_out):
        kw, kb = jax.random.split(k)
        bound = 1.0 / math.sqrt(fan_in)
        W = jax.random.uniform(kw, (fan_out, fan_in), jnp.float32, -bound, bound)
        b = jax.random.uniform(kb, (fan_out,), jnp.float32, -bound, bound)
        return W, b

    Wqkv, bqkv = linear(ks[0], D, 3 * D)
    W1, b1 = linear(ks[1], D, 4 * D)
    W2, b2 = linear(ks[2], 4 * D, D)
    return dict(
        Wqkv=Wqkv, bqkv=bqkv, W1=W1, b1=b1, W2=W2, b2=b2,
        ln1_g=1.0 + 0.1 * jax.random.normal(ks[3], (D,), jnp.float32),
        ln1_b=0.1 * jax.random.normal(ks[4], (D,), jnp.float32),
        ln2_g=1.0 + 0.1 * jax.random.normal(ks[5], (D,), jnp.float32),
        ln2_b=0.1 * jax.random.normal(ks[6], (D,), jnp.float32),
    )


if __name__ == "__main__":
    B, S, D, H = 2, 16, 256, 2   # n_dim=256, n_heads=2 -> head_dim=128 (lane-aligned)

    key = jax.random.PRNGKey(0)
    kx, kp = jax.random.split(key)
    x = jax.random.normal(kx, (B, S, D), jnp.float32)
    params = init_params(kp, D)

    # bf16 MXU operands with f32 accumulation -> compare to f32 reference at
    # a bf16-appropriate tolerance.
    RTOL, ATOL = 2e-2, 1e-2

    # no-mask case (mask input is skipped entirely)
    out = jax.block_until_ready(block_forward(x, params, n_heads=H, mask=None))
    ref = block_reference(x, params, n_heads=H, mask=None)
    np.testing.assert_allclose(np.asarray(out), np.asarray(ref), rtol=RTOL, atol=ATOL)

    # causal additive mask case (mask added to f32 scores inside the kernel)
    causal = jnp.where(jnp.tril(jnp.ones((S, S), bool)), 0.0, -1e9).astype(jnp.float32)
    out_m = jax.block_until_ready(block_forward(x, params, n_heads=H, mask=causal))
    ref_m = block_reference(x, params, n_heads=H, mask=causal)
    np.testing.assert_allclose(np.asarray(out_m), np.asarray(ref_m), rtol=RTOL, atol=ATOL)

    print("KERNEL_OK")
</pallas_src>

<mosaic_0001>
module attributes {stable_mosaic.version = 11 : i64} {
  func.func @_block_kernel(%arg0: i32, %arg1: memref<32x256xf32, #tpu.memory_space<vmem>>, %arg2: memref<4x256xf32, #tpu.memory_space<vmem>>, %arg3: memref<256x768xbf16, #tpu.memory_space<vmem>>, %arg4: memref<1x768xf32, #tpu.memory_space<vmem>>, %arg5: memref<256x1024xbf16, #tpu.memory_space<vmem>>, %arg6: memref<1x1024xf32, #tpu.memory_space<vmem>>, %arg7: memref<1024x256xbf16, #tpu.memory_space<vmem>>, %arg8: memref<1x256xf32, #tpu.memory_space<vmem>>, %arg9: memref<32x256xf32, #tpu.memory_space<vmem>>) attributes {dimension_semantics = [#tpu.dimension_semantics<arbitrary>], iteration_bounds = array<i64: 1>, scalar_prefetch = 0 : i64, scratch_operands = 0 : i64, tpu.core_type = #tpu.core_type<tc>, window_params = [{pipeline_mode = #tpu.pipeline_mode<synchronous>, transform_indices = @transform_0, window_bounds = array<i64: 32, 256>}, {pipeline_mode = #tpu.pipeline_mode<synchronous>, transform_indices = @transform_1, window_bounds = array<i64: 4, 256>}, {pipeline_mode = #tpu.pipeline_mode<synchronous>, transform_indices = @transform_2, window_bounds = array<i64: 256, 768>}, {pipeline_mode = #tpu.pipeline_mode<synchronous>, transform_indices = @transform_3, window_bounds = array<i64: 1, 768>}, {pipeline_mode = #tpu.pipeline_mode<synchronous>, transform_indices = @transform_4, window_bounds = array<i64: 256, 1024>}, {pipeline_mode = #tpu.pipeline_mode<synchronous>, transform_indices = @transform_5, window_bounds = array<i64: 1, 1024>}, {pipeline_mode = #tpu.pipeline_mode<synchronous>, transform_indices = @transform_6, window_bounds = array<i64: 1024, 256>}, {pipeline_mode = #tpu.pipeline_mode<synchronous>, transform_indices = @transform_7, window_bounds = array<i64: 1, 256>}, {pipeline_mode = #tpu.pipeline_mode<synchronous>, transform_indices = @transform_8, window_bounds = array<i64: 32, 256>}]} {
    %c0 = arith.constant 0 : index
    %c0_0 = arith.constant 0 : index
    %0 = vector.load %arg1[%c0, %c0_0] : memref<32x256xf32, #tpu.memory_space<vmem>>, vector<32x256xf32>
    %c0_1 = arith.constant 0 : index
    %c0_2 = arith.constant 0 : index
    %1 = vector.load %arg2[%c0_1, %c0_2] : memref<4x256xf32, #tpu.memory_space<vmem>>, vector<4x256xf32>
    %2 = vector.extract_strided_slice %1 {offsets = [0, 0], sizes = [1, 256], strides = [1, 1]} : vector<4x256xf32> to vector<1x256xf32>
    %3 = vector.extract_strided_slice %1 {offsets = [1, 0], sizes = [1, 256], strides = [1, 1]} : vector<4x256xf32> to vector<1x256xf32>
    %cst = arith.constant dense<0.000000e+00> : vector<32xf32>
    %4 = vector.multi_reduction <add>, %0, %cst [1] : vector<32x256xf32> to vector<32xf32>
    %5 = vector.shape_cast %4 : vector<32xf32> to vector<32x1xf32>
    %cst_3 = arith.constant 2.560000e+02 : f32
    %6 = vector.broadcast %cst_3 : f32 to vector<32x1xf32>
    %7 = arith.divf %5, %6 : vector<32x1xf32>
    %8 = vector.broadcast %7 : vector<32x1xf32> to vector<32x256xf32>
    %9 = arith.subf %0, %8 : vector<32x256xf32>
    %10 = arith.mulf %9, %9 : vector<32x256xf32>
    %cst_4 = arith.constant dense<0.000000e+00> : vector<32xf32>
    %11 = vector.multi_reduction <add>, %10, %cst_4 [1] : vector<32x256xf32> to vector<32xf32>
    %12 = vector.shape_cast %11 : vector<32xf32> to vector<32x1xf32>
    %cst_5 = arith.constant 2.560000e+02 : f32
    %13 = vector.broadcast %cst_5 : f32 to vector<32x1xf32>
    %14 = arith.divf %12, %13 : vector<32x1xf32>
    %15 = vector.broadcast %7 : vector<32x1xf32> to vector<32x256xf32>
    %16 = arith.subf %0, %15 : vector<32x256xf32>
    %cst_6 = arith.constant 9.99999974E-6 : f32
    %17 = vector.broadcast %cst_6 : f32 to vector<32x1xf32>
    %18 = arith.addf %14, %17 : vector<32x1xf32>
    %19 = math.rsqrt %18 : vector<32x1xf32>
    %20 = vector.broadcast %19 : vector<32x1xf32> to vector<32x256xf32>
    %21 = arith.mulf %16, %20 : vector<32x256xf32>
    %22 = vector.broadcast %2 : vector<1x256xf32> to vector<32x256xf32>
    %23 = arith.mulf %21, %22 : vector<32x256xf32>
    %24 = vector.broadcast %3 : vector<1x256xf32> to vector<32x256xf32>
    %25 = arith.addf %23, %24 : vector<32x256xf32>
    %26 = arith.truncf %25 : vector<32x256xf32> to vector<32x256xbf16>
    %c0_7 = arith.constant 0 : index
    %c0_8 = arith.constant 0 : index
    %27 = vector.load %arg3[%c0_7, %c0_8] : memref<256x768xbf16, #tpu.memory_space<vmem>>, vector<256x768xbf16>
    %cst_9 = arith.constant dense<0.000000e+00> : vector<32x768xf32>
    %28 = tpu.matmul %26, %27, %cst_9 {dimension_numbers = #tpu.dot_dimension_numbers<[1], [0], [0], [1], [0, 0, 1, 1], [], []>} : vector<32x256xbf16>, vector<256x768xbf16>, vector<32x768xf32> -> vector<32x768xf32>
    %c0_10 = arith.constant 0 : index
    %c0_11 = arith.constant 0 : index
    %29 = vector.load %arg4[%c0_10, %c0_11] : memref<1x768xf32, #tpu.memory_space<vmem>>, vector<1x768xf32>
    %30 = vector.broadcast %29 : vector<1x768xf32> to vector<32x768xf32>
    %31 = arith.addf %28, %30 : vector<32x768xf32>
    %32 = vector.extract_strided_slice %31 {offsets = [0, 0], sizes = [16, 128], strides = [1, 1]} : vector<32x768xf32> to vector<16x128xf32>
    %33 = arith.truncf %32 : vector<16x128xf32> to vector<16x128xbf16>
    %34 = vector.extract_strided_slice %31 {offsets = [0, 128], sizes = [16, 128], strides = [1, 1]} : vector<32x768xf32> to vector<16x128xf32>
    %35 = arith.truncf %34 : vector<16x128xf32> to vector<16x128xbf16>
    %36 = vector.extract_strided_slice %31 {offsets = [0, 256], sizes = [16, 128], strides = [1, 1]} : vector<32x768xf32> to vector<16x128xf32>
    %37 = arith.truncf %36 : vector<16x128xf32> to vector<16x128xbf16>
    %cst_12 = arith.constant dense<0.000000e+00> : vector<16x16xf32>
    %38 = tpu.matmul %33, %35, %cst_12 {dimension_numbers = #tpu.dot_dimension_numbers<[1], [1], [0], [0], [0, 0, 1, 0], [], []>} : vector<16x128xbf16>, vector<16x128xbf16>, vector<16x16xf32> -> vector<16x16xf32>
    %cst_13 = arith.constant 0.0883883461 : f32
    %39 = vector.broadcast %cst_13 : f32 to vector<16x16xf32>
    %40 = arith.mulf %38, %39 : vector<16x16xf32>
    %cst_14 = arith.constant dense<0xFF800000> : vector<16xf32>
    %41 = vector.multi_reduction <maximumf>, %40, %cst_14 [1] : vector<16x16xf32> to vector<16xf32>
    %42 = vector.shape_cast %41 : vector<16xf32> to vector<16x1xf32>
    %43 = vector.broadcast %42 : vector<16x1xf32> to vector<16x16xf32>
    %44 = arith.subf %40, %43 : vector<16x16xf32>
    %45 = math.exp %44 : vector<16x16xf32>
    %cst_15 = arith.constant dense<0.000000e+00> : vector<16xf32>
    %46 = vector.multi_reduction <add>, %45, %cst_15 [1] : vector<16x16xf32> to vector<16xf32>
    %47 = vector.shape_cast %46 : vector<16xf32> to vector<16x1xf32>
    %48 = tpu.reciprocal %47 {approx = true} : vector<16x1xf32> -> vector<16x1xf32>
    %49 = vector.broadcast %48 : vector<16x1xf32> to vector<16x16xf32>
    %50 = arith.mulf %45, %49 : vector<16x16xf32>
    %51 = arith.truncf %50 : vector<16x16xf32> to vector<16x16xbf16>
    %cst_16 = arith.constant dense<0.000000e+00> : vector<16x128xf32>
    %52 = tpu.matmul %51, %37, %cst_16 {dimension_numbers = #tpu.dot_dimension_numbers<[1], [0], [0], [1], [0, 0, 1, 1], [], []>} : vector<16x16xbf16>, vector<16x128xbf16>, vector<16x128xf32> -> vector<16x128xf32>
    %53 = vector.extract_strided_slice %0 {offsets = [0, 0], sizes = [16, 128], strides = [1, 1]} : vector<32x256xf32> to vector<16x128xf32>
    %54 = arith.addf %53, %52 : vector<16x128xf32>
    %c0_17 = arith.constant 0 : index
    %c0_18 = arith.constant 0 : index
    %55 = vector.load %arg9[%c0_17, %c0_18] : memref<32x256xf32, #tpu.memory_space<vmem>>, vector<16x128xf32>
    tpu.vector_store %arg9[%c0_17, %c0_18], %54 {strides = array<i32>} : memref<32x256xf32, #tpu.memory_space<vmem>>, vector<16x128xf32>,
    %56 = vector.extract_strided_slice %31 {offsets = [0, 384], sizes = [16, 128], strides = [1, 1]} : vector<32x768xf32> to vector<16x128xf32>
    %57 = arith.truncf %56 : vector<16x128xf32> to vector<16x128xbf16>
    %58 = vector.extract_strided_slice %31 {offsets = [0, 512], sizes = [16, 128], strides = [1, 1]} : vector<32x768xf32> to vector<16x128xf32>
    %59 = arith.truncf %58 : vector<16x128xf32> to vector<16x128xbf16>
    %60 = vector.extract_strided_slice %31 {offsets = [0, 640], sizes = [16, 128], strides = [1, 1]} : vector<32x768xf32> to vector<16x128xf32>
    %61 = arith.truncf %60 : vector<16x128xf32> to vector<16x128xbf16>
    %cst_19 = arith.constant dense<0.000000e+00> : vector<16x16xf32>
    %62 = tpu.matmul %57, %59, %cst_19 {dimension_numbers = #tpu.dot_dimension_numbers<[1], [1], [0], [0], [0, 0, 1, 0], [], []>} : vector<16x128xbf16>, vector<16x128xbf16>, vector<16x16xf32> -> vector<16x16xf32>
    %cst_20 = arith.constant 0.0883883461 : f32
    %63 = vector.broadcast %cst_20 : f32 to vector<16x16xf32>
    %64 = arith.mulf %62, %63 : vector<16x16xf32>
    %cst_21 = arith.constant dense<0xFF800000> : vector<16xf32>
    %65 = vector.multi_reduction <maximumf>, %64, %cst_21 [1] : vector<16x16xf32> to vector<16xf32>
    %66 = vector.shape_cast %65 : vector<16xf32> to vector<16x1xf32>
    %67 = vector.broadcast %66 : vector<16x1xf32> to vector<16x16xf32>
    %68 = arith.subf %64, %67 : vector<16x16xf32>
    %69 = math.exp %68 : vector<16x16xf32>
    %cst_22 = arith.constant dense<0.000000e+00> : vector<16xf32>
    %70 = vector.multi_reduction <add>, %69, %cst_22 [1] : vector<16x16xf32> to vector<16xf32>
    %71 = vector.shape_cast %70 : vector<16xf32> to vector<16x1xf32>
    %72 = tpu.reciprocal %71 {approx = true} : vector<16x1xf32> -> vector<16x1xf32>
    %73 = vector.broadcast %72 : vector<16x1xf32> to vector<16x16xf32>
    %74 = arith.mulf %69, %73 : vector<16x16xf32>
    %75 = arith.truncf %74 : vector<16x16xf32> to vector<16x16xbf16>
    %cst_23 = arith.constant dense<0.000000e+00> : vector<16x128xf32>
    %76 = tpu.matmul %75, %61, %cst_23 {dimension_numbers = #tpu.dot_dimension_numbers<[1], [0], [0], [1], [0, 0, 1, 1], [], []>} : vector<16x16xbf16>, vector<16x128xbf16>, vector<16x128xf32> -> vector<16x128xf32>
    %77 = vector.extract_strided_slice %0 {offsets = [0, 128], sizes = [16, 128], strides = [1, 1]} : vector<32x256xf32> to vector<16x128xf32>
    %78 = arith.addf %77, %76 : vector<16x128xf32>
    %c0_24 = arith.constant 0 : index
    %c128 = arith.constant 128 : index
    %79 = vector.load %arg9[%c0_24, %c128] : memref<32x256xf32, #tpu.memory_space<vmem>>, vector<16x128xf32>
    tpu.vector_store %arg9[%c0_24, %c128], %78 {strides = array<i32>} : memref<32x256xf32, #tpu.memory_space<vmem>>, vector<16x128xf32>,
    %80 = vector.extract_strided_slice %31 {offsets = [16, 0], sizes = [16, 128], strides = [1, 1]} : vector<32x768xf32> to vector<16x128xf32>
    %81 = arith.truncf %80 : vector<16x128xf32> to vector<16x128xbf16>
    %82 = vector.extract_strided_slice %31 {offsets = [16, 128], sizes = [16, 128], strides = [1, 1]} : vector<32x768xf32> to vector<16x128xf32>
    %83 = arith.truncf %82 : vector<16x128xf32> to vector<16x128xbf16>
    %84 = vector.extract_strided_slice %31 {offsets = [16, 256], sizes = [16, 128], strides = [1, 1]} : vector<32x768xf32> to vector<16x128xf32>
    %85 = arith.truncf %84 : vector<16x128xf32> to vector<16x128xbf16>
    %cst_25 = arith.constant dense<0.000000e+00> : vector<16x16xf32>
    %86 = tpu.matmul %81, %83, %cst_25 {dimension_numbers = #tpu.dot_dimension_numbers<[1], [1], [0], [0], [0, 0, 1, 0], [], []>} : vector<16x128xbf16>, vector<16x128xbf16>, vector<16x16xf32> -> vector<16x16xf32>
    %cst_26 = arith.constant 0.0883883461 : f32
    %87 = vector.broadcast %cst_26 : f32 to vector<16x16xf32>
    %88 = arith.mulf %86, %87 : vector<16x16xf32>
    %cst_27 = arith.constant dense<0xFF800000> : vector<16xf32>
    %89 = vector.multi_reduction <maximumf>, %88, %cst_27 [1] : vector<16x16xf32> to vector<16xf32>
    %90 = vector.shape_cast %89 : vector<16xf32> to vector<16x1xf32>
    %91 = vector.broadcast %90 : vector<16x1xf32> to vector<16x16xf32>
    %92 = arith.subf %88, %91 : vector<16x16xf32>
    %93 = math.exp %92 : vector<16x16xf32>
    %cst_28 = arith.constant dense<0.000000e+00> : vector<16xf32>
    %94 = vector.multi_reduction <add>, %93, %cst_28 [1] : vector<16x16xf32> to vector<16xf32>
    %95 = vector.shape_cast %94 : vector<16xf32> to vector<16x1xf32>
    %96 = tpu.reciprocal %95 {approx = true} : vector<16x1xf32> -> vector<16x1xf32>
    %97 = vector.broadcast %96 : vector<16x1xf32> to vector<16x16xf32>
    %98 = arith.mulf %93, %97 : vector<16x16xf32>
    %99 = arith.truncf %98 : vector<16x16xf32> to vector<16x16xbf16>
    %cst_29 = arith.constant dense<0.000000e+00> : vector<16x128xf32>
    %100 = tpu.matmul %99, %85, %cst_29 {dimension_numbers = #tpu.dot_dimension_numbers<[1], [0], [0], [1], [0, 0, 1, 1], [], []>} : vector<16x16xbf16>, vector<16x128xbf16>, vector<16x128xf32> -> vector<16x128xf32>
    %101 = vector.extract_strided_slice %0 {offsets = [16, 0], sizes = [16, 128], strides = [1, 1]} : vector<32x256xf32> to vector<16x128xf32>
    %102 = arith.addf %101, %100 : vector<16x128xf32>
    %c16 = arith.constant 16 : index
    %c0_30 = arith.constant 0 : index
    %103 = vector.load %arg9[%c16, %c0_30] : memref<32x256xf32, #tpu.memory_space<vmem>>, vector<16x128xf32>
    tpu.vector_store %arg9[%c16, %c0_30], %102 {strides = array<i32>} : memref<32x256xf32, #tpu.memory_space<vmem>>, vector<16x128xf32>,
    %104 = vector.extract_strided_slice %31 {offsets = [16, 384], sizes = [16, 128], strides = [1, 1]} : vector<32x768xf32> to vector<16x128xf32>
    %105 = arith.truncf %104 : vector<16x128xf32> to vector<16x128xbf16>
    %106 = vector.extract_strided_slice %31 {offsets = [16, 512], sizes = [16, 128], strides = [1, 1]} : vector<32x768xf32> to vector<16x128xf32>
    %107 = arith.truncf %106 : vector<16x128xf32> to vector<16x128xbf16>
    %108 = vector.extract_strided_slice %31 {offsets = [16, 640], sizes = [16, 128], strides = [1, 1]} : vector<32x768xf32> to vector<16x128xf32>
    %109 = arith.truncf %108 : vector<16x128xf32> to vector<16x128xbf16>
    %cst_31 = arith.constant dense<0.000000e+00> : vector<16x16xf32>
    %110 = tpu.matmul %105, %107, %cst_31 {dimension_numbers = #tpu.dot_dimension_numbers<[1], [1], [0], [0], [0, 0, 1, 0], [], []>} : vector<16x128xbf16>, vector<16x128xbf16>, vector<16x16xf32> -> vector<16x16xf32>
    %cst_32 = arith.constant 0.0883883461 : f32
    %111 = vector.broadcast %cst_32 : f32 to vector<16x16xf32>
    %112 = arith.mulf %110, %111 : vector<16x16xf32>
    %cst_33 = arith.constant dense<0xFF800000> : vector<16xf32>
    %113 = vector.multi_reduction <maximumf>, %112, %cst_33 [1] : vector<16x16xf32> to vector<16xf32>
    %114 = vector.shape_cast %113 : vector<16xf32> to vector<16x1xf32>
    %115 = vector.broadcast %114 : vector<16x1xf32> to vector<16x16xf32>
    %116 = arith.subf %112, %115 : vector<16x16xf32>
    %117 = math.exp %116 : vector<16x16xf32>
    %cst_34 = arith.constant dense<0.000000e+00> : vector<16xf32>
    %118 = vector.multi_reduction <add>, %117, %cst_34 [1] : vector<16x16xf32> to vector<16xf32>
    %119 = vector.shape_cast %118 : vector<16xf32> to vector<16x1xf32>
    %120 = tpu.reciprocal %119 {approx = true} : vector<16x1xf32> -> vector<16x1xf32>
    %121 = vector.broadcast %120 : vector<16x1xf32> to vector<16x16xf32>
    %122 = arith.mulf %117, %121 : vector<16x16xf32>
    %123 = arith.truncf %122 : vector<16x16xf32> to vector<16x16xbf16>
    %cst_35 = arith.constant dense<0.000000e+00> : vector<16x128xf32>
    %124 = tpu.matmul %123, %109, %cst_35 {dimension_numbers = #tpu.dot_dimension_numbers<[1], [0], [0], [1], [0, 0, 1, 1], [], []>} : vector<16x16xbf16>, vector<16x128xbf16>, vector<16x128xf32> -> vector<16x128xf32>
    %125 = vector.extract_strided_slice %0 {offsets = [16, 128], sizes = [16, 128], strides = [1, 1]} : vector<32x256xf32> to vector<16x128xf32>
    %126 = arith.addf %125, %124 : vector<16x128xf32>
    %c16_36 = arith.constant 16 : index
    %c128_37 = arith.constant 128 : index
    %127 = vector.load %arg9[%c16_36, %c128_37] : memref<32x256xf32, #tpu.memory_space<vmem>>, vector<16x128xf32>
    tpu.vector_store %arg9[%c16_36, %c128_37], %126 {strides = array<i32>} : memref<32x256xf32, #tpu.memory_space<vmem>>, vector<16x128xf32>,
    %c0_38 = arith.constant 0 : index
    %c0_39 = arith.constant 0 : index
    %128 = vector.load %arg9[%c0_38, %c0_39] : memref<32x256xf32, #tpu.memory_space<vmem>>, vector<32x256xf32>
    %129 = vector.extract_strided_slice %1 {offsets = [2, 0], sizes = [1, 256], strides = [1, 1]} : vector<4x256xf32> to vector<1x256xf32>
    %130 = vector.extract_strided_slice %1 {offsets = [3, 0], sizes = [1, 256], strides = [1, 1]} : vector<4x256xf32> to vector<1x256xf32>
    %cst_40 = arith.constant dense<0.000000e+00> : vector<32xf32>
    %131 = vector.multi_reduction <add>, %128, %cst_40 [1] : vector<32x256xf32> to vector<32xf32>
    %132 = vector.shape_cast %131 : vector<32xf32> to vector<32x1xf32>
    %cst_41 = arith.constant 2.560000e+02 : f32
    %133 = vector.broadcast %cst_41 : f32 to vector<32x1xf32>
    %134 = arith.divf %132, %133 : vector<32x1xf32>
    %135 = vector.broadcast %134 : vector<32x1xf32> to vector<32x256xf32>
    %136 = arith.subf %128, %135 : vector<32x256xf32>
    %137 = arith.mulf %136, %136 : vector<32x256xf32>
    %cst_42 = arith.constant dense<0.000000e+00> : vector<32xf32>
    %138 = vector.multi_reduction <add>, %137, %cst_42 [1] : vector<32x256xf32> to vector<32xf32>
    %139 = vector.shape_cast %138 : vector<32xf32> to vector<32x1xf32>
    %cst_43 = arith.constant 2.560000e+02 : f32
    %140 = vector.broadcast %cst_43 : f32 to vector<32x1xf32>
    %141 = arith.divf %139, %140 : vector<32x1xf32>
    %142 = vector.broadcast %134 : vector<32x1xf32> to vector<32x256xf32>
    %143 = arith.subf %128, %142 : vector<32x256xf32>
    %cst_44 = arith.constant 9.99999974E-6 : f32
    %144 = vector.broadcast %cst_44 : f32 to vector<32x1xf32>
    %145 = arith.addf %141, %144 : vector<32x1xf32>
    %146 = math.rsqrt %145 : vector<32x1xf32>
    %147 = vector.broadcast %146 : vector<32x1xf32> to vector<32x256xf32>
    %148 = arith.mulf %143, %147 : vector<32x256xf32>
    %149 = vector.broadcast %129 : vector<1x256xf32> to vector<32x256xf32>
    %150 = arith.mulf %148, %149 : vector<32x256xf32>
    %151 = vector.broadcast %130 : vector<1x256xf32> to vector<32x256xf32>
    %152 = arith.addf %150, %151 : vector<32x256xf32>
    %153 = arith.truncf %152 : vector<32x256xf32> to vector<32x256xbf16>
    %c0_45 = arith.constant 0 : index
    %c0_46 = arith.constant 0 : index
    %154 = vector.load %arg5[%c0_45, %c0_46] : memref<256x1024xbf16, #tpu.memory_space<vmem>>, vector<256x1024xbf16>
    %cst_47 = arith.constant dense<0.000000e+00> : vector<32x1024xf32>
    %155 = tpu.matmul %153, %154, %cst_47 {dimension_numbers = #tpu.dot_dimension_numbers<[1], [0], [0], [1], [0, 0, 1, 1], [], []>} : vector<32x256xbf16>, vector<256x1024xbf16>, vector<32x1024xf32> -> vector<32x1024xf32>
    %c0_48 = arith.constant 0 : index
    %c0_49 = arith.constant 0 : index
    %156 = vector.load %arg6[%c0_48, %c0_49] : memref<1x1024xf32, #tpu.memory_space<vmem>>, vector<1x1024xf32>
    %157 = vector.broadcast %156 : vector<1x1024xf32> to vector<32x1024xf32>
    %158 = arith.addf %155, %157 : vector<32x1024xf32>
    %cst_50 = arith.constant 5.000000e-01 : f32
    %159 = vector.broadcast %cst_50 : f32 to vector<32x1024xf32>
    %160 = arith.mulf %159, %158 : vector<32x1024xf32>
    %cst_51 = arith.constant 0.707106769 : f32
    %161 = vector.broadcast %cst_51 : f32 to vector<32x1024xf32>
    %162 = arith.mulf %158, %161 : vector<32x1024xf32>
    %cst_52 = arith.constant 0.000000e+00 : f32
    %163 = vector.broadcast %cst_52 : f32 to vector<32x1024xf32>
    %164 = arith.cmpf oge, %162, %163 : vector<32x1024xf32>
    %cst_53 = arith.constant 1.000000e+00 : f32
    %cst_54 = arith.constant -1.000000e+00 : f32
    %165 = vector.broadcast %cst_53 : f32 to vector<32x1024xf32>
    %166 = vector.broadcast %cst_54 : f32 to vector<32x1024xf32>
    %167 = arith.select %164, %165, %166 : vector<32x1024xi1>, vector<32x1024xf32>
    %168 = math.absf %162 : vector<32x1024xf32>
    %cst_55 = arith.constant 0.327591091 : f32
    %169 = vector.broadcast %cst_55 : f32 to vector<32x1024xf32>
    %170 = arith.mulf %169, %168 : vector<32x1024xf32>
    %cst_56 = arith.constant 1.000000e+00 : f32
    %171 = vector.broadcast %cst_56 : f32 to vector<32x1024xf32>
    %172 = arith.addf %171, %170 : vector<32x1024xf32>
    %173 = tpu.reciprocal %172 {approx = true} : vector<32x1024xf32> -> vector<32x1024xf32>
    %cst_57 = arith.constant 1.06140542 : f32
    %174 = vector.broadcast %cst_57 : f32 to vector<32x1024xf32>
    %175 = arith.mulf %174, %173 : vector<32x1024xf32>
    %cst_58 = arith.constant -1.45315206 : f32
    %176 = vector.broadcast %cst_58 : f32 to vector<32x1024xf32>
    %177 = arith.addf %175, %176 : vector<32x1024xf32>
    %178 = arith.mulf %177, %173 : vector<32x1024xf32>
    %cst_59 = arith.constant 1.42141378 : f32
    %179 = vector.broadcast %cst_59 : f32 to vector<32x1024xf32>
    %180 = arith.addf %178, %179 : vector<32x1024xf32>
    %181 = arith.mulf %180, %173 : vector<32x1024xf32>
    %cst_60 = arith.constant -0.284496725 : f32
    %182 = vector.broadcast %cst_60 : f32 to vector<32x1024xf32>
    %183 = arith.addf %181, %182 : vector<32x1024xf32>
    %184 = arith.mulf %183, %173 : vector<32x1024xf32>
    %cst_61 = arith.constant 0.254829586 : f32
    %185 = vector.broadcast %cst_61 : f32 to vector<32x1024xf32>
    %186 = arith.addf %184, %185 : vector<32x1024xf32>
    %187 = arith.mulf %186, %173 : vector<32x1024xf32>
    %cst_62 = arith.constant 0.000000e+00 : f32
    %188 = vector.broadcast %cst_62 : f32 to vector<32x1024xf32>
    %189 = arith.subf %188, %168 : vector<32x1024xf32>
    %190 = arith.mulf %189, %168 : vector<32x1024xf32>
    %191 = math.exp %190 : vector<32x1024xf32>
    %192 = arith.mulf %187, %191 : vector<32x1024xf32>
    %cst_63 = arith.constant 1.000000e+00 : f32
    %193 = vector.broadcast %cst_63 : f32 to vector<32x1024xf32>
    %194 = arith.subf %193, %192 : vector<32x1024xf32>
    %195 = arith.mulf %167, %194 : vector<32x1024xf32>
    %cst_64 = arith.constant 1.000000e+00 : f32
    %196 = vector.broadcast %cst_64 : f32 to vector<32x1024xf32>
    %197 = arith.addf %196, %195 : vector<32x1024xf32>
    %198 = arith.mulf %160, %197 : vector<32x1024xf32>
    %199 = arith.truncf %198 : vector<32x1024xf32> to vector<32x1024xbf16>
    %c0_65 = arith.constant 0 : index
    %c0_66 = arith.constant 0 : index
    %200 = vector.load %arg7[%c0_65, %c0_66] : memref<1024x256xbf16, #tpu.memory_space<vmem>>, vector<1024x256xbf16>
    %cst_67 = arith.constant dense<0.000000e+00> : vector<32x256xf32>
    %201 = tpu.matmul %199, %200, %cst_67 {dimension_numbers = #tpu.dot_dimension_numbers<[1], [0], [0], [1], [0, 0, 1, 1], [], []>} : vector<32x1024xbf16>, vector<1024x256xbf16>, vector<32x256xf32> -> vector<32x256xf32>
    %c0_68 = arith.constant 0 : index
    %c0_69 = arith.constant 0 : index
    %202 = vector.load %arg8[%c0_68, %c0_69] : memref<1x256xf32, #tpu.memory_space<vmem>>, vector<1x256xf32>
    %203 = vector.broadcast %202 : vector<1x256xf32> to vector<32x256xf32>
    %204 = arith.addf %201, %203 : vector<32x256xf32>
    %205 = arith.addf %128, %204 : vector<32x256xf32>
    %c0_70 = arith.constant 0 : index
    %c0_71 = arith.constant 0 : index
    %206 = vector.load %arg9[%c0_70, %c0_71] : memref<32x256xf32, #tpu.memory_space<vmem>>, vector<32x256xf32>
    tpu.vector_store %arg9[%c0_70, %c0_71], %205 {strides = array<i32>} : memref<32x256xf32, #tpu.memory_space<vmem>>, vector<32x256xf32>,
    return
  }
  func.func @transform_0(%arg0: i32) -> (i32, i32) {
    %c0_i32 = arith.constant 0 : i32
    %c0_i32_0 = arith.constant 0 : i32
    %c0_i32_1 = arith.constant 0 : i32
    return %c0_i32, %c0_i32_0 : i32, i32
  }
  func.func @transform_1(%arg0: i32) -> (i32, i32) {
    %c0_i32 = arith.constant 0 : i32
    %c0_i32_0 = arith.constant 0 : i32
    %c0_i32_1 = arith.constant 0 : i32
    return %c0_i32, %c0_i32_0 : i32, i32
  }
  func.func @transform_2(%arg0: i32) -> (i32, i32) {
    %c0_i32 = arith.constant 0 : i32
    %c0_i32_0 = arith.constant 0 : i32
    %c0_i32_1 = arith.constant 0 : i32
    return %c0_i32, %c0_i32_0 : i32, i32
  }
  func.func @transform_3(%arg0: i32) -> (i32, i32) {
    %c0_i32 = arith.constant 0 : i32
    %c0_i32_0 = arith.constant 0 : i32
    %c0_i32_1 = arith.constant 0 : i32
    return %c0_i32, %c0_i32_0 : i32, i32
  }
  func.func @transform_4(%arg0: i32) -> (i32, i32) {
    %c0_i32 = arith.constant 0 : i32
    %c0_i32_0 = arith.constant 0 : i32
    %c0_i32_1 = arith.constant 0 : i32
    return %c0_i32, %c0_i32_0 : i32, i32
  }
  func.func @transform_5(%arg0: i32) -> (i32, i32) {
    %c0_i32 = arith.constant 0 : i32
    %c0_i32_0 = arith.constant 0 : i32
    %c0_i32_1 = arith.constant 0 : i32
    return %c0_i32, %c0_i32_0 : i32, i32
  }
  func.func @transform_6(%arg0: i32) -> (i32, i32) {
    %c0_i32 = arith.constant 0 : i32
    %c0_i32_0 = arith.constant 0 : i32
    %c0_i32_1 = arith.constant 0 : i32
    return %c0_i32, %c0_i32_0 : i32, i32
  }
  func.func @transform_7(%arg0: i32) -> (i32, i32) {
    %c0_i32 = arith.constant 0 : i32
    %c0_i32_0 = arith.constant 0 : i32
    %c0_i32_1 = arith.constant 0 : i32
    return %c0_i32, %c0_i32_0 : i32, i32
  }
  func.func @transform_8(%arg0: i32) -> (i32, i32) {
    %c0_i32 = arith.constant 0 : i32
    %c0_i32_0 = arith.constant 0 : i32
    %c0_i32_1 = arith.constant 0 : i32
    return %c0_i32, %c0_i32_0 : i32, i32
  }
}

</mosaic_0001>

<llo_original>
// kernel: tpu_custom_call.1
$region0: #{tpu_custom_call.1}
  #allocation0 [shape = 'u32[]', space=smem, size = 0x4, offset = 0x4, fixed_abs, tag = 'smem constant byte address 0x4 - core index']
  #allocation1 [shape = 'u32[144,128]{1,0:T(1,128)}', space=vmem, size = 0x12000, scoped, tag = 'internal scratch']
  %s0 = inlined_call_operand.hbm [shape: f32[32,256], index: 0, kind: input, shape index: {}]
  %s1 = inlined_call_operand.hbm [shape: f32[4,256], index: 1, kind: input, shape index: {}]
  %s2 = inlined_call_operand.hbm [shape: bf16[256,768], index: 2, kind: input, shape index: {}]
  %s3 = inlined_call_operand.hbm [shape: f32[1,768], index: 3, kind: input, shape index: {}]
  %s4 = inlined_call_operand.hbm [shape: bf16[256,1024], index: 4, kind: input, shape index: {}]
  %s5 = inlined_call_operand.vmem [shape: f32[1,1024], index: 5, kind: input, shape index: {}]
  %s6 = inlined_call_operand.hbm [shape: bf16[1024,256], index: 6, kind: input, shape index: {}]
  %s7 = inlined_call_operand.vmem [shape: f32[1,256], index: 7, kind: input, shape index: {}]
  %s8 = inlined_call_operand.hbm [shape: f32[32,256], index: 8, kind: output, shape index: {}]
  %s9 = sld [smem:[#allocation0]]
  $region66: #{tpu_custom_call.1} parent=0
    _
  %s11 = ssub.s32 1, %s9
  %s12 = scalar_select 0, %s11, %s9
  $region1: #{tpu_custom_call.1} parent=0
    #allocation2 [shape = 'u8[32768]{0}', space=vmem, size = 0x8000, scoped, tag = 'input window, operand 0, single buffered']
    #allocation3 [shape = 's32[1]{0}', space=sflag, size = 0x4, scoped, tag = 'scoped memory for tpu_custom_call.1']
    #allocation4 [shape = 's32[1]{0}', space=sflag, size = 0x4, scoped, tag = 'scoped memory for tpu_custom_call.1']
    #allocation5 [shape = 'u8[4096]{0}', space=vmem, size = 0x1000, scoped, tag = 'input window, operand 1, single buffered']
    #allocation6 [shape = 's32[1]{0}', space=sflag, size = 0x4, scoped, tag = 'scoped memory for tpu_custom_call.1']
    #allocation7 [shape = 'u8[393216]{0}', space=vmem, size = 0x60000, scoped, tag = 'input window, operand 2, single buffered']
    #allocation8 [shape = 'u8[3072]{0}', space=vmem, size = 0xc00, scoped, tag = 'input window, operand 3, single buffered']
    #allocation9 [shape = 's32[1]{0}', space=sflag, size = 0x4, scoped, tag = 'scoped memory for tpu_custom_call.1']
    #allocation10 [shape = 'u8[524288]{0}', space=vmem, size = 0x80000, scoped, tag = 'input window, operand 4, single buffered']
    #allocation11 [shape = 'u8[524288]{0}', space=vmem, size = 0x80000, scoped, tag = 'input window, operand 6, single buffered']
    #allocation12 [shape = 's32[1]{0}', space=sflag, size = 0x4, scoped, tag = 'scoped memory for tpu_custom_call.1']
    #allocation13 [shape = 'u8[32768]{0}', space=vmem, size = 0x8000, scoped, tag = 'output window, operand 0, single buffered']
    %13 = vsyncpa [#allocation3], 0
    %14 = vsyncpa [#allocation6], 0
    %15 = vsyncpa [#allocation9], 0
    %16 = vsyncpa [#allocation12], 0
    %17 = vsyncpa [#allocation4], 0
    // Predicated region
    $region2: #{tpu_custom_call.1} parent=1 // pred_check
      _
    $region3: #{tpu_custom_call.1} parent=1 // pred_check_branch
      %19 = sbr.rel (0) target = $region5
    $region4: #{tpu_custom_call.1} parent=1 // pred_region
      %s21 = ssub.s32 1024, 1024
      %22 = vsyncadd [#allocation3], %s21
      %s23 = sshll.u32 [#allocation2], 4
      %s24 = int_to_ptr.vmem [resolvable:$true] %s23
      %29 = dma.hbm_to_vmem [thread:$0]  %s0, 1024, %s24, [#allocation3], 256, 256, 16
    $region5: #{tpu_custom_call.1} parent=1 // pred_fallthru
      _
    // Predicated region
    $region6: #{tpu_custom_call.1} parent=1 // pred_check
      _
    $region7: #{tpu_custom_call.1} parent=1 // pred_check_branch
      %31 = sbr.rel (0) target = $region9
    $region8: #{tpu_custom_call.1} parent=1 // pred_region
      %s33 = ssub.s32 128, 128
      %34 = vsyncadd [#allocation6], %s33
      %s36 = sshll.u32 [#allocation5], 4
      %s37 = int_to_ptr.vmem [resolvable:$true] %s36
      %39 = dma.hbm_to_vmem [thread:$0]  %s1, 128, %s37, [#allocation6]
    $region9: #{tpu_custom_call.1} parent=1 // pred_fallthru
      _
    // Predicated region
    $region10: #{tpu_custom_call.1} parent=1 // pred_check
      _
    $region11: #{tpu_custom_call.1} parent=1 // pred_check_branch
      %41 = sbr.rel (0) target = $region13
    $region12: #{tpu_custom_call.1} parent=1 // pred_region
      %s43 = ssub.s32 12288, 12288
      %44 = vsyncadd [#allocation6], %s43
      %s45 = sshll.u32 [#allocation7], 4
      %s46 = int_to_ptr.vmem [resolvable:$true] %s45
      %51 = dma.hbm_to_vmem [thread:$0]  %s2, 12288, %s46, [#allocation6], 384, 384, 24
    $region13: #{tpu_custom_call.1} parent=1 // pred_fallthru
      _
    // Predicated region
    $region14: #{tpu_custom_call.1} parent=1 // pred_check
      _
    $region15: #{tpu_custom_call.1} parent=1 // pred_check_branch
      %53 = sbr.rel (0) target = $region17
    $region16: #{tpu_custom_call.1} parent=1 // pred_region
      %s55 = ssub.s32 96, 96
      %56 = vsyncadd [#allocation9], %s55
      %s58 = sshll.u32 [#allocation8], 4
      %s59 = int_to_ptr.vmem [resolvable:$true] %s58
      %61 = dma.hbm_to_vmem [thread:$0]  %s3, 96, %s59, [#allocation9]
    $region17: #{tpu_custom_call.1} parent=1 // pred_fallthru
      _
    // Predicated region
    $region18: #{tpu_custom_call.1} parent=1 // pred_check
      _
    $region19: #{tpu_custom_call.1} parent=1 // pred_check_branch
      %63 = sbr.rel (0) target = $region21
    $region20: #{tpu_custom_call.1} parent=1 // pred_region
      %s65 = ssub.s32 16384, 16384
      %66 = vsyncadd [#allocation9], %s65
      %s67 = sshll.u32 [#allocation10], 4
      %s68 = int_to_ptr.vmem [resolvable:$true] %s67
      %73 = dma.hbm_to_vmem [thread:$0]  %s4, 16384, %s68, [#allocation9], 512, 512, 32
    $region21: #{tpu_custom_call.1} parent=1 // pred_fallthru
      _
    // Predicated region
    $region22: #{tpu_custom_call.1} parent=1 // pred_check
      _
    $region23: #{tpu_custom_call.1} parent=1 // pred_check_branch
      %75 = sbr.rel (0) target = $region25
    $region24: #{tpu_custom_call.1} parent=1 // pred_region
      _
    $region25: #{tpu_custom_call.1} parent=1 // pred_fallthru
      _
    // Predicated region
    $region26: #{tpu_custom_call.1} parent=1 // pred_check
      _
    $region27: #{tpu_custom_call.1} parent=1 // pred_check_branch
      %77 = sbr.rel (0) target = $region29
    $region28: #{tpu_custom_call.1} parent=1 // pred_region
      %s79 = ssub.s32 16384, 16384
      %80 = vsyncadd [#allocation12], %s79
      %s81 = sshll.u32 [#allocation11], 4
      %s82 = int_to_ptr.vmem [resolvable:$true] %s81
      %87 = dma.hbm_to_vmem [thread:$0]  %s6, 16384, %s82, [#allocation12], 128, 128, 8
    $region29: #{tpu_custom_call.1} parent=1 // pred_fallthru
      _
    // Predicated region
    $region30: #{tpu_custom_call.1} parent=1 // pred_check
      _
    $region31: #{tpu_custom_call.1} parent=1 // pred_check_branch
      %89 = sbr.rel (0) target = $region33
    $region32: #{tpu_custom_call.1} parent=1 // pred_region
      _
    $region33: #{tpu_custom_call.1} parent=1 // pred_fallthru
      _
    // Predicated region
    $region34: #{tpu_custom_call.1} parent=1 // pred_check
      _
    $region35: #{tpu_custom_call.1} parent=1 // pred_check_branch
      %91 = sbr.rel (0) target = $region37
    $region36: #{tpu_custom_call.1} parent=1 // pred_region
      %92 = dma.done [#allocation3], 1024
    $region37: #{tpu_custom_call.1} parent=1 // pred_fallthru
      _
    // Predicated region
    $region38: #{tpu_custom_call.1} parent=1 // pred_check
      _
    $region39: #{tpu_custom_call.1} parent=1 // pred_check_branch
      %94 = sbr.rel (0) target = $region41
    $region40: #{tpu_custom_call.1} parent=1 // pred_region
      %95 = dma.done [#allocation6], 128
    $region41: #{tpu_custom_call.1} parent=1 // pred_fallthru
      _
    // Predicated region
    $region42: #{tpu_custom_call.1} parent=1 // pred_check
      _
    $region43: #{tpu_custom_call.1} parent=1 // pred_check_branch
      %97 = sbr.rel (0) target = $region45
    $region44: #{tpu_custom_call.1} parent=1 // pred_region
      %98 = dma.done [#allocation6], 12288
    $region45: #{tpu_custom_call.1} parent=1 // pred_fallthru
      _
    // Predicated region
    $region46: #{tpu_custom_call.1} parent=1 // pred_check
      _
    $region47: #{tpu_custom_call.1} parent=1 // pred_check_branch
      %100 = sbr.rel (0) target = $region49
    $region48: #{tpu_custom_call.1} parent=1 // pred_region
      %101 = dma.done [#allocation9], 96
    $region49: #{tpu_custom_call.1} parent=1 // pred_fallthru
      _
    // Predicated region
    $region50: #{tpu_custom_call.1} parent=1 // pred_check
      _
    $region51: #{tpu_custom_call.1} parent=1 // pred_check_branch
      %103 = sbr.rel (0) target = $region53
    $region52: #{tpu_custom_call.1} parent=1 // pred_region
      %104 = dma.done [#allocation9], 16384
    $region53: #{tpu_custom_call.1} parent=1 // pred_fallthru
      _
    // Predicated region
    $region54: #{tpu_custom_call.1} parent=1 // pred_check
      _
    $region55: #{tpu_custom_call.1} parent=1 // pred_check_branch
      %106 = sbr.rel (0) target = $region57
    $region56: #{tpu_custom_call.1} parent=1 // pred_region
      %107 = dma.done [#allocation12], 16384
    $region57: #{tpu_custom_call.1} parent=1 // pred_fallthru
      _
    %v109 = vld [vmem:[#allocation2] sm:$0xff]
    %v110 = vld [vmem:[#allocation2 + $0x8] sm:$0xff]
    %v111 = vld [vmem:[#allocation2 + $0x10] sm:$0xff]
    %v112 = vld [vmem:[#allocation2 + $0x18] sm:$0xff]
    %v113 = vld [vmem:[#allocation2 + $0x20] sm:$0xff]
    %v114 = vld [vmem:[#allocation2 + $0x28] sm:$0xff]
    %v115 = vld [vmem:[#allocation2 + $0x30] sm:$0xff]
    %v116 = vld [vmem:[#allocation2 + $0x38] sm:$0xff]
    %v117 = vld [vmem:[#allocation5] sm:$0xff]
    %v118 = vadd.f32 %v109, %v110
    %119 = vadd.xlane.f32.xlu0 %v118
    %v120 = vpop.xlane.xlu0 %119
    %v121 = vadd.f32 %v111, %v112
    %122 = vadd.xlane.f32.xlu0 %v121
    %v123 = vpop.xlane.xlu0 %122
    %v124 = vadd.f32 %v113, %v114
    %125 = vadd.xlane.f32.xlu0 %v124
    %v126 = vpop.xlane.xlu0 %125
    %v127 = vadd.f32 %v115, %v116
    %128 = vadd.xlane.f32.xlu0 %v127
    %v129 = vpop.xlane.xlu0 %128
    %v130 = vrcp.pop 256.0
    %v131 = vmul.f32 %v120, %v130
    %v132 = vmul.f32 %v123, %v130
    %v133 = vmul.f32 %v126, %v130
    %v134 = vmul.f32 %v129, %v130
    %v135 = vsub.f32 %v109, %v131
    %v136 = vsub.f32 %v110, %v131
    %v137 = vsub.f32 %v111, %v132
    %v138 = vsub.f32 %v112, %v132
    %v139 = vsub.f32 %v113, %v133
    %v140 = vsub.f32 %v114, %v133
    %v141 = vsub.f32 %v115, %v134
    %v142 = vsub.f32 %v116, %v134
    %v143 = vmul.f32 %v135, %v135
    %v144 = vmul.f32 %v136, %v136
    %v145 = vmul.f32 %v137, %v137
    %v146 = vmul.f32 %v138, %v138
    %v147 = vmul.f32 %v139, %v139
    %v148 = vmul.f32 %v140, %v140
    %v149 = vmul.f32 %v141, %v141
    %v150 = vmul.f32 %v142, %v142
    %v151 = vadd.f32 %v143, %v144
    %152 = vadd.xlane.f32.xlu0 %v151
    %v153 = vpop.xlane.xlu0 %152
    %v154 = vadd.f32 %v145, %v146
    %155 = vadd.xlane.f32.xlu0 %v154
    %v156 = vpop.xlane.xlu0 %155
    %v157 = vadd.f32 %v147, %v148
    %158 = vadd.xlane.f32.xlu0 %v157
    %v159 = vpop.xlane.xlu0 %158
    %v160 = vadd.f32 %v149, %v150
    %161 = vadd.xlane.f32.xlu0 %v160
    %v162 = vpop.xlane.xlu0 %161
    %v163 = vmul.f32 %v153, %v130
    %v164 = vmul.f32 %v156, %v130
    %v165 = vmul.f32 %v159, %v130
    %v166 = vmul.f32 %v162, %v130
    %v167 = vadd.f32 %v163, 1e-05
    %v168 = vadd.f32 %v164, 1e-05
    %v169 = vadd.f32 %v165, 1e-05
    %v170 = vadd.f32 %v166, 1e-05
    %v171 = vrsqrt.pop %v167
    %v172 = vrsqrt.pop %v168
    %v173 = vrsqrt.pop %v169
    %v174 = vrsqrt.pop %v170
    %v175 = vmul.f32 %v135, %v171
    %v176 = vmul.f32 %v136, %v171
    %v177 = vmul.f32 %v137, %v172
    %v178 = vmul.f32 %v138, %v172
    %v179 = vmul.f32 %v139, %v173
    %v180 = vmul.f32 %v140, %v173
    %v181 = vmul.f32 %v141, %v174
    %v182 = vmul.f32 %v142, %v174
    %v184 = vlaneseq
    %v185 = vshrl.u32 %v184, 7
    %v186 = vsub.s32 0, %v185
    %v187 = vrot.slane %v117, %v186
    %v188 = vlaneseq
    %v189 = vshrl.u32 %v188, 7
    %v190 = vsub.s32 4, %v189
    %v191 = vrot.slane %v117, %v190
    %v194 = vlaneseq
    %v195 = vshrl.u32 %v194, 7
    %v196 = vsub.s32 0, %v195
    %v197 = vrot.slane %v187, %v196
    %v198 = vlaneseq
    %v199 = vshrl.u32 %v198, 7
    %v200 = vsub.s32 0, %v199
    %v201 = vrot.slane %v191, %v200
    %v202 = vmul.f32 %v175, %v197
    %v203 = vmul.f32 %v176, %v201
    %v204 = vmul.f32 %v177, %v197
    %v205 = vmul.f32 %v178, %v201
    %v206 = vmul.f32 %v179, %v197
    %v207 = vmul.f32 %v180, %v201
    %v208 = vmul.f32 %v181, %v197
    %v209 = vmul.f32 %v182, %v201
    %v210 = vlaneseq
    %v211 = vshrl.u32 %v210, 7
    %v212 = vsub.s32 1, %v211
    %v213 = vrot.slane %v117, %v212
    %v214 = vlaneseq
    %v215 = vshrl.u32 %v214, 7
    %v216 = vsub.s32 5, %v215
    %v217 = vrot.slane %v117, %v216
    %v220 = vlaneseq
    %v221 = vshrl.u32 %v220, 7
    %v222 = vsub.s32 1, %v221
    %v223 = vrot.slane %v213, %v222
    %v224 = vlaneseq
    %v225 = vshrl.u32 %v224, 7
    %v226 = vsub.s32 1, %v225
    %v227 = vrot.slane %v217, %v226
    %v228 = vadd.f32 %v202, %v223
    %v229 = vadd.f32 %v203, %v227
    %v230 = vadd.f32 %v204, %v223
    %v231 = vadd.f32 %v205, %v227
    %v232 = vadd.f32 %v206, %v223
    %v233 = vadd.f32 %v207, %v227
    %v234 = vadd.f32 %v208, %v223
    %v235 = vadd.f32 %v209, %v227
    %v236 = vpack.c.bf16 %v230, %v228
    %v237 = vpack.c.bf16 %v231, %v229
    %v238 = vpack.c.bf16 %v234, %v232
    %v239 = vpack.c.bf16 %v235, %v233
    %v240 = vld [vmem:[#allocation7] sm:$0xff]
    %v241 = vld [vmem:[#allocation7 + $0x8] sm:$0xff]
    %v242 = vld [vmem:[#allocation7 + $0x10] sm:$0xff]
    %v243 = vld [vmem:[#allocation7 + $0x18] sm:$0xff]
    %v244 = vld [vmem:[#allocation7 + $0x20] sm:$0xff]
    %v245 = vld [vmem:[#allocation7 + $0x28] sm:$0xff]
    %v246 = vld [vmem:[#allocation7 + $0x30] sm:$0xff]
    %v247 = vld [vmem:[#allocation7 + $0x38] sm:$0xff]
    %v248 = vld [vmem:[#allocation7 + $0x40] sm:$0xff]
    %v249 = vld [vmem:[#allocation7 + $0x48] sm:$0xff]
    %v250 = vld [vmem:[#allocation7 + $0x50] sm:$0xff]
    %v251 = vld [vmem:[#allocation7 + $0x58] sm:$0xff]
    %v252 = vld [vmem:[#allocation7 + $0x60] sm:$0xff]
    %v253 = vld [vmem:[#allocation7 + $0x68] sm:$0xff]
    %v254 = vld [vmem:[#allocation7 + $0x70] sm:$0xff]
    %v255 = vld [vmem:[#allocation7 + $0x78] sm:$0xff]
    %v256 = vld [vmem:[#allocation7 + $0x80] sm:$0xff]
    %v257 = vld [vmem:[#allocation7 + $0x88] sm:$0xff]
    %v258 = vld [vmem:[#allocation7 + $0x90] sm:$0xff]
    %v259 = vld [vmem:[#allocation7 + $0x98] sm:$0xff]
    %v260 = vld [vmem:[#allocation7 + $0xa0] sm:$0xff]
    %v261 = vld [vmem:[#allocation7 + $0xa8] sm:$0xff]
    %v262 = vld [vmem:[#allocation7 + $0xb0] sm:$0xff]
    %v263 = vld [vmem:[#allocation7 + $0xb8] sm:$0xff]
    %v264 = vld [vmem:[#allocation7 + $0xc0] sm:$0xff]
    %v265 = vld [vmem:[#allocation7 + $0xc8] sm:$0xff]
    %v266 = vld [vmem:[#allocation7 + $0xd0] sm:$0xff]
    %v267 = vld [vmem:[#allocation7 + $0xd8] sm:$0xff]
    %v268 = vld [vmem:[#allocation7 + $0xe0] sm:$0xff]
    %v269 = vld [vmem:[#allocation7 + $0xe8] sm:$0xff]
    %v270 = vld [vmem:[#allocation7 + $0xf0] sm:$0xff]
    %v271 = vld [vmem:[#allocation7 + $0xf8] sm:$0xff]
    %v272 = vld [vmem:[#allocation7 + $0x100] sm:$0xff]
    %v273 = vld [vmem:[#allocation7 + $0x108] sm:$0xff]
    %v274 = vld [vmem:[#allocation7 + $0x110] sm:$0xff]
    %v275 = vld [vmem:[#allocation7 + $0x118] sm:$0xff]
    %v276 = vld [vmem:[#allocation7 + $0x120] sm:$0xff]
    %v277 = vld [vmem:[#allocation7 + $0x128] sm:$0xff]
    %v278 = vld [vmem:[#allocation7 + $0x130] sm:$0xff]
    %v279 = vld [vmem:[#allocation7 + $0x138] sm:$0xff]
    %v280 = vld [vmem:[#allocation7 + $0x140] sm:$0xff]
    %v281 = vld [vmem:[#allocation7 + $0x148] sm:$0xff]
    %v282 = vld [vmem:[#allocation7 + $0x150] sm:$0xff]
    %v283 = vld [vmem:[#allocation7 + $0x158] sm:$0xff]
    %v284 = vld [vmem:[#allocation7 + $0x160] sm:$0xff]
    %v285 = vld [vmem:[#allocation7 + $0x168] sm:$0xff]
    %v286 = vld [vmem:[#allocation7 + $0x170] sm:$0xff]
    %v287 = vld [vmem:[#allocation7 + $0x178] sm:$0xff]
    %v288 = vld [vmem:[#allocation7 + $0x180] sm:$0xff]
    %v289 = vld [vmem:[#allocation7 + $0x188] sm:$0xff]
    %v290 = vld [vmem:[#allocation7 + $0x190] sm:$0xff]
    %v291 = vld [vmem:[#allocation7 + $0x198] sm:$0xff]
    %v292 = vld [vmem:[#allocation7 + $0x1a0] sm:$0xff]
    %v293 = vld [vmem:[#allocation7 + $0x1a8] sm:$0xff]
    %v294 = vld [vmem:[#allocation7 + $0x1b0] sm:$0xff]
    %v295 = vld [vmem:[#allocation7 + $0x1b8] sm:$0xff]
    %v296 = vld [vmem:[#allocation7 + $0x1c0] sm:$0xff]
    %v297 = vld [vmem:[#allocation7 + $0x1c8] sm:$0xff]
    %v298 = vld [vmem:[#allocation7 + $0x1d0] sm:$0xff]
    %v299 = vld [vmem:[#allocation7 + $0x1d8] sm:$0xff]
    %v300 = vld [vmem:[#allocation7 + $0x1e0] sm:$0xff]
    %v301 = vld [vmem:[#allocation7 + $0x1e8] sm:$0xff]
    %v302 = vld [vmem:[#allocation7 + $0x1f0] sm:$0xff]
    %v303 = vld [vmem:[#allocation7 + $0x1f8] sm:$0xff]
    %v304 = vld [vmem:[#allocation7 + $0x200] sm:$0xff]
    %v305 = vld [vmem:[#allocation7 + $0x208] sm:$0xff]
    %v306 = vld [vmem:[#allocation7 + $0x210] sm:$0xff]
    %v307 = vld [vmem:[#allocation7 + $0x218] sm:$0xff]
    %v308 = vld [vmem:[#allocation7 + $0x220] sm:$0xff]
    %v309 = vld [vmem:[#allocation7 + $0x228] sm:$0xff]
    %v310 = vld [vmem:[#allocation7 + $0x230] sm:$0xff]
    %v311 = vld [vmem:[#allocation7 + $0x238] sm:$0xff]
    %v312 = vld [vmem:[#allocation7 + $0x240] sm:$0xff]
    %v313 = vld [vmem:[#allocation7 + $0x248] sm:$0xff]
    %v314 = vld [vmem:[#allocation7 + $0x250] sm:$0xff]
    %v315 = vld [vmem:[#allocation7 + $0x258] sm:$0xff]
    %v316 = vld [vmem:[#allocation7 + $0x260] sm:$0xff]
    %v317 = vld [vmem:[#allocation7 + $0x268] sm:$0xff]
    %v318 = vld [vmem:[#allocation7 + $0x270] sm:$0xff]
    %v319 = vld [vmem:[#allocation7 + $0x278] sm:$0xff]
    %v320 = vld [vmem:[#allocation7 + $0x280] sm:$0xff]
    %v321 = vld [vmem:[#allocation7 + $0x288] sm:$0xff]
    %v322 = vld [vmem:[#allocation7 + $0x290] sm:$0xff]
    %v323 = vld [vmem:[#allocation7 + $0x298] sm:$0xff]
    %v324 = vld [vmem:[#allocation7 + $0x2a0] sm:$0xff]
    %v325 = vld [vmem:[#allocation7 + $0x2a8] sm:$0xff]
    %v326 = vld [vmem:[#allocation7 + $0x2b0] sm:$0xff]
    %v327 = vld [vmem:[#allocation7 + $0x2b8] sm:$0xff]
    %v328 = vld [vmem:[#allocation7 + $0x2c0] sm:$0xff]
    %v329 = vld [vmem:[#allocation7 + $0x2c8] sm:$0xff]
    %v330 = vld [vmem:[#allocation7 + $0x2d0] sm:$0xff]
    %v331 = vld [vmem:[#allocation7 + $0x2d8] sm:$0xff]
    %v332 = vld [vmem:[#allocation7 + $0x2e0] sm:$0xff]
    %v333 = vld [vmem:[#allocation7 + $0x2e8] sm:$0xff]
    %v334 = vld [vmem:[#allocation7 + $0x2f0] sm:$0xff]
    %v335 = vld [vmem:[#allocation7 + $0x2f8] sm:$0xff]
    %v336 = vld [vmem:[#allocation8] sm:$0x3f]
    %v338 = vlaneseq
    %v339 = vshrl.u32 %v338, 7
    %v340 = vsub.s32 0, %v339
    %v341 = vrot.slane %v336, %v340
    %v342 = vlaneseq
    %v343 = vshrl.u32 %v342, 7
    %v344 = vsub.s32 1, %v343
    %v345 = vrot.slane %v336, %v344
    %v346 = vlaneseq
    %v347 = vshrl.u32 %v346, 7
    %v348 = vsub.s32 2, %v347
    %v349 = vrot.slane %v336, %v348
    %v350 = vlaneseq
    %v351 = vshrl.u32 %v350, 7
    %v352 = vsub.s32 3, %v351
    %v353 = vrot.slane %v336, %v352
    %v354 = vlaneseq
    %v355 = vshrl.u32 %v354, 7
    %v356 = vsub.s32 4, %v355
    %v357 = vrot.slane %v336, %v356
    %v358 = vlaneseq
    %v359 = vshrl.u32 %v358, 7
    %v360 = vsub.s32 5, %v359
    %v361 = vrot.slane %v336, %v360
    %v464 = vunpack.c.l.b16 %v240
    %v465 = vunpack.c.h.b16 %v240
    %v466 = vunpack.c.l.b16 %v241
    %v467 = vunpack.c.h.b16 %v241
    %v468 = vunpack.c.l.b16 %v242
    %v469 = vunpack.c.h.b16 %v242
    %v470 = vunpack.c.l.b16 %v243
    %v471 = vunpack.c.h.b16 %v243
    %v472 = vunpack.c.l.b16 %v244
    %v473 = vunpack.c.h.b16 %v244
    %v474 = vunpack.c.l.b16 %v245
    %v475 = vunpack.c.h.b16 %v245
    %v476 = vunpack.c.l.b16 %v246
    %v477 = vunpack.c.h.b16 %v246
    %v478 = vunpack.c.l.b16 %v247
    %v479 = vunpack.c.h.b16 %v247
    %v480 = vunpack.c.l.b16 %v248
    %v481 = vunpack.c.h.b16 %v248
    %v482 = vunpack.c.l.b16 %v249
    %v483 = vunpack.c.h.b16 %v249
    %v484 = vunpack.c.l.b16 %v250
    %v485 = vunpack.c.h.b16 %v250
    %v486 = vunpack.c.l.b16 %v251
    %v487 = vunpack.c.h.b16 %v251
    %v488 = vunpack.c.l.b16 %v252
    %v489 = vunpack.c.h.b16 %v252
    %v490 = vunpack.c.l.b16 %v253
    %v491 = vunpack.c.h.b16 %v253
    %v492 = vunpack.c.l.b16 %v254
    %v493 = vunpack.c.h.b16 %v254
    %v494 = vunpack.c.l.b16 %v255
    %v495 = vunpack.c.h.b16 %v255
    %v496 = vunpack.c.l.b16 %v256
    %v497 = vunpack.c.h.b16 %v256
    %v498 = vunpack.c.l.b16 %v257
    %v499 = vunpack.c.h.b16 %v257
    %v500 = vunpack.c.l.b16 %v258
    %v501 = vunpack.c.h.b16 %v258
    %v502 = vunpack.c.l.b16 %v259
    %v503 = vunpack.c.h.b16 %v259
    %v504 = vunpack.c.l.b16 %v260
    %v505 = vunpack.c.h.b16 %v260
    %v506 = vunpack.c.l.b16 %v261
    %v507 = vunpack.c.h.b16 %v261
    %v508 = vunpack.c.l.b16 %v262
    %v509 = vunpack.c.h.b16 %v262
    %v510 = vunpack.c.l.b16 %v263
    %v511 = vunpack.c.h.b16 %v263
    %v512 = vunpack.c.l.b16 %v264
    %v513 = vunpack.c.h.b16 %v264
    %v514 = vunpack.c.l.b16 %v265
    %v515 = vunpack.c.h.b16 %v265
    %v516 = vunpack.c.l.b16 %v266
    %v517 = vunpack.c.h.b16 %v266
    %v518 = vunpack.c.l.b16 %v267
    %v519 = vunpack.c.h.b16 %v267
    %v520 = vunpack.c.l.b16 %v268
    %v521 = vunpack.c.h.b16 %v268
    %v522 = vunpack.c.l.b16 %v269
    %v523 = vunpack.c.h.b16 %v269
    %v524 = vunpack.c.l.b16 %v270
    %v525 = vunpack.c.h.b16 %v270
    %v526 = vunpack.c.l.b16 %v271
    %v527 = vunpack.c.h.b16 %v271
    %v528 = vunpack.c.l.b16 %v272
    %v529 = vunpack.c.h.b16 %v272
    %v530 = vunpack.c.l.b16 %v273
    %v531 = vunpack.c.h.b16 %v273
    %v532 = vunpack.c.l.b16 %v274
    %v533 = vunpack.c.h.b16 %v274
    %v534 = vunpack.c.l.b16 %v275
    %v535 = vunpack.c.h.b16 %v275
    %v536 = vunpack.c.l.b16 %v276
    %v537 = vunpack.c.h.b16 %v276
    %v538 = vunpack.c.l.b16 %v277
    %v539 = vunpack.c.h.b16 %v277
    %v540 = vunpack.c.l.b16 %v278
    %v541 = vunpack.c.h.b16 %v278
    %v542 = vunpack.c.l.b16 %v279
    %v543 = vunpack.c.h.b16 %v279
    %v544 = vunpack.c.l.b16 %v280
    %v545 = vunpack.c.h.b16 %v280
    %v546 = vunpack.c.l.b16 %v281
    %v547 = vunpack.c.h.b16 %v281
    %v548 = vunpack.c.l.b16 %v282
    %v549 = vunpack.c.h.b16 %v282
    %v550 = vunpack.c.l.b16 %v283
    %v551 = vunpack.c.h.b16 %v283
    %v552 = vunpack.c.l.b16 %v284
    %v553 = vunpack.c.h.b16 %v284
    %v554 = vunpack.c.l.b16 %v285
    %v555 = vunpack.c.h.b16 %v285
    %v556 = vunpack.c.l.b16 %v286
    %v557 = vunpack.c.h.b16 %v286
    %v558 = vunpack.c.l.b16 %v287
    %v559 = vunpack.c.h.b16 %v287
    %v560 = vunpack.c.l.b16 %v288
    %v561 = vunpack.c.h.b16 %v288
    %v562 = vunpack.c.l.b16 %v289
    %v563 = vunpack.c.h.b16 %v289
    %v564 = vunpack.c.l.b16 %v290
    %v565 = vunpack.c.h.b16 %v290
    %v566 = vunpack.c.l.b16 %v291
    %v567 = vunpack.c.h.b16 %v291
    %v568 = vunpack.c.l.b16 %v292
    %v569 = vunpack.c.h.b16 %v292
    %v570 = vunpack.c.l.b16 %v293
    %v571 = vunpack.c.h.b16 %v293
    %v572 = vunpack.c.l.b16 %v294
    %v573 = vunpack.c.h.b16 %v294
    %v574 = vunpack.c.l.b16 %v295
    %v575 = vunpack.c.h.b16 %v295
    %v576 = vunpack.c.l.b16 %v296
    %v577 = vunpack.c.h.b16 %v296
    %v578 = vunpack.c.l.b16 %v297
    %v579 = vunpack.c.h.b16 %v297
    %v580 = vunpack.c.l.b16 %v298
    %v581 = vunpack.c.h.b16 %v298
    %v582 = vunpack.c.l.b16 %v299
    %v583 = vunpack.c.h.b16 %v299
    %v584 = vunpack.c.l.b16 %v300
    %v585 = vunpack.c.h.b16 %v300
    %v586 = vunpack.c.l.b16 %v301
    %v587 = vunpack.c.h.b16 %v301
    %v588 = vunpack.c.l.b16 %v302
    %v589 = vunpack.c.h.b16 %v302
    %v590 = vunpack.c.l.b16 %v303
    %v591 = vunpack.c.h.b16 %v303
    %v592 = vunpack.c.l.b16 %v304
    %v593 = vunpack.c.h.b16 %v304
    %v594 = vunpack.c.l.b16 %v305
    %v595 = vunpack.c.h.b16 %v305
    %v596 = vunpack.c.l.b16 %v306
    %v597 = vunpack.c.h.b16 %v306
    %v598 = vunpack.c.l.b16 %v307
    %v599 = vunpack.c.h.b16 %v307
    %v600 = vunpack.c.l.b16 %v308
    %v601 = vunpack.c.h.b16 %v308
    %v602 = vunpack.c.l.b16 %v309
    %v603 = vunpack.c.h.b16 %v309
    %v604 = vunpack.c.l.b16 %v310
    %v605 = vunpack.c.h.b16 %v310
    %v606 = vunpack.c.l.b16 %v311
    %v607 = vunpack.c.h.b16 %v311
    %v608 = vunpack.c.l.b16 %v312
    %v609 = vunpack.c.h.b16 %v312
    %v610 = vunpack.c.l.b16 %v313
    %v611 = vunpack.c.h.b16 %v313
    %v612 = vunpack.c.l.b16 %v314
    %v613 = vunpack.c.h.b16 %v314
    %v614 = vunpack.c.l.b16 %v315
    %v615 = vunpack.c.h.b16 %v315
    %v616 = vunpack.c.l.b16 %v316
    %v617 = vunpack.c.h.b16 %v316
    %v618 = vunpack.c.l.b16 %v317
    %v619 = vunpack.c.h.b16 %v317
    %v620 = vunpack.c.l.b16 %v318
    %v621 = vunpack.c.h.b16 %v318
    %v622 = vunpack.c.l.b16 %v319
    %v623 = vunpack.c.h.b16 %v319
    %v624 = vunpack.c.l.b16 %v320
    %v625 = vunpack.c.h.b16 %v320
    %v626 = vunpack.c.l.b16 %v321
    %v627 = vunpack.c.h.b16 %v321
    %v628 = vunpack.c.l.b16 %v322
    %v629 = vunpack.c.h.b16 %v322
    %v630 = vunpack.c.l.b16 %v323
    %v631 = vunpack.c.h.b16 %v323
    %v632 = vunpack.c.l.b16 %v324
    %v633 = vunpack.c.h.b16 %v324
    %v634 = vunpack.c.l.b16 %v325
    %v635 = vunpack.c.h.b16 %v325
    %v636 = vunpack.c.l.b16 %v326
    %v637 = vunpack.c.h.b16 %v326
    %v638 = vunpack.c.l.b16 %v327
    %v639 = vunpack.c.h.b16 %v327
    %v640 = vunpack.c.l.b16 %v328
    %v641 = vunpack.c.h.b16 %v328
    %v642 = vunpack.c.l.b16 %v329
    %v643 = vunpack.c.h.b16 %v329
    %v644 = vunpack.c.l.b16 %v330
    %v645 = vunpack.c.h.b16 %v330
    %v646 = vunpack.c.l.b16 %v331
    %v647 = vunpack.c.h.b16 %v331
    %v648 = vunpack.c.l.b16 %v332
    %v649 = vunpack.c.h.b16 %v332
    %v650 = vunpack.c.l.b16 %v333
    %v651 = vunpack.c.h.b16 %v333
    %v652 = vunpack.c.l.b16 %v334
    %v653 = vunpack.c.h.b16 %v334
    %v654 = vunpack.c.l.b16 %v335
    %v655 = vunpack.c.h.b16 %v335
    %v656 = vpack.c.b16 %v470, %v464
    %v657 = vpack.c.b16 %v471, %v465
    %v658 = vpack.c.b16 %v472, %v466
    %v659 = vpack.c.b16 %v473, %v467
    %v660 = vpack.c.b16 %v474, %v468
    %v661 = vpack.c.b16 %v475, %v469
    %v662 = vpack.c.b16 %v482, %v476
    %v663 = vpack.c.b16 %v483, %v477
    %v664 = vpack.c.b16 %v484, %v478
    %v665 = vpack.c.b16 %v485, %v479
    %v666 = vpack.c.b16 %v486, %v480
    %v667 = vpack.c.b16 %v487, %v481
    %v668 = vpack.c.b16 %v494, %v488
    %v669 = vpack.c.b16 %v495, %v489
    %v670 = vpack.c.b16 %v496, %v490
    %v671 = vpack.c.b16 %v497, %v491
    %v672 = vpack.c.b16 %v498, %v492
    %v673 = vpack.c.b16 %v499, %v493
    %v674 = vpack.c.b16 %v506, %v500
    %v675 = vpack.c.b16 %v507, %v501
    %v676 = vpack.c.b16 %v508, %v502
    %v677 = vpack.c.b16 %v509, %v503
    %v678 = vpack.c.b16 %v510, %v504
    %v679 = vpack.c.b16 %v511, %v505
    %v680 = vpack.c.b16 %v518, %v512
    %v681 = vpack.c.b16 %v519, %v513
    %v682 = vpack.c.b16 %v520, %v514
    %v683 = vpack.c.b16 %v521, %v515
    %v684 = vpack.c.b16 %v522, %v516
    %v685 = vpack.c.b16 %v523, %v517
    %v686 = vpack.c.b16 %v530, %v524
    %v687 = vpack.c.b16 %v531, %v525
    %v688 = vpack.c.b16 %v532, %v526
    %v689 = vpack.c.b16 %v533, %v527
    %v690 = vpack.c.b16 %v534, %v528
    %v691 = vpack.c.b16 %v535, %v529
    %v692 = vpack.c.b16 %v542, %v536
    %v693 = vpack.c.b16 %v543, %v537
    %v694 = vpack.c.b16 %v544, %v538
    %v695 = vpack.c.b16 %v545, %v539
    %v696 = vpack.c.b16 %v546, %v540
    %v697 = vpack.c.b16 %v547, %v541
    %v698 = vpack.c.b16 %v554, %v548
    %v699 = vpack.c.b16 %v555, %v549
    %v700 = vpack.c.b16 %v556, %v550
    %v701 = vpack.c.b16 %v557, %v551
    %v702 = vpack.c.b16 %v558, %v552
    %v703 = vpack.c.b16 %v559, %v553
    %v704 = vpack.c.b16 %v566, %v560
    %v705 = vpack.c.b16 %v567, %v561
    %v706 = vpack.c.b16 %v568, %v562
    %v707 = vpack.c.b16 %v569, %v563
    %v708 = vpack.c.b16 %v570, %v564
    %v709 = vpack.c.b16 %v571, %v565
    %v710 = vpack.c.b16 %v578, %v572
    %v711 = vpack.c.b16 %v579, %v573
    %v712 = vpack.c.b16 %v580, %v574
    %v713 = vpack.c.b16 %v581, %v575
    %v714 = vpack.c.b16 %v582, %v576
    %v715 = vpack.c.b16 %v583, %v577
    %v716 = vpack.c.b16 %v590, %v584
    %v717 = vpack.c.b16 %v591, %v585
    %v718 = vpack.c.b16 %v592, %v586
    %v719 = vpack.c.b16 %v593, %v587
    %v720 = vpack.c.b16 %v594, %v588
    %v721 = vpack.c.b16 %v595, %v589
    %v722 = vpack.c.b16 %v602, %v596
    %v723 = vpack.c.b16 %v603, %v597
    %v724 = vpack.c.b16 %v604, %v598
    %v725 = vpack.c.b16 %v605, %v599
    %v726 = vpack.c.b16 %v606, %v600
    %v727 = vpack.c.b16 %v607, %v601
    %v728 = vpack.c.b16 %v614, %v608
    %v729 = vpack.c.b16 %v615, %v609
    %v730 = vpack.c.b16 %v616, %v610
    %v731 = vpack.c.b16 %v617, %v611
    %v732 = vpack.c.b16 %v618, %v612
    %v733 = vpack.c.b16 %v619, %v613
    %v734 = vpack.c.b16 %v626, %v620
    %v735 = vpack.c.b16 %v627, %v621
    %v736 = vpack.c.b16 %v628, %v622
    %v737 = vpack.c.b16 %v629, %v623
    %v738 = vpack.c.b16 %v630, %v624
    %v739 = vpack.c.b16 %v631, %v625
    %v740 = vpack.c.b16 %v638, %v632
    %v741 = vpack.c.b16 %v639, %v633
    %v742 = vpack.c.b16 %v640, %v634
    %v743 = vpack.c.b16 %v641, %v635
    %v744 = vpack.c.b16 %v642, %v636
    %v745 = vpack.c.b16 %v643, %v637
    %v746 = vpack.c.b16 %v650, %v644
    %v747 = vpack.c.b16 %v651, %v645
    %v748 = vpack.c.b16 %v652, %v646
    %v749 = vpack.c.b16 %v653, %v647
    %v750 = vpack.c.b16 %v654, %v648
    %v751 = vpack.c.b16 %v655, %v649
    %848 = vmatprep.subr.bf16.mxu0 %v699
    %849 = vmatpush1.bf16.msra.mxu0 %v698
    %850 = vmatprep.subr.bf16.mxu0 %v693
    %851 = vmatpush1.bf16.msra.mxu0 %v692
    %852 = vmatprep.subr.bf16.mxu0 %v687
    %853 = vmatpush1.bf16.msra.mxu0 %v686
    %854 = vmatprep.subr.bf16.mxu0 %v681
    %855 = vmatpush1.bf16.msra.mxu0 %v680
    %856 = vmatprep.subr.bf16.mxu0 %v675
    %857 = vmatpush1.bf16.msra.mxu0 %v674
    %858 = vmatprep.subr.bf16.mxu0 %v669
    %859 = vmatpush1.bf16.msra.mxu0 %v668
    %860 = vmatprep.subr.bf16.mxu0 %v663
    %861 = vmatpush1.bf16.msra.mxu0 %v662
    %862 = vmatprep.subr.bf16.mxu0 %v657
    %863 = vmatpush1.bf16.msra.mxu0 %v656
    %864 = vmatprep.subr.bf16.mxu0 %v747
    %865 = vmatpush2.bf16.msra.mxu0 %v746
    %866 = vmatprep.subr.bf16.mxu0 %v741
    %867 = vmatpush2.bf16.msra.mxu0 %v740
    %868 = vmatprep.subr.bf16.mxu0 %v735
    %869 = vmatpush2.bf16.msra.mxu0 %v734
    %870 = vmatprep.subr.bf16.mxu0 %v729
    %871 = vmatpush2.bf16.msra.mxu0 %v728
    %872 = vmatprep.subr.bf16.mxu0 %v723
    %873 = vmatpush2.bf16.msra.mxu0 %v722
    %874 = vmatprep.subr.bf16.mxu0 %v717
    %875 = vmatpush2.bf16.msra.mxu0 %v716
    %876 = vmatprep.subr.bf16.mxu0 %v711
    %877 = vmatpush2.bf16.msra.mxu0 %v710
    %878 = vmatprep.subr.bf16.mxu0 %v705
    %879 = vmatpush2.bf16.msra.mxu0 %v704
    %880 = vmatprep.mubr.bf16.mxu0 %v237
    %881 = vmatmul.mubr.bf16.gmra.mxu0 %v236
    %v882 = vpop.f32.mrf.mxu0
    %v883 = vadd.f32 %v341, %v882
    %v884 = vpop.f32.mrf.mxu0
    %v885 = vadd.f32 %v345, %v884
    %v886 = vpop.f32.mrf.mxu0
    %v887 = vadd.f32 %v341, %v886
    %v888 = vpop.f32.mrf.mxu0
    %v889 = vadd.f32 %v345, %v888
    %890 = vmatprep.mubr.bf16.mxu0 %v239
    %891 = vmatmul.mubr.bf16.gmra.mxu0 %v238
    %v892 = vpop.f32.mrf.mxu0
    %v893 = vadd.f32 %v341, %v892
    %v894 = vpop.f32.mrf.mxu0
    %v895 = vadd.f32 %v345, %v894
    %v896 = vpop.f32.mrf.mxu0
    %v897 = vadd.f32 %v341, %v896
    %v898 = vpop.f32.mrf.mxu0
    %v899 = vadd.f32 %v345, %v898
    %900 = vdwg.mxu0
    %901 = vmatprep.subr.bf16.mxu0 %v701
    %902 = vmatpush1.bf16.msra.mxu0 %v700
    %903 = vmatprep.subr.bf16.mxu0 %v695
    %904 = vmatpush1.bf16.msra.mxu0 %v694
    %905 = vmatprep.subr.bf16.mxu0 %v689
    %906 = vmatpush1.bf16.msra.mxu0 %v688
    %907 = vmatprep.subr.bf16.mxu0 %v683
    %908 = vmatpush1.bf16.msra.mxu0 %v682
    %909 = vmatprep.subr.bf16.mxu0 %v677
    %910 = vmatpush1.bf16.msra.mxu0 %v676
    %911 = vmatprep.subr.bf16.mxu0 %v671
    %912 = vmatpush1.bf16.msra.mxu0 %v670
    %913 = vmatprep.subr.bf16.mxu0 %v665
    %914 = vmatpush1.bf16.msra.mxu0 %v664
    %915 = vmatprep.subr.bf16.mxu0 %v659
    %916 = vmatpush1.bf16.msra.mxu0 %v658
    %917 = vmatprep.subr.bf16.mxu0 %v749
    %918 = vmatpush2.bf16.msra.mxu0 %v748
    %919 = vmatprep.subr.bf16.mxu0 %v743
    %920 = vmatpush2.bf16.msra.mxu0 %v742
    %921 = vmatprep.subr.bf16.mxu0 %v737
    %922 = vmatpush2.bf16.msra.mxu0 %v736
    %923 = vmatprep.subr.bf16.mxu0 %v731
    %924 = vmatpush2.bf16.msra.mxu0 %v730
    %925 = vmatprep.subr.bf16.mxu0 %v725
    %926 = vmatpush2.bf16.msra.mxu0 %v724
    %927 = vmatprep.subr.bf16.mxu0 %v719
    %928 = vmatpush2.bf16.msra.mxu0 %v718
    %929 = vmatprep.subr.bf16.mxu0 %v713
    %930 = vmatpush2.bf16.msra.mxu0 %v712
    %931 = vmatprep.subr.bf16.mxu0 %v707
    %932 = vmatpush2.bf16.msra.mxu0 %v706
    %933 = vmatprep.mubr.bf16.mxu0 %v237
    %934 = vmatmul.mubr.bf16.gmra.mxu0 %v236
    %v935 = vpop.f32.mrf.mxu0
    %v936 = vadd.f32 %v349, %v935
    %v937 = vpop.f32.mrf.mxu0
    %v938 = vadd.f32 %v353, %v937
    %v939 = vpop.f32.mrf.mxu0
    %v940 = vadd.f32 %v349, %v939
    %v941 = vpop.f32.mrf.mxu0
    %v942 = vadd.f32 %v353, %v941
    %943 = vmatprep.mubr.bf16.mxu0 %v239
    %944 = vmatmul.mubr.bf16.gmra.mxu0 %v238
    %v945 = vpop.f32.mrf.mxu0
    %v946 = vadd.f32 %v349, %v945
    %v947 = vpop.f32.mrf.mxu0
    %v948 = vadd.f32 %v353, %v947
    %v949 = vpop.f32.mrf.mxu0
    %v950 = vadd.f32 %v349, %v949
    %v951 = vpop.f32.mrf.mxu0
    %v952 = vadd.f32 %v353, %v951
    %953 = vdwg.mxu0
    %954 = vmatprep.subr.bf16.mxu0 %v703
    %955 = vmatpush1.bf16.msra.mxu0 %v702
    %956 = vmatprep.subr.bf16.mxu0 %v697
    %957 = vmatpush1.bf16.msra.mxu0 %v696
    %958 = vmatprep.subr.bf16.mxu0 %v691
    %959 = vmatpush1.bf16.msra.mxu0 %v690
    %960 = vmatprep.subr.bf16.mxu0 %v685
    %961 = vmatpush1.bf16.msra.mxu0 %v684
    %962 = vmatprep.subr.bf16.mxu0 %v679
    %963 = vmatpush1.bf16.msra.mxu0 %v678
    %964 = vmatprep.subr.bf16.mxu0 %v673
    %965 = vmatpush1.bf16.msra.mxu0 %v672
    %966 = vmatprep.subr.bf16.mxu0 %v667
    %967 = vmatpush1.bf16.msra.mxu0 %v666
    %968 = vmatprep.subr.bf16.mxu0 %v661
    %969 = vmatpush1.bf16.msra.mxu0 %v660
    %970 = vmatprep.subr.bf16.mxu0 %v751
    %971 = vmatpush2.bf16.msra.mxu0 %v750
    %972 = vmatprep.subr.bf16.mxu0 %v745
    %973 = vmatpush2.bf16.msra.mxu0 %v744
    %974 = vmatprep.subr.bf16.mxu0 %v739
    %975 = vmatpush2.bf16.msra.mxu0 %v738
    %976 = vmatprep.subr.bf16.mxu0 %v733
    %977 = vmatpush2.bf16.msra.mxu0 %v732
    %978 = vmatprep.subr.bf16.mxu0 %v727
    %979 = vmatpush2.bf16.msra.mxu0 %v726
    %980 = vmatprep.subr.bf16.mxu0 %v721
    %981 = vmatpush2.bf16.msra.mxu0 %v720
    %982 = vmatprep.subr.bf16.mxu0 %v715
    %983 = vmatpush2.bf16.msra.mxu0 %v714
    %984 = vmatprep.subr.bf16.mxu0 %v709
    %985 = vmatpush2.bf16.msra.mxu0 %v708
    %986 = vmatprep.mubr.bf16.mxu0 %v237
    %987 = vmatmul.mubr.bf16.gmra.mxu0 %v236
    %v988 = vpop.f32.mrf.mxu0
    %v989 = vadd.f32 %v357, %v988
    %v990 = vpop.f32.mrf.mxu0
    %v991 = vadd.f32 %v361, %v990
    %v992 = vpop.f32.mrf.mxu0
    %v993 = vadd.f32 %v357, %v992
    %v994 = vpop.f32.mrf.mxu0
    %v995 = vadd.f32 %v361, %v994
    %996 = vmatprep.mubr.bf16.mxu0 %v239
    %997 = vmatmul.mubr.bf16.gmra.mxu0 %v238
    %v998 = vpop.f32.mrf.mxu0
    %v999 = vadd.f32 %v357, %v998
    %v1000 = vpop.f32.mrf.mxu0
    %v1001 = vadd.f32 %v361, %v1000
    %v1002 = vpop.f32.mrf.mxu0
    %v1003 = vadd.f32 %v357, %v1002
    %v1004 = vpop.f32.mrf.mxu0
    %v1005 = vadd.f32 %v361, %v1004
    %1006 = vdwg.mxu0
    %v1007 = vpack.c.bf16 %v887, %v883
    %v1008 = vpack.c.bf16 %v889, %v885
    %v1009 = vpack.c.bf16 %v940, %v936
    %1010 = vmatprep.subr.bf16.mxu0 0
    %1011 = vmatpush1.bf16.xpose.msra.mxu0 0
    %1012 = vmatprep.subr.bf16.mxu0 0
    %1013 = vmatpush1.bf16.xpose.msra.mxu0 0
    %1014 = vmatprep.subr.bf16.mxu0 0
    %1015 = vmatpush1.bf16.xpose.msra.mxu0 0
    %1016 = vmatprep.subr.bf16.mxu0 0
    %1017 = vmatpush1.bf16.xpose.msra.mxu0 0
    %1018 = vmatprep.subr.bf16.mxu0 0
    %1019 = vmatpush1.bf16.xpose.msra.mxu0 0
    %1020 = vmatprep.subr.bf16.mxu0 0
    %1021 = vmatpush1.bf16.xpose.msra.mxu0 0
    %1022 = vmatprep.subr.bf16.mxu0 0
    %1023 = vmatpush1.bf16.xpose.msra.mxu0 0
    %1024 = vmatprep.subr.bf16.mxu0 0
    %1025 = vmatpush1.bf16.xpose.msra.mxu0 %v1008
    %1026 = vmatprep.subr.bf16.mxu0 0
    %1027 = vmatpush2.bf16.xpose.msra.mxu0 0
    %1028 = vmatprep.subr.bf16.mxu0 0
    %1029 = vmatpush2.bf16.xpose.msra.mxu0 0
    %1030 = vmatprep.subr.bf16.mxu0 0
    %1031 = vmatpush2.bf16.xpose.msra.mxu0 0
    %1032 = vmatprep.subr.bf16.mxu0 0
    %1033 = vmatpush2.bf16.xpose.msra.mxu0 0
    %1034 = vmatprep.subr.bf16.mxu0 0
    %1035 = vmatpush2.bf16.xpose.msra.mxu0 0
    %1036 = vmatprep.subr.bf16.mxu0 0
    %1037 = vmatpush2.bf16.xpose.msra.mxu0 0
    %1038 = vmatprep.subr.bf16.mxu0 0
    %1039 = vmatpush2.bf16.xpose.msra.mxu0 0
    %1040 = vmatprep.subr.bf16.mxu0 0
    %1041 = vmatpush2.bf16.xpose.msra.mxu0 0
    %1042 = vmatprep.mubr.bf16.mxu0 0
    %1043 = vmatmul.mubr.bf16.gmra.mxu0 %v1007
    %v1044 = vpop.f32.mrf.mxu0
    %v1045 = vadd.f32 0.0, %v1044
    %v1046 = vpop.f32.mrf.mxu0
    %v1047 = vpop.f32.mrf.mxu0
    %v1048 = vadd.f32 0.0, %v1047
    %v1049 = vpop.f32.mrf.mxu0
    %1050 = vdwg.mxu0
    %v1051 = vmul.f32 %v1045, 0.088388346
    %v1052 = vmul.f32 %v1048, 0.088388346
    %vm1053 = vcmask 130048
    %v1054 = vsel %vm1053, %v1051, -inf
    %1055 = vmax.xlane.f32.xlu0 %v1054
    %v1056 = vpop.xlane.xlu0 %1055
    %v1057 = vsel %vm1053, %v1052, -inf
    %1058 = vmax.xlane.f32.xlu0 %v1057
    %v1059 = vpop.xlane.xlu0 %1058
    %v1060 = vsub.f32 %v1051, %v1056
    %v1061 = vsub.f32 %v1052, %v1059
    %v1062 = vmul.f32 %v1060, 1.442695
    %v1063 = vpow.pop %v1062
    %v1064 = vmul.f32 %v1061, 1.442695
    %v1065 = vpow.pop %v1064
    %v1066 = vsel %vm1053, %v1063, 0.0
    %1067 = vadd.xlane.f32.xlu0 %v1066
    %v1068 = vpop.xlane.xlu0 %1067
    %v1069 = vsel %vm1053, %v1065, 0.0
    %1070 = vadd.xlane.f32.xlu0 %v1069
    %v1071 = vpop.xlane.xlu0 %1070
    %v1072 = vrcp.pop %v1068
    %v1073 = vrcp.pop %v1071
    %v1074 = vmul.f32 %v1063, %v1072
    %v1075 = vmul.f32 %v1065, %v1073
    %v1076 = vpack.c.bf16 %v1075, %v1074
    %v1078 = vsel %vm1053, %v1076, 0
    %1080 = vmatprep.subr.bf16.mxu0 0
    %1081 = vmatpush1.bf16.msra.mxu0 0
    %1082 = vmatprep.subr.bf16.mxu0 0
    %1083 = vmatpush1.bf16.msra.mxu0 0
    %1084 = vmatprep.subr.bf16.mxu0 0
    %1085 = vmatpush1.bf16.msra.mxu0 0
    %1086 = vmatprep.subr.bf16.mxu0 0
    %1087 = vmatpush1.bf16.msra.mxu0 0
    %1088 = vmatprep.subr.bf16.mxu0 0
    %1089 = vmatpush1.bf16.msra.mxu0 0
    %1090 = vmatprep.subr.bf16.mxu0 0
    %1091 = vmatpush1.bf16.msra.mxu0 0
    %1092 = vmatprep.subr.bf16.mxu0 0
    %1093 = vmatpush1.bf16.msra.mxu0 0
    %1094 = vmatprep.subr.bf16.mxu0 0
    %1095 = vmatpush1.bf16.msra.mxu0 %v1009
    %1096 = vmatprep.subr.bf16.mxu0 0
    %1097 = vmatpush2.bf16.msra.mxu0 0
    %1098 = vmatprep.subr.bf16.mxu0 0
    %1099 = vmatpush2.bf16.msra.mxu0 0
    %1100 = vmatprep.subr.bf16.mxu0 0
    %1101 = vmatpush2.bf16.msra.mxu0 0
    %1102 = vmatprep.subr.bf16.mxu0 0
    %1103 = vmatpush2.bf16.msra.mxu0 0
    %1104 = vmatprep.subr.bf16.mxu0 0
    %1105 = vmatpush2.bf16.msra.mxu0 0
    %1106 = vmatprep.subr.bf16.mxu0 0
    %1107 = vmatpush2.bf16.msra.mxu0 0
    %1108 = vmatprep.subr.bf16.mxu0 0
    %1109 = vmatpush2.bf16.msra.mxu0 0
    %1110 = vmatprep.subr.bf16.mxu0 0
    %1111 = vmatpush2.bf16.msra.mxu0 0
    %1112 = vmatprep.mubr.bf16.mxu0 0
    %1113 = vmatmul.mubr.bf16.gmra.mxu0 %v1078
    %v1114 = vpop.f32.mrf.mxu0
    %v1115 = vadd.f32 0.0, %v1114
    %v1116 = vpop.f32.mrf.mxu0
    %v1117 = vpop.f32.mrf.mxu0
    %v1118 = vadd.f32 0.0, %v1117
    %v1119 = vpop.f32.mrf.mxu0
    %1120 = vdwg.mxu0
    %v1121 = vadd.f32 %v109, %v1115
    %v1122 = vadd.f32 %v111, %v1118
    %1123 = vst [vmem:[#allocation13] sm:$0xff] %v1121
    %1124 = vst [vmem:[#allocation13 + $0x10] sm:$0xff] %v1122
    %v1125 = vpack.c.bf16 %v942, %v938
    %v1126 = vpack.c.bf16 %v993, %v989
    %v1127 = vpack.c.bf16 %v995, %v991
    %1128 = vmatprep.subr.bf16.mxu0 0
    %1129 = vmatpush1.bf16.xpose.msra.mxu0 0
    %1130 = vmatprep.subr.bf16.mxu0 0
    %1131 = vmatpush1.bf16.xpose.msra.mxu0 0
    %1132 = vmatprep.subr.bf16.mxu0 0
    %1133 = vmatpush1.bf16.xpose.msra.mxu0 0
    %1134 = vmatprep.subr.bf16.mxu0 0
    %1135 = vmatpush1.bf16.xpose.msra.mxu0 0
    %1136 = vmatprep.subr.bf16.mxu0 0
    %1137 = vmatpush1.bf16.xpose.msra.mxu0 0
    %1138 = vmatprep.subr.bf16.mxu0 0
    %1139 = vmatpush1.bf16.xpose.msra.mxu0 0
    %1140 = vmatprep.subr.bf16.mxu0 0
    %1141 = vmatpush1.bf16.xpose.msra.mxu0 0
    %1142 = vmatprep.subr.bf16.mxu0 0
    %1143 = vmatpush1.bf16.xpose.msra.mxu0 %v1126
    %1144 = vmatprep.subr.bf16.mxu0 0
    %1145 = vmatpush2.bf16.xpose.msra.mxu0 0
    %1146 = vmatprep.subr.bf16.mxu0 0
    %1147 = vmatpush2.bf16.xpose.msra.mxu0 0
    %1148 = vmatprep.subr.bf16.mxu0 0
    %1149 = vmatpush2.bf16.xpose.msra.mxu0 0
    %1150 = vmatprep.subr.bf16.mxu0 0
    %1151 = vmatpush2.bf16.xpose.msra.mxu0 0
    %1152 = vmatprep.subr.bf16.mxu0 0
    %1153 = vmatpush2.bf16.xpose.msra.mxu0 0
    %1154 = vmatprep.subr.bf16.mxu0 0
    %1155 = vmatpush2.bf16.xpose.msra.mxu0 0
    %1156 = vmatprep.subr.bf16.mxu0 0
    %1157 = vmatpush2.bf16.xpose.msra.mxu0 0
    %1158 = vmatprep.subr.bf16.mxu0 0
    %1159 = vmatpush2.bf16.xpose.msra.mxu0 0
    %1160 = vmatprep.mubr.bf16.mxu0 0
    %1161 = vmatmul.mubr.bf16.gmra.mxu0 %v1125
    %v1162 = vpop.f32.mrf.mxu0
    %v1163 = vadd.f32 0.0, %v1162
    %v1164 = vpop.f32.mrf.mxu0
    %v1165 = vpop.f32.mrf.mxu0
    %v1166 = vadd.f32 0.0, %v1165
    %v1167 = vpop.f32.mrf.mxu0
    %1168 = vdwg.mxu0
    %v1169 = vmul.f32 %v1163, 0.088388346
    %v1170 = vmul.f32 %v1166, 0.088388346
    %v1171 = vsel %vm1053, %v1169, -inf
    %1172 = vmax.xlane.f32.xlu0 %v1171
    %v1173 = vpop.xlane.xlu0 %1172
    %v1174 = vsel %vm1053, %v1170, -inf
    %1175 = vmax.xlane.f32.xlu0 %v1174
    %v1176 = vpop.xlane.xlu0 %1175
    %v1177 = vsub.f32 %v1169, %v1173
    %v1178 = vsub.f32 %v1170, %v1176
    %v1179 = vmul.f32 %v1177, 1.442695
    %v1180 = vpow.pop %v1179
    %v1181 = vmul.f32 %v1178, 1.442695
    %v1182 = vpow.pop %v1181
    %v1183 = vsel %vm1053, %v1180, 0.0
    %1184 = vadd.xlane.f32.xlu0 %v1183
    %v1185 = vpop.xlane.xlu0 %1184
    %v1186 = vsel %vm1053, %v1182, 0.0
    %1187 = vadd.xlane.f32.xlu0 %v1186
    %v1188 = vpop.xlane.xlu0 %1187
    %v1189 = vrcp.pop %v1185
    %v1190 = vrcp.pop %v1188
    %v1191 = vmul.f32 %v1180, %v1189
    %v1192 = vmul.f32 %v1182, %v1190
    %v1193 = vpack.c.bf16 %v1192, %v1191
    %v1195 = vsel %vm1053, %v1193, 0
    %1197 = vmatprep.subr.bf16.mxu0 0
    %1198 = vmatpush1.bf16.msra.mxu0 0
    %1199 = vmatprep.subr.bf16.mxu0 0
    %1200 = vmatpush1.bf16.msra.mxu0 0
    %1201 = vmatprep.subr.bf16.mxu0 0
    %1202 = vmatpush1.bf16.msra.mxu0 0
    %1203 = vmatprep.subr.bf16.mxu0 0
    %1204 = vmatpush1.bf16.msra.mxu0 0
    %1205 = vmatprep.subr.bf16.mxu0 0
    %1206 = vmatpush1.bf16.msra.mxu0 0
    %1207 = vmatprep.subr.bf16.mxu0 0
    %1208 = vmatpush1.bf16.msra.mxu0 0
    %1209 = vmatprep.subr.bf16.mxu0 0
    %1210 = vmatpush1.bf16.msra.mxu0 0
    %1211 = vmatprep.subr.bf16.mxu0 0
    %1212 = vmatpush1.bf16.msra.mxu0 %v1127
    %1213 = vmatprep.subr.bf16.mxu0 0
    %1214 = vmatpush2.bf16.msra.mxu0 0
    %1215 = vmatprep.subr.bf16.mxu0 0
    %1216 = vmatpush2.bf16.msra.mxu0 0
    %1217 = vmatprep.subr.bf16.mxu0 0
    %1218 = vmatpush2.bf16.msra.mxu0 0
    %1219 = vmatprep.subr.bf16.mxu0 0
    %1220 = vmatpush2.bf16.msra.mxu0 0
    %1221 = vmatprep.subr.bf16.mxu0 0
    %1222 = vmatpush2.bf16.msra.mxu0 0
    %1223 = vmatprep.subr.bf16.mxu0 0
    %1224 = vmatpush2.bf16.msra.mxu0 0
    %1225 = vmatprep.subr.bf16.mxu0 0
    %1226 = vmatpush2.bf16.msra.mxu0 0
    %1227 = vmatprep.subr.bf16.mxu0 0
    %1228 = vmatpush2.bf16.msra.mxu0 0
    %1229 = vmatprep.mubr.bf16.mxu0 0
    %1230 = vmatmul.mubr.bf16.gmra.mxu0 %v1195
    %v1231 = vpop.f32.mrf.mxu0
    %v1232 = vadd.f32 0.0, %v1231
    %v1233 = vpop.f32.mrf.mxu0
    %v1234 = vpop.f32.mrf.mxu0
    %v1235 = vadd.f32 0.0, %v1234
    %v1236 = vpop.f32.mrf.mxu0
    %1237 = vdwg.mxu0
    %v1238 = vadd.f32 %v110, %v1232
    %v1239 = vadd.f32 %v112, %v1235
    %1240 = vst [vmem:[#allocation13 + $0x8] sm:$0xff] %v1238
    %1241 = vst [vmem:[#allocation13 + $0x18] sm:$0xff] %v1239
    %v1242 = vpack.c.bf16 %v897, %v893
    %v1243 = vpack.c.bf16 %v899, %v895
    %v1244 = vpack.c.bf16 %v950, %v946
    %1245 = vmatprep.subr.bf16.mxu0 0
    %1246 = vmatpush1.bf16.xpose.msra.mxu0 0
    %1247 = vmatprep.subr.bf16.mxu0 0
    %1248 = vmatpush1.bf16.xpose.msra.mxu0 0
    %1249 = vmatprep.subr.bf16.mxu0 0
    %1250 = vmatpush1.bf16.xpose.msra.mxu0 0
    %1251 = vmatprep.subr.bf16.mxu0 0
    %1252 = vmatpush1.bf16.xpose.msra.mxu0 0
    %1253 = vmatprep.subr.bf16.mxu0 0
    %1254 = vmatpush1.bf16.xpose.msra.mxu0 0
    %1255 = vmatprep.subr.bf16.mxu0 0
    %1256 = vmatpush1.bf16.xpose.msra.mxu0 0
    %1257 = vmatprep.subr.bf16.mxu0 0
    %1258 = vmatpush1.bf16.xpose.msra.mxu0 0
    %1259 = vmatprep.subr.bf16.mxu0 0
    %1260 = vmatpush1.bf16.xpose.msra.mxu0 %v1243
    %1261 = vmatprep.subr.bf16.mxu0 0
    %1262 = vmatpush2.bf16.xpose.msra.mxu0 0
    %1263 = vmatprep.subr.bf16.mxu0 0
    %1264 = vmatpush2.bf16.xpose.msra.mxu0 0
    %1265 = vmatprep.subr.bf16.mxu0 0
    %1266 = vmatpush2.bf16.xpose.msra.mxu0 0
    %1267 = vmatprep.subr.bf16.mxu0 0
    %1268 = vmatpush2.bf16.xpose.msra.mxu0 0
    %1269 = vmatprep.subr.bf16.mxu0 0
    %1270 = vmatpush2.bf16.xpose.msra.mxu0 0
    %1271 = vmatprep.subr.bf16.mxu0 0
    %1272 = vmatpush2.bf16.xpose.msra.mxu0 0
    %1273 = vmatprep.subr.bf16.mxu0 0
    %1274 = vmatpush2.bf16.xpose.msra.mxu0 0
    %1275 = vmatprep.subr.bf16.mxu0 0
    %1276 = vmatpush2.bf16.xpose.msra.mxu0 0
    %1277 = vmatprep.mubr.bf16.mxu0 0
    %1278 = vmatmul.mubr.bf16.gmra.mxu0 %v1242
    %v1279 = vpop.f32.mrf.mxu0
    %v1280 = vadd.f32 0.0, %v1279
    %v1281 = vpop.f32.mrf.mxu0
    %v1282 = vpop.f32.mrf.mxu0
    %v1283 = vadd.f32 0.0, %v1282
    %v1284 = vpop.f32.mrf.mxu0
    %1285 = vdwg.mxu0
    %v1286 = vmul.f32 %v1280, 0.088388346
    %v1287 = vmul.f32 %v1283, 0.088388346
    %v1288 = vsel %vm1053, %v1286, -inf
    %1289 = vmax.xlane.f32.xlu0 %v1288
    %v1290 = vpop.xlane.xlu0 %1289
    %v1291 = vsel %vm1053, %v1287, -inf
    %1292 = vmax.xlane.f32.xlu0 %v1291
    %v1293 = vpop.xlane.xlu0 %1292
    %v1294 = vsub.f32 %v1286, %v1290
    %v1295 = vsub.f32 %v1287, %v1293
    %v1296 = vmul.f32 %v1294, 1.442695
    %v1297 = vpow.pop %v1296
    %v1298 = vmul.f32 %v1295, 1.442695
    %v1299 = vpow.pop %v1298
    %v1300 = vsel %vm1053, %v1297, 0.0
    %1301 = vadd.xlane.f32.xlu0 %v1300
    %v1302 = vpop.xlane.xlu0 %1301
    %v1303 = vsel %vm1053, %v1299, 0.0
    %1304 = vadd.xlane.f32.xlu0 %v1303
    %v1305 = vpop.xlane.xlu0 %1304
    %v1306 = vrcp.pop %v1302
    %v1307 = vrcp.pop %v1305
    %v1308 = vmul.f32 %v1297, %v1306
    %v1309 = vmul.f32 %v1299, %v1307
    %v1310 = vpack.c.bf16 %v1309, %v1308
    %v1312 = vsel %vm1053, %v1310, 0
    %1314 = vmatprep.subr.bf16.mxu0 0
    %1315 = vmatpush1.bf16.msra.mxu0 0
    %1316 = vmatprep.subr.bf16.mxu0 0
    %1317 = vmatpush1.bf16.msra.mxu0 0
    %1318 = vmatprep.subr.bf16.mxu0 0
    %1319 = vmatpush1.bf16.msra.mxu0 0
    %1320 = vmatprep.subr.bf16.mxu0 0
    %1321 = vmatpush1.bf16.msra.mxu0 0
    %1322 = vmatprep.subr.bf16.mxu0 0
    %1323 = vmatpush1.bf16.msra.mxu0 0
    %1324 = vmatprep.subr.bf16.mxu0 0
    %1325 = vmatpush1.bf16.msra.mxu0 0
    %1326 = vmatprep.subr.bf16.mxu0 0
    %1327 = vmatpush1.bf16.msra.mxu0 0
    %1328 = vmatprep.subr.bf16.mxu0 0
    %1329 = vmatpush1.bf16.msra.mxu0 %v1244
    %1330 = vmatprep.subr.bf16.mxu0 0
    %1331 = vmatpush2.bf16.msra.mxu0 0
    %1332 = vmatprep.subr.bf16.mxu0 0
    %1333 = vmatpush2.bf16.msra.mxu0 0
    %1334 = vmatprep.subr.bf16.mxu0 0
    %1335 = vmatpush2.bf16.msra.mxu0 0
    %1336 = vmatprep.subr.bf16.mxu0 0
    %1337 = vmatpush2.bf16.msra.mxu0 0
    %1338 = vmatprep.subr.bf16.mxu0 0
    %1339 = vmatpush2.bf16.msra.mxu0 0
    %1340 = vmatprep.subr.bf16.mxu0 0
    %1341 = vmatpush2.bf16.msra.mxu0 0
    %1342 = vmatprep.subr.bf16.mxu0 0
    %1343 = vmatpush2.bf16.msra.mxu0 0
    %1344 = vmatprep.subr.bf16.mxu0 0
    %1345 = vmatpush2.bf16.msra.mxu0 0
    %1346 = vmatprep.mubr.bf16.mxu0 0
    %1347 = vmatmul.mubr.bf16.gmra.mxu0 %v1312
    %v1348 = vpop.f32.mrf.mxu0
    %v1349 = vadd.f32 0.0, %v1348
    %v1350 = vpop.f32.mrf.mxu0
    %v1351 = vpop.f32.mrf.mxu0
    %v1352 = vadd.f32 0.0, %v1351
    %v1353 = vpop.f32.mrf.mxu0
    %1354 = vdwg.mxu0
    %v1355 = vadd.f32 %v113, %v1349
    %v1356 = vadd.f32 %v115, %v1352
    %1357 = vst [vmem:[#allocation13 + $0x20] sm:$0xff] %v1355
    %1358 = vst [vmem:[#allocation13 + $0x30] sm:$0xff] %v1356
    %v1359 = vpack.c.bf16 %v952, %v948
    %v1360 = vpack.c.bf16 %v1003, %v999
    %v1361 = vpack.c.bf16 %v1005, %v1001
    %1362 = vmatprep.subr.bf16.mxu0 0
    %1363 = vmatpush1.bf16.xpose.msra.mxu0 0
    %1364 = vmatprep.subr.bf16.mxu0 0
    %1365 = vmatpush1.bf16.xpose.msra.mxu0 0
    %1366 = vmatprep.subr.bf16.mxu0 0
    %1367 = vmatpush1.bf16.xpose.msra.mxu0 0
    %1368 = vmatprep.subr.bf16.mxu0 0
    %1369 = vmatpush1.bf16.xpose.msra.mxu0 0
    %1370 = vmatprep.subr.bf16.mxu0 0
    %1371 = vmatpush1.bf16.xpose.msra.mxu0 0
    %1372 = vmatprep.subr.bf16.mxu0 0
    %1373 = vmatpush1.bf16.xpose.msra.mxu0 0
    %1374 = vmatprep.subr.bf16.mxu0 0
    %1375 = vmatpush1.bf16.xpose.msra.mxu0 0
    %1376 = vmatprep.subr.bf16.mxu0 0
    %1377 = vmatpush1.bf16.xpose.msra.mxu0 %v1360
    %1378 = vmatprep.subr.bf16.mxu0 0
    %1379 = vmatpush2.bf16.xpose.msra.mxu0 0
    %1380 = vmatprep.subr.bf16.mxu0 0
    %1381 = vmatpush2.bf16.xpose.msra.mxu0 0
    %1382 = vmatprep.subr.bf16.mxu0 0
    %1383 = vmatpush2.bf16.xpose.msra.mxu0 0
    %1384 = vmatprep.subr.bf16.mxu0 0
    %1385 = vmatpush2.bf16.xpose.msra.mxu0 0
    %1386 = vmatprep.subr.bf16.mxu0 0
    %1387 = vmatpush2.bf16.xpose.msra.mxu0 0
    %1388 = vmatprep.subr.bf16.mxu0 0
    %1389 = vmatpush2.bf16.xpose.msra.mxu0 0
    %1390 = vmatprep.subr.bf16.mxu0 0
    %1391 = vmatpush2.bf16.xpose.msra.mxu0 0
    %1392 = vmatprep.subr.bf16.mxu0 0
    %1393 = vmatpush2.bf16.xpose.msra.mxu0 0
    %1394 = vmatprep.mubr.bf16.mxu0 0
    %1395 = vmatmul.mubr.bf16.gmra.mxu0 %v1359
    %v1396 = vpop.f32.mrf.mxu0
    %v1397 = vadd.f32 0.0, %v1396
    %v1398 = vpop.f32.mrf.mxu0
    %v1399 = vpop.f32.mrf.mxu0
    %v1400 = vadd.f32 0.0, %v1399
    %v1401 = vpop.f32.mrf.mxu0
    %1402 = vdwg.mxu0
    %v1403 = vmul.f32 %v1397, 0.088388346
    %v1404 = vmul.f32 %v1400, 0.088388346
    %v1405 = vsel %vm1053, %v1403, -inf
    %1406 = vmax.xlane.f32.xlu0 %v1405
    %v1407 = vpop.xlane.xlu0 %1406
    %v1408 = vsel %vm1053, %v1404, -inf
    %1409 = vmax.xlane.f32.xlu0 %v1408
    %v1410 = vpop.xlane.xlu0 %1409
    %v1411 = vsub.f32 %v1403, %v1407
    %v1412 = vsub.f32 %v1404, %v1410
    %v1413 = vmul.f32 %v1411, 1.442695
    %v1414 = vpow.pop %v1413
    %v1415 = vmul.f32 %v1412, 1.442695
    %v1416 = vpow.pop %v1415
    %v1417 = vsel %vm1053, %v1414, 0.0
    %1418 = vadd.xlane.f32.xlu0 %v1417
    %v1419 = vpop.xlane.xlu0 %1418
    %v1420 = vsel %vm1053, %v1416, 0.0
    %1421 = vadd.xlane.f32.xlu0 %v1420
    %v1422 = vpop.xlane.xlu0 %1421
    %v1423 = vrcp.pop %v1419
    %v1424 = vrcp.pop %v1422
    %v1425 = vmul.f32 %v1414, %v1423
    %v1426 = vmul.f32 %v1416, %v1424
    %v1427 = vpack.c.bf16 %v1426, %v1425
    %v1429 = vsel %vm1053, %v1427, 0
    %1431 = vmatprep.subr.bf16.mxu0 0
    %1432 = vmatpush1.bf16.msra.mxu0 0
    %1433 = vmatprep.subr.bf16.mxu0 0
    %1434 = vmatpush1.bf16.msra.mxu0 0
    %1435 = vmatprep.subr.bf16.mxu0 0
    %1436 = vmatpush1.bf16.msra.mxu0 0
    %1437 = vmatprep.subr.bf16.mxu0 0
    %1438 = vmatpush1.bf16.msra.mxu0 0
    %1439 = vmatprep.subr.bf16.mxu0 0
    %1440 = vmatpush1.bf16.msra.mxu0 0
    %1441 = vmatprep.subr.bf16.mxu0 0
    %1442 = vmatpush1.bf16.msra.mxu0 0
    %1443 = vmatprep.subr.bf16.mxu0 0
    %1444 = vmatpush1.bf16.msra.mxu0 0
    %1445 = vmatprep.subr.bf16.mxu0 0
    %1446 = vmatpush1.bf16.msra.mxu0 %v1361
    %1447 = vmatprep.subr.bf16.mxu0 0
    %1448 = vmatpush2.bf16.msra.mxu0 0
    %1449 = vmatprep.subr.bf16.mxu0 0
    %1450 = vmatpush2.bf16.msra.mxu0 0
    %1451 = vmatprep.subr.bf16.mxu0 0
    %1452 = vmatpush2.bf16.msra.mxu0 0
    %1453 = vmatprep.subr.bf16.mxu0 0
    %1454 = vmatpush2.bf16.msra.mxu0 0
    %1455 = vmatprep.subr.bf16.mxu0 0
    %1456 = vmatpush2.bf16.msra.mxu0 0
    %1457 = vmatprep.subr.bf16.mxu0 0
    %1458 = vmatpush2.bf16.msra.mxu0 0
    %1459 = vmatprep.subr.bf16.mxu0 0
    %1460 = vmatpush2.bf16.msra.mxu0 0
    %1461 = vmatprep.subr.bf16.mxu0 0
    %1462 = vmatpush2.bf16.msra.mxu0 0
    %1463 = vmatprep.mubr.bf16.mxu0 0
    %1464 = vmatmul.mubr.bf16.gmra.mxu0 %v1429
    %v1465 = vpop.f32.mrf.mxu0
    %v1466 = vadd.f32 0.0, %v1465
    %v1467 = vpop.f32.mrf.mxu0
    %v1468 = vpop.f32.mrf.mxu0
    %v1469 = vadd.f32 0.0, %v1468
    %v1470 = vpop.f32.mrf.mxu0
    %1471 = vdwg.mxu0
    %v1472 = vadd.f32 %v114, %v1466
    %v1473 = vadd.f32 %v116, %v1469
    %1474 = vst [vmem:[#allocation13 + $0x28] sm:$0xff] %v1472
    %1475 = vst [vmem:[#allocation13 + $0x38] sm:$0xff] %v1473
    %v1476 = vld [vmem:[#allocation13] sm:$0xff]
    %v1477 = vld [vmem:[#allocation13 + $0x8] sm:$0xff]
    %v1478 = vld [vmem:[#allocation13 + $0x10] sm:$0xff]
    %v1479 = vld [vmem:[#allocation13 + $0x18] sm:$0xff]
    %v1480 = vld [vmem:[#allocation13 + $0x20] sm:$0xff]
    %v1481 = vld [vmem:[#allocation13 + $0x28] sm:$0xff]
    %v1482 = vld [vmem:[#allocation13 + $0x30] sm:$0xff]
    %v1483 = vld [vmem:[#allocation13 + $0x38] sm:$0xff]
    %v1484 = vadd.f32 %v1476, %v1477
    %1485 = vadd.xlane.f32.xlu0 %v1484
    %v1486 = vpop.xlane.xlu0 %1485
    %v1487 = vadd.f32 %v1478, %v1479
    %1488 = vadd.xlane.f32.xlu0 %v1487
    %v1489 = vpop.xlane.xlu0 %1488
    %v1490 = vadd.f32 %v1480, %v1481
    %1491 = vadd.xlane.f32.xlu0 %v1490
    %v1492 = vpop.xlane.xlu0 %1491
    %v1493 = vadd.f32 %v1482, %v1483
    %1494 = vadd.xlane.f32.xlu0 %v1493
    %v1495 = vpop.xlane.xlu0 %1494
    %v1496 = vmul.f32 %v1486, %v130
    %v1497 = vmul.f32 %v1489, %v130
    %v1498 = vmul.f32 %v1492, %v130
    %v1499 = vmul.f32 %v1495, %v130
    %v1500 = vsub.f32 %v1476, %v1496
    %v1501 = vsub.f32 %v1477, %v1496
    %v1502 = vsub.f32 %v1478, %v1497
    %v1503 = vsub.f32 %v1479, %v1497
    %v1504 = vsub.f32 %v1480, %v1498
    %v1505 = vsub.f32 %v1481, %v1498
    %v1506 = vsub.f32 %v1482, %v1499
    %v1507 = vsub.f32 %v1483, %v1499
    %v1508 = vmul.f32 %v1500, %v1500
    %v1509 = vmul.f32 %v1501, %v1501
    %v1510 = vmul.f32 %v1502, %v1502
    %v1511 = vmul.f32 %v1503, %v1503
    %v1512 = vmul.f32 %v1504, %v1504
    %v1513 = vmul.f32 %v1505, %v1505
    %v1514 = vmul.f32 %v1506, %v1506
    %v1515 = vmul.f32 %v1507, %v1507
    %v1516 = vadd.f32 %v1508, %v1509
    %1517 = vadd.xlane.f32.xlu0 %v1516
    %v1518 = vpop.xlane.xlu0 %1517
    %v1519 = vadd.f32 %v1510, %v1511
    %1520 = vadd.xlane.f32.xlu0 %v1519
    %v1521 = vpop.xlane.xlu0 %1520
    %v1522 = vadd.f32 %v1512, %v1513
    %1523 = vadd.xlane.f32.xlu0 %v1522
    %v1524 = vpop.xlane.xlu0 %1523
    %v1525 = vadd.f32 %v1514, %v1515
    %1526 = vadd.xlane.f32.xlu0 %v1525
    %v1527 = vpop.xlane.xlu0 %1526
    %v1528 = vmul.f32 %v1518, %v130
    %v1529 = vmul.f32 %v1521, %v130
    %v1530 = vmul.f32 %v1524, %v130
    %v1531 = vmul.f32 %v1527, %v130
    %v1532 = vadd.f32 %v1528, 1e-05
    %v1533 = vadd.f32 %v1529, 1e-05
    %v1534 = vadd.f32 %v1530, 1e-05
    %v1535 = vadd.f32 %v1531, 1e-05
    %v1536 = vrsqrt.pop %v1532
    %v1537 = vrsqrt.pop %v1533
    %v1538 = vrsqrt.pop %v1534
    %v1539 = vrsqrt.pop %v1535
    %v1540 = vmul.f32 %v1500, %v1536
    %v1541 = vmul.f32 %v1501, %v1536
    %v1542 = vmul.f32 %v1502, %v1537
    %v1543 = vmul.f32 %v1503, %v1537
    %v1544 = vmul.f32 %v1504, %v1538
    %v1545 = vmul.f32 %v1505, %v1538
    %v1546 = vmul.f32 %v1506, %v1539
    %v1547 = vmul.f32 %v1507, %v1539
    %v1548 = vlaneseq
    %v1549 = vshrl.u32 %v1548, 7
    %v1550 = vsub.s32 2, %v1549
    %v1551 = vrot.slane %v117, %v1550
    %v1552 = vlaneseq
    %v1553 = vshrl.u32 %v1552, 7
    %v1554 = vsub.s32 6, %v1553
    %v1555 = vrot.slane %v117, %v1554
    %v1558 = vlaneseq
    %v1559 = vshrl.u32 %v1558, 7
    %v1560 = vsub.s32 2, %v1559
    %v1561 = vrot.slane %v1551, %v1560
    %v1562 = vlaneseq
    %v1563 = vshrl.u32 %v1562, 7
    %v1564 = vsub.s32 2, %v1563
    %v1565 = vrot.slane %v1555, %v1564
    %v1566 = vmul.f32 %v1540, %v1561
    %v1567 = vmul.f32 %v1541, %v1565
    %v1568 = vmul.f32 %v1542, %v1561
    %v1569 = vmul.f32 %v1543, %v1565
    %v1570 = vmul.f32 %v1544, %v1561
    %v1571 = vmul.f32 %v1545, %v1565
    %v1572 = vmul.f32 %v1546, %v1561
    %v1573 = vmul.f32 %v1547, %v1565
    %v1574 = vlaneseq
    %v1575 = vshrl.u32 %v1574, 7
    %v1576 = vsub.s32 3, %v1575
    %v1577 = vrot.slane %v117, %v1576
    %v1578 = vlaneseq
    %v1579 = vshrl.u32 %v1578, 7
    %v1580 = vsub.s32 7, %v1579
    %v1581 = vrot.slane %v117, %v1580
    %v1584 = vlaneseq
    %v1585 = vshrl.u32 %v1584, 7
    %v1586 = vsub.s32 3, %v1585
    %v1587 = vrot.slane %v1577, %v1586
    %v1588 = vlaneseq
    %v1589 = vshrl.u32 %v1588, 7
    %v1590 = vsub.s32 3, %v1589
    %v1591 = vrot.slane %v1581, %v1590
    %v1592 = vadd.f32 %v1566, %v1587
    %v1593 = vadd.f32 %v1567, %v1591
    %v1594 = vadd.f32 %v1568, %v1587
    %v1595 = vadd.f32 %v1569, %v1591
    %v1596 = vadd.f32 %v1570, %v1587
    %v1597 = vadd.f32 %v1571, %v1591
    %v1598 = vadd.f32 %v1572, %v1587
    %v1599 = vadd.f32 %v1573, %v1591
    %v1600 = vpack.c.bf16 %v1594, %v1592
    %v1601 = vpack.c.bf16 %v1595, %v1593
    %v1602 = vpack.c.bf16 %v1598, %v1596
    %v1603 = vpack.c.bf16 %v1599, %v1597
    %v1604 = vld [vmem:[#allocation10] sm:$0xff]
    %v1605 = vld [vmem:[#allocation10 + $0x8] sm:$0xff]
    %v1606 = vld [vmem:[#allocation10 + $0x10] sm:$0xff]
    %v1607 = vld [vmem:[#allocation10 + $0x18] sm:$0xff]
    %v1608 = vld [vmem:[#allocation10 + $0x20] sm:$0xff]
    %v1609 = vld [vmem:[#allocation10 + $0x28] sm:$0xff]
    %v1610 = vld [vmem:[#allocation10 + $0x30] sm:$0xff]
    %v1611 = vld [vmem:[#allocation10 + $0x38] sm:$0xff]
    %v1612 = vld [vmem:[#allocation10 + $0x40] sm:$0xff]
    %v1613 = vld [vmem:[#allocation10 + $0x48] sm:$0xff]
    %v1614 = vld [vmem:[#allocation10 + $0x50] sm:$0xff]
    %v1615 = vld [vmem:[#allocation10 + $0x58] sm:$0xff]
    %v1616 = vld [vmem:[#allocation10 + $0x60] sm:$0xff]
    %v1617 = vld [vmem:[#allocation10 + $0x68] sm:$0xff]
    %v1618 = vld [vmem:[#allocation10 + $0x70] sm:$0xff]
    %v1619 = vld [vmem:[#allocation10 + $0x78] sm:$0xff]
    %v1620 = vld [vmem:[#allocation10 + $0x80] sm:$0xff]
    %v1621 = vld [vmem:[#allocation10 + $0x88] sm:$0xff]
    %v1622 = vld [vmem:[#allocation10 + $0x90] sm:$0xff]
    %v1623 = vld [vmem:[#allocation10 + $0x98] sm:$0xff]
    %v1624 = vld [vmem:[#allocation10 + $0xa0] sm:$0xff]
    %v1625 = vld [vmem:[#allocation10 + $0xa8] sm:$0xff]
    %v1626 = vld [vmem:[#allocation10 + $0xb0] sm:$0xff]
    %v1627 = vld [vmem:[#allocation10 + $0xb8] sm:$0xff]
    %v1628 = vld [vmem:[#allocation10 + $0xc0] sm:$0xff]
    %v1629 = vld [vmem:[#allocation10 + $0xc8] sm:$0xff]
    %v1630 = vld [vmem:[#allocation10 + $0xd0] sm:$0xff]
    %v1631 = vld [vmem:[#allocation10 + $0xd8] sm:$0xff]
    %v1632 = vld [vmem:[#allocation10 + $0xe0] sm:$0xff]
    %v1633 = vld [vmem:[#allocation10 + $0xe8] sm:$0xff]
    %v1634 = vld [vmem:[#allocation10 + $0xf0] sm:$0xff]
    %v1635 = vld [vmem:[#allocation10 + $0xf8] sm:$0xff]
    %v1636 = vld [vmem:[#allocation10 + $0x100] sm:$0xff]
    %v1637 = vld [vmem:[#allocation10 + $0x108] sm:$0xff]
    %v1638 = vld [vmem:[#allocation10 + $0x110] sm:$0xff]
    %v1639 = vld [vmem:[#allocation10 + $0x118] sm:$0xff]
    %v1640 = vld [vmem:[#allocation10 + $0x120] sm:$0xff]
    %v1641 = vld [vmem:[#allocation10 + $0x128] sm:$0xff]
    %v1642 = vld [vmem:[#allocation10 + $0x130] sm:$0xff]
    %v1643 = vld [vmem:[#allocation10 + $0x138] sm:$0xff]
    %v1644 = vld [vmem:[#allocation10 + $0x140] sm:$0xff]
    %v1645 = vld [vmem:[#allocation10 + $0x148] sm:$0xff]
    %v1646 = vld [vmem:[#allocation10 + $0x150] sm:$0xff]
    %v1647 = vld [vmem:[#allocation10 + $0x158] sm:$0xff]
    %v1648 = vld [vmem:[#allocation10 + $0x160] sm:$0xff]
    %v1649 = vld [vmem:[#allocation10 + $0x168] sm:$0xff]
    %v1650 = vld [vmem:[#allocation10 + $0x170] sm:$0xff]
    %v1651 = vld [vmem:[#allocation10 + $0x178] sm:$0xff]
    %v1652 = vld [vmem:[#allocation10 + $0x180] sm:$0xff]
    %v1653 = vld [vmem:[#allocation10 + $0x188] sm:$0xff]
    %v1654 = vld [vmem:[#allocation10 + $0x190] sm:$0xff]
    %v1655 = vld [vmem:[#allocation10 + $0x198] sm:$0xff]
    %v1656 = vld [vmem:[#allocation10 + $0x1a0] sm:$0xff]
    %v1657 = vld [vmem:[#allocation10 + $0x1a8] sm:$0xff]
    %v1658 = vld [vmem:[#allocation10 + $0x1b0] sm:$0xff]
    %v1659 = vld [vmem:[#allocation10 + $0x1b8] sm:$0xff]
    %v1660 = vld [vmem:[#allocation10 + $0x1c0] sm:$0xff]
    %v1661 = vld [vmem:[#allocation10 + $0x1c8] sm:$0xff]
    %v1662 = vld [vmem:[#allocation10 + $0x1d0] sm:$0xff]
    %v1663 = vld [vmem:[#allocation10 + $0x1d8] sm:$0xff]
    %v1664 = vld [vmem:[#allocation10 + $0x1e0] sm:$0xff]
    %v1665 = vld [vmem:[#allocation10 + $0x1e8] sm:$0xff]
    %v1666 = vld [vmem:[#allocation10 + $0x1f0] sm:$0xff]
    %v1667 = vld [vmem:[#allocation10 + $0x1f8] sm:$0xff]
    %v1668 = vld [vmem:[#allocation10 + $0x200] sm:$0xff]
    %v1669 = vld [vmem:[#allocation10 + $0x208] sm:$0xff]
    %v1670 = vld [vmem:[#allocation10 + $0x210] sm:$0xff]
    %v1671 = vld [vmem:[#allocation10 + $0x218] sm:$0xff]
    %v1672 = vld [vmem:[#allocation10 + $0x220] sm:$0xff]
    %v1673 = vld [vmem:[#allocation10 + $0x228] sm:$0xff]
    %v1674 = vld [vmem:[#allocation10 + $0x230] sm:$0xff]
    %v1675 = vld [vmem:[#allocation10 + $0x238] sm:$0xff]
    %v1676 = vld [vmem:[#allocation10 + $0x240] sm:$0xff]
    %v1677 = vld [vmem:[#allocation10 + $0x248] sm:$0xff]
    %v1678 = vld [vmem:[#allocation10 + $0x250] sm:$0xff]
    %v1679 = vld [vmem:[#allocation10 + $0x258] sm:$0xff]
    %v1680 = vld [vmem:[#allocation10 + $0x260] sm:$0xff]
    %v1681 = vld [vmem:[#allocation10 + $0x268] sm:$0xff]
    %v1682 = vld [vmem:[#allocation10 + $0x270] sm:$0xff]
    %v1683 = vld [vmem:[#allocation10 + $0x278] sm:$0xff]
    %v1684 = vld [vmem:[#allocation10 + $0x280] sm:$0xff]
    %v1685 = vld [vmem:[#allocation10 + $0x288] sm:$0xff]
    %v1686 = vld [vmem:[#allocation10 + $0x290] sm:$0xff]
    %v1687 = vld [vmem:[#allocation10 + $0x298] sm:$0xff]
    %v1688 = vld [vmem:[#allocation10 + $0x2a0] sm:$0xff]
    %v1689 = vld [vmem:[#allocation10 + $0x2a8] sm:$0xff]
    %v1690 = vld [vmem:[#allocation10 + $0x2b0] sm:$0xff]
    %v1691 = vld [vmem:[#allocation10 + $0x2b8] sm:$0xff]
    %v1692 = vld [vmem:[#allocation10 + $0x2c0] sm:$0xff]
    %v1693 = vld [vmem:[#allocation10 + $0x2c8] sm:$0xff]
    %v1694 = vld [vmem:[#allocation10 + $0x2d0] sm:$0xff]
    %v1695 = vld [vmem:[#allocation10 + $0x2d8] sm:$0xff]
    %v1696 = vld [vmem:[#allocation10 + $0x2e0] sm:$0xff]
    %v1697 = vld [vmem:[#allocation10 + $0x2e8] sm:$0xff]
    %v1698 = vld [vmem:[#allocation10 + $0x2f0] sm:$0xff]
    %v1699 = vld [vmem:[#allocation10 + $0x2f8] sm:$0xff]
    %v1700 = vld [vmem:[#allocation10 + $0x300] sm:$0xff]
    %v1701 = vld [vmem:[#allocation10 + $0x308] sm:$0xff]
    %v1702 = vld [vmem:[#allocation10 + $0x310] sm:$0xff]
    %v1703 = vld [vmem:[#allocation10 + $0x318] sm:$0xff]
    %v1704 = vld [vmem:[#allocation10 + $0x320] sm:$0xff]
    %v1705 = vld [vmem:[#allocation10 + $0x328] sm:$0xff]
    %v1706 = vld [vmem:[#allocation10 + $0x330] sm:$0xff]
    %v1707 = vld [vmem:[#allocation10 + $0x338] sm:$0xff]
    %v1708 = vld [vmem:[#allocation10 + $0x340] sm:$0xff]
    %v1709 = vld [vmem:[#allocation10 + $0x348] sm:$0xff]
    %v1710 = vld [vmem:[#allocation10 + $0x350] sm:$0xff]
    %v1711 = vld [vmem:[#allocation10 + $0x358] sm:$0xff]
    %v1712 = vld [vmem:[#allocation10 + $0x360] sm:$0xff]
    %v1713 = vld [vmem:[#allocation10 + $0x368] sm:$0xff]
    %v1714 = vld [vmem:[#allocation10 + $0x370] sm:$0xff]
    %v1715 = vld [vmem:[#allocation10 + $0x378] sm:$0xff]
    %v1716 = vld [vmem:[#allocation10 + $0x380] sm:$0xff]
    %v1717 = vld [vmem:[#allocation10 + $0x388] sm:$0xff]
    %v1718 = vld [vmem:[#allocation10 + $0x390] sm:$0xff]
    %v1719 = vld [vmem:[#allocation10 + $0x398] sm:$0xff]
    %v1720 = vld [vmem:[#allocation10 + $0x3a0] sm:$0xff]
    %v1721 = vld [vmem:[#allocation10 + $0x3a8] sm:$0xff]
    %v1722 = vld [vmem:[#allocation10 + $0x3b0] sm:$0xff]
    %v1723 = vld [vmem:[#allocation10 + $0x3b8] sm:$0xff]
    %v1724 = vld [vmem:[#allocation10 + $0x3c0] sm:$0xff]
    %v1725 = vld [vmem:[#allocation10 + $0x3c8] sm:$0xff]
    %v1726 = vld [vmem:[#allocation10 + $0x3d0] sm:$0xff]
    %v1727 = vld [vmem:[#allocation10 + $0x3d8] sm:$0xff]
    %v1728 = vld [vmem:[#allocation10 + $0x3e0] sm:$0xff]
    %v1729 = vld [vmem:[#allocation10 + $0x3e8] sm:$0xff]
    %v1730 = vld [vmem:[#allocation10 + $0x3f0] sm:$0xff]
    %v1731 = vld [vmem:[#allocation10 + $0x3f8] sm:$0xff]
    %v1732 = vld [vmem:[%s5] sm:$0xff]
    %v1734 = vlaneseq
    %v1735 = vshrl.u32 %v1734, 7
    %v1736 = vsub.s32 0, %v1735
    %v1737 = vrot.slane %v1732, %v1736
    %v1738 = vlaneseq
    %v1739 = vshrl.u32 %v1738, 7
    %v1740 = vsub.s32 1, %v1739
    %v1741 = vrot.slane %v1732, %v1740
    %v1742 = vlaneseq
    %v1743 = vshrl.u32 %v1742, 7
    %v1744 = vsub.s32 2, %v1743
    %v1745 = vrot.slane %v1732, %v1744
    %v1746 = vlaneseq
    %v1747 = vshrl.u32 %v1746, 7
    %v1748 = vsub.s32 3, %v1747
    %v1749 = vrot.slane %v1732, %v1748
    %v1750 = vlaneseq
    %v1751 = vshrl.u32 %v1750, 7
    %v1752 = vsub.s32 4, %v1751
    %v1753 = vrot.slane %v1732, %v1752
    %v1754 = vlaneseq
    %v1755 = vshrl.u32 %v1754, 7
    %v1756 = vsub.s32 5, %v1755
    %v1757 = vrot.slane %v1732, %v1756
    %v1758 = vlaneseq
    %v1759 = vshrl.u32 %v1758, 7
    %v1760 = vsub.s32 6, %v1759
    %v1761 = vrot.slane %v1732, %v1760
    %v1762 = vlaneseq
    %v1763 = vshrl.u32 %v1762, 7
    %v1764 = vsub.s32 7, %v1763
    %v1765 = vrot.slane %v1732, %v1764
    %v1902 = vunpack.c.l.b16 %v1604
    %v1903 = vunpack.c.h.b16 %v1604
    %v1904 = vunpack.c.l.b16 %v1605
    %v1905 = vunpack.c.h.b16 %v1605
    %v1906 = vunpack.c.l.b16 %v1606
    %v1907 = vunpack.c.h.b16 %v1606
    %v1908 = vunpack.c.l.b16 %v1607
    %v1909 = vunpack.c.h.b16 %v1607
    %v1910 = vunpack.c.l.b16 %v1608
    %v1911 = vunpack.c.h.b16 %v1608
    %v1912 = vunpack.c.l.b16 %v1609
    %v1913 = vunpack.c.h.b16 %v1609
    %v1914 = vunpack.c.l.b16 %v1610
    %v1915 = vunpack.c.h.b16 %v1610
    %v1916 = vunpack.c.l.b16 %v1611
    %v1917 = vunpack.c.h.b16 %v1611
    %v1918 = vunpack.c.l.b16 %v1612
    %v1919 = vunpack.c.h.b16 %v1612
    %v1920 = vunpack.c.l.b16 %v1613
    %v1921 = vunpack.c.h.b16 %v1613
    %v1922 = vunpack.c.l.b16 %v1614
    %v1923 = vunpack.c.h.b16 %v1614
    %v1924 = vunpack.c.l.b16 %v1615
    %v1925 = vunpack.c.h.b16 %v1615
    %v1926 = vunpack.c.l.b16 %v1616
    %v1927 = vunpack.c.h.b16 %v1616
    %v1928 = vunpack.c.l.b16 %v1617
    %v1929 = vunpack.c.h.b16 %v1617
    %v1930 = vunpack.c.l.b16 %v1618
    %v1931 = vunpack.c.h.b16 %v1618
    %v1932 = vunpack.c.l.b16 %v1619
    %v1933 = vunpack.c.h.b16 %v1619
    %v1934 = vunpack.c.l.b16 %v1620
    %v1935 = vunpack.c.h.b16 %v1620
    %v1936 = vunpack.c.l.b16 %v1621
    %v1937 = vunpack.c.h.b16 %v1621
    %v1938 = vunpack.c.l.b16 %v1622
    %v1939 = vunpack.c.h.b16 %v1622
    %v1940 = vunpack.c.l.b16 %v1623
    %v1941 = vunpack.c.h.b16 %v1623
    %v1942 = vunpack.c.l.b16 %v1624
    %v1943 = vunpack.c.h.b16 %v1624
    %v1944 = vunpack.c.l.b16 %v1625
    %v1945 = vunpack.c.h.b16 %v1625
    %v1946 = vunpack.c.l.b16 %v1626
    %v1947 = vunpack.c.h.b16 %v1626
    %v1948 = vunpack.c.l.b16 %v1627
    %v1949 = vunpack.c.h.b16 %v1627
    %v1950 = vunpack.c.l.b16 %v1628
    %v1951 = vunpack.c.h.b16 %v1628
    %v1952 = vunpack.c.l.b16 %v1629
    %v1953 = vunpack.c.h.b16 %v1629
    %v1954 = vunpack.c.l.b16 %v1630
    %v1955 = vunpack.c.h.b16 %v1630
    %v1956 = vunpack.c.l.b16 %v1631
    %v1957 = vunpack.c.h.b16 %v1631
    %v1958 = vunpack.c.l.b16 %v1632
    %v1959 = vunpack.c.h.b16 %v1632
    %v1960 = vunpack.c.l.b16 %v1633
    %v1961 = vunpack.c.h.b16 %v1633
    %v1962 = vunpack.c.l.b16 %v1634
    %v1963 = vunpack.c.h.b16 %v1634
    %v1964 = vunpack.c.l.b16 %v1635
    %v1965 = vunpack.c.h.b16 %v1635
    %v1966 = vunpack.c.l.b16 %v1636
    %v1967 = vunpack.c.h.b16 %v1636
    %v1968 = vunpack.c.l.b16 %v1637
    %v1969 = vunpack.c.h.b16 %v1637
    %v1970 = vunpack.c.l.b16 %v1638
    %v1971 = vunpack.c.h.b16 %v1638
    %v1972 = vunpack.c.l.b16 %v1639
    %v1973 = vunpack.c.h.b16 %v1639
    %v1974 = vunpack.c.l.b16 %v1640
    %v1975 = vunpack.c.h.b16 %v1640
    %v1976 = vunpack.c.l.b16 %v1641
    %v1977 = vunpack.c.h.b16 %v1641
    %v1978 = vunpack.c.l.b16 %v1642
    %v1979 = vunpack.c.h.b16 %v1642
    %v1980 = vunpack.c.l.b16 %v1643
    %v1981 = vunpack.c.h.b16 %v1643
    %v1982 = vunpack.c.l.b16 %v1644
    %v1983 = vunpack.c.h.b16 %v1644
    %v1984 = vunpack.c.l.b16 %v1645
    %v1985 = vunpack.c.h.b16 %v1645
    %v1986 = vunpack.c.l.b16 %v1646
    %v1987 = vunpack.c.h.b16 %v1646
    %v1988 = vunpack.c.l.b16 %v1647
    %v1989 = vunpack.c.h.b16 %v1647
    %v1990 = vunpack.c.l.b16 %v1648
    %v1991 = vunpack.c.h.b16 %v1648
    %v1992 = vunpack.c.l.b16 %v1649
    %v1993 = vunpack.c.h.b16 %v1649
    %v1994 = vunpack.c.l.b16 %v1650
    %v1995 = vunpack.c.h.b16 %v1650
    %v1996 = vunpack.c.l.b16 %v1651
    %v1997 = vunpack.c.h.b16 %v1651
    %v1998 = vunpack.c.l.b16 %v1652
    %v1999 = vunpack.c.h.b16 %v1652
    %v2000 = vunpack.c.l.b16 %v1653
    %v2001 = vunpack.c.h.b16 %v1653
    %v2002 = vunpack.c.l.b16 %v1654
    %v2003 = vunpack.c.h.b16 %v1654
    %v2004 = vunpack.c.l.b16 %v1655
    %v2005 = vunpack.c.h.b16 %v1655
    %v2006 = vunpack.c.l.b16 %v1656
    %v2007 = vunpack.c.h.b16 %v1656
    %v2008 = vunpack.c.l.b16 %v1657
    %v2009 = vunpack.c.h.b16 %v1657
    %v2010 = vunpack.c.l.b16 %v1658
    %v2011 = vunpack.c.h.b16 %v1658
    %v2012 = vunpack.c.l.b16 %v1659
    %v2013 = vunpack.c.h.b16 %v1659
    %v2014 = vunpack.c.l.b16 %v1660
    %v2015 = vunpack.c.h.b16 %v1660
    %v2016 = vunpack.c.l.b16 %v1661
    %v2017 = vunpack.c.h.b16 %v1661
    %v2018 = vunpack.c.l.b16 %v1662
    %v2019 = vunpack.c.h.b16 %v1662
    %v2020 = vunpack.c.l.b16 %v1663
    %v2021 = vunpack.c.h.b16 %v1663
    %v2022 = vunpack.c.l.b16 %v1664
    %v2023 = vunpack.c.h.b16 %v1664
    %v2024 = vunpack.c.l.b16 %v1665
    %v2025 = vunpack.c.h.b16 %v1665
    %v2026 = vunpack.c.l.b16 %v1666
    %v2027 = vunpack.c.h.b16 %v1666
    %v2028 = vunpack.c.l.b16 %v1667
    %v2029 = vunpack.c.h.b16 %v1667
    %v2030 = vunpack.c.l.b16 %v1668
    %v2031 = vunpack.c.h.b16 %v1668
    %v2032 = vunpack.c.l.b16 %v1669
    %v2033 = vunpack.c.h.b16 %v1669
    %v2034 = vunpack.c.l.b16 %v1670
    %v2035 = vunpack.c.h.b16 %v1670
    %v2036 = vunpack.c.l.b16 %v1671
    %v2037 = vunpack.c.h.b16 %v1671
    %v2038 = vunpack.c.l.b16 %v1672
    %v2039 = vunpack.c.h.b16 %v1672
    %v2040 = vunpack.c.l.b16 %v1673
    %v2041 = vunpack.c.h.b16 %v1673
    %v2042 = vunpack.c.l.b16 %v1674
    %v2043 = vunpack.c.h.b16 %v1674
    %v2044 = vunpack.c.l.b16 %v1675
    %v2045 = vunpack.c.h.b16 %v1675
    %v2046 = vunpack.c.l.b16 %v1676
    %v2047 = vunpack.c.h.b16 %v1676
    %v2048 = vunpack.c.l.b16 %v1677
    %v2049 = vunpack.c.h.b16 %v1677
    %v2050 = vunpack.c.l.b16 %v1678
    %v2051 = vunpack.c.h.b16 %v1678
    %v2052 = vunpack.c.l.b16 %v1679
    %v2053 = vunpack.c.h.b16 %v1679
    %v2054 = vunpack.c.l.b16 %v1680
    %v2055 = vunpack.c.h.b16 %v1680
    %v2056 = vunpack.c.l.b16 %v1681
    %v2057 = vunpack.c.h.b16 %v1681
    %v2058 = vunpack.c.l.b16 %v1682
    %v2059 = vunpack.c.h.b16 %v1682
    %v2060 = vunpack.c.l.b16 %v1683
    %v2061 = vunpack.c.h.b16 %v1683
    %v2062 = vunpack.c.l.b16 %v1684
    %v2063 = vunpack.c.h.b16 %v1684
    %v2064 = vunpack.c.l.b16 %v1685
    %v2065 = vunpack.c.h.b16 %v1685
    %v2066 = vunpack.c.l.b16 %v1686
    %v2067 = vunpack.c.h.b16 %v1686
    %v2068 = vunpack.c.l.b16 %v1687
    %v2069 = vunpack.c.h.b16 %v1687
    %v2070 = vunpack.c.l.b16 %v1688
    %v2071 = vunpack.c.h.b16 %v1688
    %v2072 = vunpack.c.l.b16 %v1689
    %v2073 = vunpack.c.h.b16 %v1689
    %v2074 = vunpack.c.l.b16 %v1690
    %v2075 = vunpack.c.h.b16 %v1690
    %v2076 = vunpack.c.l.b16 %v1691
    %v2077 = vunpack.c.h.b16 %v1691
    %v2078 = vunpack.c.l.b16 %v1692
    %v2079 = vunpack.c.h.b16 %v1692
    %v2080 = vunpack.c.l.b16 %v1693
    %v2081 = vunpack.c.h.b16 %v1693
    %v2082 = vunpack.c.l.b16 %v1694
    %v2083 = vunpack.c.h.b16 %v1694
    %v2084 = vunpack.c.l.b16 %v1695
    %v2085 = vunpack.c.h.b16 %v1695
    %v2086 = vunpack.c.l.b16 %v1696
    %v2087 = vunpack.c.h.b16 %v1696
    %v2088 = vunpack.c.l.b16 %v1697
    %v2089 = vunpack.c.h.b16 %v1697
    %v2090 = vunpack.c.l.b16 %v1698
    %v2091 = vunpack.c.h.b16 %v1698
    %v2092 = vunpack.c.l.b16 %v1699
    %v2093 = vunpack.c.h.b16 %v1699
    %v2094 = vunpack.c.l.b16 %v1700
    %v2095 = vunpack.c.h.b16 %v1700
    %v2096 = vunpack.c.l.b16 %v1701
    %v2097 = vunpack.c.h.b16 %v1701
    %v2098 = vunpack.c.l.b16 %v1702
    %v2099 = vunpack.c.h.b16 %v1702
    %v2100 = vunpack.c.l.b16 %v1703
    %v2101 = vunpack.c.h.b16 %v1703
    %v2102 = vunpack.c.l.b16 %v1704
    %v2103 = vunpack.c.h.b16 %v1704
    %v2104 = vunpack.c.l.b16 %v1705
    %v2105 = vunpack.c.h.b16 %v1705
    %v2106 = vunpack.c.l.b16 %v1706
    %v2107 = vunpack.c.h.b16 %v1706
    %v2108 = vunpack.c.l.b16 %v1707
    %v2109 = vunpack.c.h.b16 %v1707
    %v2110 = vunpack.c.l.b16 %v1708
    %v2111 = vunpack.c.h.b16 %v1708
    %v2112 = vunpack.c.l.b16 %v1709
    %v2113 = vunpack.c.h.b16 %v1709
    %v2114 = vunpack.c.l.b16 %v1710
    %v2115 = vunpack.c.h.b16 %v1710
    %v2116 = vunpack.c.l.b16 %v1711
    %v2117 = vunpack.c.h.b16 %v1711
    %v2118 = vunpack.c.l.b16 %v1712
    %v2119 = vunpack.c.h.b16 %v1712
    %v2120 = vunpack.c.l.b16 %v1713
    %v2121 = vunpack.c.h.b16 %v1713
    %v2122 = vunpack.c.l.b16 %v1714
    %v2123 = vunpack.c.h.b16 %v1714
    %v2124 = vunpack.c.l.b16 %v1715
    %v2125 = vunpack.c.h.b16 %v1715
    %v2126 = vunpack.c.l.b16 %v1716
    %v2127 = vunpack.c.h.b16 %v1716
    %v2128 = vunpack.c.l.b16 %v1717
    %v2129 = vunpack.c.h.b16 %v1717
    %v2130 = vunpack.c.l.b16 %v1718
    %v2131 = vunpack.c.h.b16 %v1718
    %v2132 = vunpack.c.l.b16 %v1719
    %v2133 = vunpack.c.h.b16 %v1719
    %v2134 = vunpack.c.l.b16 %v1720
    %v2135 = vunpack.c.h.b16 %v1720
    %v2136 = vunpack.c.l.b16 %v1721
    %v2137 = vunpack.c.h.b16 %v1721
    %v2138 = vunpack.c.l.b16 %v1722
    %v2139 = vunpack.c.h.b16 %v1722
    %v2140 = vunpack.c.l.b16 %v1723
    %v2141 = vunpack.c.h.b16 %v1723
    %v2142 = vunpack.c.l.b16 %v1724
    %v2143 = vunpack.c.h.b16 %v1724
    %v2144 = vunpack.c.l.b16 %v1725
    %v2145 = vunpack.c.h.b16 %v1725
    %v2146 = vunpack.c.l.b16 %v1726
    %v2147 = vunpack.c.h.b16 %v1726
    %v2148 = vunpack.c.l.b16 %v1727
    %v2149 = vunpack.c.h.b16 %v1727
    %v2150 = vunpack.c.l.b16 %v1728
    %v2151 = vunpack.c.h.b16 %v1728
    %v2152 = vunpack.c.l.b16 %v1729
    %v2153 = vunpack.c.h.b16 %v1729
    %v2154 = vunpack.c.l.b16 %v1730
    %v2155 = vunpack.c.h.b16 %v1730
    %v2156 = vunpack.c.l.b16 %v1731
    %v2157 = vunpack.c.h.b16 %v1731
    %v2158 = vpack.c.b16 %v1910, %v1902
    %v2159 = vpack.c.b16 %v1911, %v1903
    %v2160 = vpack.c.b16 %v1912, %v1904
    %v2161 = vpack.c.b16 %v1913, %v1905
    %v2162 = vpack.c.b16 %v1914, %v1906
    %v2163 = vpack.c.b16 %v1915, %v1907
    %v2164 = vpack.c.b16 %v1916, %v1908
    %v2165 = vpack.c.b16 %v1917, %v1909
    %v2166 = vpack.c.b16 %v1926, %v1918
    %v2167 = vpack.c.b16 %v1927, %v1919
    %v2168 = vpack.c.b16 %v1928, %v1920
    %v2169 = vpack.c.b16 %v1929, %v1921
    %v2170 = vpack.c.b16 %v1930, %v1922
    %v2171 = vpack.c.b16 %v1931, %v1923
    %v2172 = vpack.c.b16 %v1932, %v1924
    %v2173 = vpack.c.b16 %v1933, %v1925
    %v2174 = vpack.c.b16 %v1942, %v1934
    %v2175 = vpack.c.b16 %v1943, %v1935
    %v2176 = vpack.c.b16 %v1944, %v1936
    %v2177 = vpack.c.b16 %v1945, %v1937
    %v2178 = vpack.c.b16 %v1946, %v1938
    %v2179 = vpack.c.b16 %v1947, %v1939
    %v2180 = vpack.c.b16 %v1948, %v1940
    %v2181 = vpack.c.b16 %v1949, %v1941
    %v2182 = vpack.c.b16 %v1958, %v1950
    %v2183 = vpack.c.b16 %v1959, %v1951
    %v2184 = vpack.c.b16 %v1960, %v1952
    %v2185 = vpack.c.b16 %v1961, %v1953
    %v2186 = vpack.c.b16 %v1962, %v1954
    %v2187 = vpack.c.b16 %v1963, %v1955
    %v2188 = vpack.c.b16 %v1964, %v1956
    %v2189 = vpack.c.b16 %v1965, %v1957
    %v2190 = vpack.c.b16 %v1974, %v1966
    %v2191 = vpack.c.b16 %v1975, %v1967
    %v2192 = vpack.c.b16 %v1976, %v1968
    %v2193 = vpack.c.b16 %v1977, %v1969
    %v2194 = vpack.c.b16 %v1978, %v1970
    %v2195 = vpack.c.b16 %v1979, %v1971
    %v2196 = vpack.c.b16 %v1980, %v1972
    %v2197 = vpack.c.b16 %v1981, %v1973
    %v2198 = vpack.c.b16 %v1990, %v1982
    %v2199 = vpack.c.b16 %v1991, %v1983
    %v2200 = vpack.c.b16 %v1992, %v1984
    %v2201 = vpack.c.b16 %v1993, %v1985
    %v2202 = vpack.c.b16 %v1994, %v1986
    %v2203 = vpack.c.b16 %v1995, %v1987
    %v2204 = vpack.c.b16 %v1996, %v1988
    %v2205 = vpack.c.b16 %v1997, %v1989
    %v2206 = vpack.c.b16 %v2006, %v1998
    %v2207 = vpack.c.b16 %v2007, %v1999
    %v2208 = vpack.c.b16 %v2008, %v2000
    %v2209 = vpack.c.b16 %v2009, %v2001
    %v2210 = vpack.c.b16 %v2010, %v2002
    %v2211 = vpack.c.b16 %v2011, %v2003
    %v2212 = vpack.c.b16 %v2012, %v2004
    %v2213 = vpack.c.b16 %v2013, %v2005
    %v2214 = vpack.c.b16 %v2022, %v2014
    %v2215 = vpack.c.b16 %v2023, %v2015
    %v2216 = vpack.c.b16 %v2024, %v2016
    %v2217 = vpack.c.b16 %v2025, %v2017
    %v2218 = vpack.c.b16 %v2026, %v2018
    %v2219 = vpack.c.b16 %v2027, %v2019
    %v2220 = vpack.c.b16 %v2028, %v2020
    %v2221 = vpack.c.b16 %v2029, %v2021
    %v2222 = vpack.c.b16 %v2038, %v2030
    %v2223 = vpack.c.b16 %v2039, %v2031
    %v2224 = vpack.c.b16 %v2040, %v2032
    %v2225 = vpack.c.b16 %v2041, %v2033
    %v2226 = vpack.c.b16 %v2042, %v2034
    %v2227 = vpack.c.b16 %v2043, %v2035
    %v2228 = vpack.c.b16 %v2044, %v2036
    %v2229 = vpack.c.b16 %v2045, %v2037
    %v2230 = vpack.c.b16 %v2054, %v2046
    %v2231 = vpack.c.b16 %v2055, %v2047
    %v2232 = vpack.c.b16 %v2056, %v2048
    %v2233 = vpack.c.b16 %v2057, %v2049
    %v2234 = vpack.c.b16 %v2058, %v2050
    %v2235 = vpack.c.b16 %v2059, %v2051
    %v2236 = vpack.c.b16 %v2060, %v2052
    %v2237 = vpack.c.b16 %v2061, %v2053
    %v2238 = vpack.c.b16 %v2070, %v2062
    %v2239 = vpack.c.b16 %v2071, %v2063
    %v2240 = vpack.c.b16 %v2072, %v2064
    %v2241 = vpack.c.b16 %v2073, %v2065
    %v2242 = vpack.c.b16 %v2074, %v2066
    %v2243 = vpack.c.b16 %v2075, %v2067
    %v2244 = vpack.c.b16 %v2076, %v2068
    %v2245 = vpack.c.b16 %v2077, %v2069
    %v2246 = vpack.c.b16 %v2086, %v2078
    %v2247 = vpack.c.b16 %v2087, %v2079
    %v2248 = vpack.c.b16 %v2088, %v2080
    %v2249 = vpack.c.b16 %v2089, %v2081
    %v2250 = vpack.c.b16 %v2090, %v2082
    %v2251 = vpack.c.b16 %v2091, %v2083
    %v2252 = vpack.c.b16 %v2092, %v2084
    %v2253 = vpack.c.b16 %v2093, %v2085
    %v2254 = vpack.c.b16 %v2102, %v2094
    %v2255 = vpack.c.b16 %v2103, %v2095
    %v2256 = vpack.c.b16 %v2104, %v2096
    %v2257 = vpack.c.b16 %v2105, %v2097
    %v2258 = vpack.c.b16 %v2106, %v2098
    %v2259 = vpack.c.b16 %v2107, %v2099
    %v2260 = vpack.c.b16 %v2108, %v2100
    %v2261 = vpack.c.b16 %v2109, %v2101
    %v2262 = vpack.c.b16 %v2118, %v2110
    %v2263 = vpack.c.b16 %v2119, %v2111
    %v2264 = vpack.c.b16 %v2120, %v2112
    %v2265 = vpack.c.b16 %v2121, %v2113
    %v2266 = vpack.c.b16 %v2122, %v2114
    %v2267 = vpack.c.b16 %v2123, %v2115
    %v2268 = vpack.c.b16 %v2124, %v2116
    %v2269 = vpack.c.b16 %v2125, %v2117
    %v2270 = vpack.c.b16 %v2134, %v2126
    %v2271 = vpack.c.b16 %v2135, %v2127
    %v2272 = vpack.c.b16 %v2136, %v2128
    %v2273 = vpack.c.b16 %v2137, %v2129
    %v2274 = vpack.c.b16 %v2138, %v2130
    %v2275 = vpack.c.b16 %v2139, %v2131
    %v2276 = vpack.c.b16 %v2140, %v2132
    %v2277 = vpack.c.b16 %v2141, %v2133
    %v2278 = vpack.c.b16 %v2150, %v2142
    %v2279 = vpack.c.b16 %v2151, %v2143
    %v2280 = vpack.c.b16 %v2152, %v2144
    %v2281 = vpack.c.b16 %v2153, %v2145
    %v2282 = vpack.c.b16 %v2154, %v2146
    %v2283 = vpack.c.b16 %v2155, %v2147
    %v2284 = vpack.c.b16 %v2156, %v2148
    %v2285 = vpack.c.b16 %v2157, %v2149
    %2414 = vmatprep.subr.bf16.mxu0 %v2215
    %2415 = vmatpush1.bf16.msra.mxu0 %v2214
    %2416 = vmatprep.subr.bf16.mxu0 %v2207
    %2417 = vmatpush1.bf16.msra.mxu0 %v2206
    %2418 = vmatprep.subr.bf16.mxu0 %v2199
    %2419 = vmatpush1.bf16.msra.mxu0 %v2198
    %2420 = vmatprep.subr.bf16.mxu0 %v2191
    %2421 = vmatpush1.bf16.msra.mxu0 %v2190
    %2422 = vmatprep.subr.bf16.mxu0 %v2183
    %2423 = vmatpush1.bf16.msra.mxu0 %v2182
    %2424 = vmatprep.subr.bf16.mxu0 %v2175
    %2425 = vmatpush1.bf16.msra.mxu0 %v2174
    %2426 = vmatprep.subr.bf16.mxu0 %v2167
    %2427 = vmatpush1.bf16.msra.mxu0 %v2166
    %2428 = vmatprep.subr.bf16.mxu0 %v2159
    %2429 = vmatpush1.bf16.msra.mxu0 %v2158
    %2430 = vmatprep.subr.bf16.mxu0 %v2279
    %2431 = vmatpush2.bf16.msra.mxu0 %v2278
    %2432 = vmatprep.subr.bf16.mxu0 %v2271
    %2433 = vmatpush2.bf16.msra.mxu0 %v2270
    %2434 = vmatprep.subr.bf16.mxu0 %v2263
    %2435 = vmatpush2.bf16.msra.mxu0 %v2262
    %2436 = vmatprep.subr.bf16.mxu0 %v2255
    %2437 = vmatpush2.bf16.msra.mxu0 %v2254
    %2438 = vmatprep.subr.bf16.mxu0 %v2247
    %2439 = vmatpush2.bf16.msra.mxu0 %v2246
    %2440 = vmatprep.subr.bf16.mxu0 %v2239
    %2441 = vmatpush2.bf16.msra.mxu0 %v2238
    %2442 = vmatprep.subr.bf16.mxu0 %v2231
    %2443 = vmatpush2.bf16.msra.mxu0 %v2230
    %2444 = vmatprep.subr.bf16.mxu0 %v2223
    %2445 = vmatpush2.bf16.msra.mxu0 %v2222
    %2446 = vmatprep.mubr.bf16.mxu0 %v1601
    %2447 = vmatmul.mubr.bf16.gmra.mxu0 %v1600
    %v2448 = vpop.f32.mrf.mxu0
    %v2449 = vadd.f32 %v1737, %v2448
    %v2450 = vpop.f32.mrf.mxu0
    %v2451 = vadd.f32 %v1741, %v2450
    %v2452 = vpop.f32.mrf.mxu0
    %v2453 = vadd.f32 %v1737, %v2452
    %v2454 = vpop.f32.mrf.mxu0
    %v2455 = vadd.f32 %v1741, %v2454
    %2456 = vmatprep.mubr.bf16.mxu0 %v1603
    %2457 = vmatmul.mubr.bf16.gmra.mxu0 %v1602
    %v2458 = vpop.f32.mrf.mxu0
    %v2459 = vadd.f32 %v1737, %v2458
    %v2460 = vpop.f32.mrf.mxu0
    %v2461 = vadd.f32 %v1741, %v2460
    %v2462 = vpop.f32.mrf.mxu0
    %v2463 = vadd.f32 %v1737, %v2462
    %v2464 = vpop.f32.mrf.mxu0
    %v2465 = vadd.f32 %v1741, %v2464
    %2466 = vdwg.mxu0
    %2467 = vmatprep.subr.bf16.mxu0 %v2217
    %2468 = vmatpush1.bf16.msra.mxu0 %v2216
    %2469 = vmatprep.subr.bf16.mxu0 %v2209
    %2470 = vmatpush1.bf16.msra.mxu0 %v2208
    %2471 = vmatprep.subr.bf16.mxu0 %v2201
    %2472 = vmatpush1.bf16.msra.mxu0 %v2200
    %2473 = vmatprep.subr.bf16.mxu0 %v2193
    %2474 = vmatpush1.bf16.msra.mxu0 %v2192
    %2475 = vmatprep.subr.bf16.mxu0 %v2185
    %2476 = vmatpush1.bf16.msra.mxu0 %v2184
    %2477 = vmatprep.subr.bf16.mxu0 %v2177
    %2478 = vmatpush1.bf16.msra.mxu0 %v2176
    %2479 = vmatprep.subr.bf16.mxu0 %v2169
    %2480 = vmatpush1.bf16.msra.mxu0 %v2168
    %2481 = vmatprep.subr.bf16.mxu0 %v2161
    %2482 = vmatpush1.bf16.msra.mxu0 %v2160
    %2483 = vmatprep.subr.bf16.mxu0 %v2281
    %2484 = vmatpush2.bf16.msra.mxu0 %v2280
    %2485 = vmatprep.subr.bf16.mxu0 %v2273
    %2486 = vmatpush2.bf16.msra.mxu0 %v2272
    %2487 = vmatprep.subr.bf16.mxu0 %v2265
    %2488 = vmatpush2.bf16.msra.mxu0 %v2264
    %2489 = vmatprep.subr.bf16.mxu0 %v2257
    %2490 = vmatpush2.bf16.msra.mxu0 %v2256
    %2491 = vmatprep.subr.bf16.mxu0 %v2249
    %2492 = vmatpush2.bf16.msra.mxu0 %v2248
    %2493 = vmatprep.subr.bf16.mxu0 %v2241
    %2494 = vmatpush2.bf16.msra.mxu0 %v2240
    %2495 = vmatprep.subr.bf16.mxu0 %v2233
    %2496 = vmatpush2.bf16.msra.mxu0 %v2232
    %2497 = vmatprep.subr.bf16.mxu0 %v2225
    %2498 = vmatpush2.bf16.msra.mxu0 %v2224
    %2499 = vmatprep.mubr.bf16.mxu0 %v1601
    %2500 = vmatmul.mubr.bf16.gmra.mxu0 %v1600
    %v2501 = vpop.f32.mrf.mxu0
    %v2502 = vadd.f32 %v1745, %v2501
    %v2503 = vpop.f32.mrf.mxu0
    %v2504 = vadd.f32 %v1749, %v2503
    %v2505 = vpop.f32.mrf.mxu0
    %v2506 = vadd.f32 %v1745, %v2505
    %v2507 = vpop.f32.mrf.mxu0
    %v2508 = vadd.f32 %v1749, %v2507
    %2509 = vmatprep.mubr.bf16.mxu0 %v1603
    %2510 = vmatmul.mubr.bf16.gmra.mxu0 %v1602
    %v2511 = vpop.f32.mrf.mxu0
    %v2512 = vadd.f32 %v1745, %v2511
    %v2513 = vpop.f32.mrf.mxu0
    %v2514 = vadd.f32 %v1749, %v2513
    %v2515 = vpop.f32.mrf.mxu0
    %v2516 = vadd.f32 %v1745, %v2515
    %v2517 = vpop.f32.mrf.mxu0
    %v2518 = vadd.f32 %v1749, %v2517
    %2519 = vdwg.mxu0
    %2520 = vmatprep.subr.bf16.mxu0 %v2219
    %2521 = vmatpush1.bf16.msra.mxu0 %v2218
    %2522 = vmatprep.subr.bf16.mxu0 %v2211
    %2523 = vmatpush1.bf16.msra.mxu0 %v2210
    %2524 = vmatprep.subr.bf16.mxu0 %v2203
    %2525 = vmatpush1.bf16.msra.mxu0 %v2202
    %2526 = vmatprep.subr.bf16.mxu0 %v2195
    %2527 = vmatpush1.bf16.msra.mxu0 %v2194
    %2528 = vmatprep.subr.bf16.mxu0 %v2187
    %2529 = vmatpush1.bf16.msra.mxu0 %v2186
    %2530 = vmatprep.subr.bf16.mxu0 %v2179
    %2531 = vmatpush1.bf16.msra.mxu0 %v2178
    %2532 = vmatprep.subr.bf16.mxu0 %v2171
    %2533 = vmatpush1.bf16.msra.mxu0 %v2170
    %2534 = vmatprep.subr.bf16.mxu0 %v2163
    %2535 = vmatpush1.bf16.msra.mxu0 %v2162
    %2536 = vmatprep.subr.bf16.mxu0 %v2283
    %2537 = vmatpush2.bf16.msra.mxu0 %v2282
    %2538 = vmatprep.subr.bf16.mxu0 %v2275
    %2539 = vmatpush2.bf16.msra.mxu0 %v2274
    %2540 = vmatprep.subr.bf16.mxu0 %v2267
    %2541 = vmatpush2.bf16.msra.mxu0 %v2266
    %2542 = vmatprep.subr.bf16.mxu0 %v2259
    %2543 = vmatpush2.bf16.msra.mxu0 %v2258
    %2544 = vmatprep.subr.bf16.mxu0 %v2251
    %2545 = vmatpush2.bf16.msra.mxu0 %v2250
    %2546 = vmatprep.subr.bf16.mxu0 %v2243
    %2547 = vmatpush2.bf16.msra.mxu0 %v2242
    %2548 = vmatprep.subr.bf16.mxu0 %v2235
    %2549 = vmatpush2.bf16.msra.mxu0 %v2234
    %2550 = vmatprep.subr.bf16.mxu0 %v2227
    %2551 = vmatpush2.bf16.msra.mxu0 %v2226
    %2552 = vmatprep.mubr.bf16.mxu0 %v1601
    %2553 = vmatmul.mubr.bf16.gmra.mxu0 %v1600
    %v2554 = vpop.f32.mrf.mxu0
    %v2555 = vadd.f32 %v1753, %v2554
    %v2556 = vpop.f32.mrf.mxu0
    %v2557 = vadd.f32 %v1757, %v2556
    %v2558 = vpop.f32.mrf.mxu0
    %v2559 = vadd.f32 %v1753, %v2558
    %v2560 = vpop.f32.mrf.mxu0
    %v2561 = vadd.f32 %v1757, %v2560
    %2562 = vmatprep.mubr.bf16.mxu0 %v1603
    %2563 = vmatmul.mubr.bf16.gmra.mxu0 %v1602
    %v2564 = vpop.f32.mrf.mxu0
    %v2565 = vadd.f32 %v1753, %v2564
    %v2566 = vpop.f32.mrf.mxu0
    %v2567 = vadd.f32 %v1757, %v2566
    %v2568 = vpop.f32.mrf.mxu0
    %v2569 = vadd.f32 %v1753, %v2568
    %v2570 = vpop.f32.mrf.mxu0
    %v2571 = vadd.f32 %v1757, %v2570
    %2572 = vdwg.mxu0
    %2573 = vmatprep.subr.bf16.mxu0 %v2221
    %2574 = vmatpush1.bf16.msra.mxu0 %v2220
    %2575 = vmatprep.subr.bf16.mxu0 %v2213
    %2576 = vmatpush1.bf16.msra.mxu0 %v2212
    %2577 = vmatprep.subr.bf16.mxu0 %v2205
    %2578 = vmatpush1.bf16.msra.mxu0 %v2204
    %2579 = vmatprep.subr.bf16.mxu0 %v2197
    %2580 = vmatpush1.bf16.msra.mxu0 %v2196
    %2581 = vmatprep.subr.bf16.mxu0 %v2189
    %2582 = vmatpush1.bf16.msra.mxu0 %v2188
    %2583 = vmatprep.subr.bf16.mxu0 %v2181
    %2584 = vmatpush1.bf16.msra.mxu0 %v2180
    %2585 = vmatprep.subr.bf16.mxu0 %v2173
    %2586 = vmatpush1.bf16.msra.mxu0 %v2172
    %2587 = vmatprep.subr.bf16.mxu0 %v2165
    %2588 = vmatpush1.bf16.msra.mxu0 %v2164
    %2589 = vmatprep.subr.bf16.mxu0 %v2285
    %2590 = vmatpush2.bf16.msra.mxu0 %v2284
    %2591 = vmatprep.subr.bf16.mxu0 %v2277
    %2592 = vmatpush2.bf16.msra.mxu0 %v2276
    %2593 = vmatprep.subr.bf16.mxu0 %v2269
    %2594 = vmatpush2.bf16.msra.mxu0 %v2268
    %2595 = vmatprep.subr.bf16.mxu0 %v2261
    %2596 = vmatpush2.bf16.msra.mxu0 %v2260
    %2597 = vmatprep.subr.bf16.mxu0 %v2253
    %2598 = vmatpush2.bf16.msra.mxu0 %v2252
    %2599 = vmatprep.subr.bf16.mxu0 %v2245
    %2600 = vmatpush2.bf16.msra.mxu0 %v2244
    %2601 = vmatprep.subr.bf16.mxu0 %v2237
    %2602 = vmatpush2.bf16.msra.mxu0 %v2236
    %2603 = vmatprep.subr.bf16.mxu0 %v2229
    %2604 = vmatpush2.bf16.msra.mxu0 %v2228
    %2605 = vmatprep.mubr.bf16.mxu0 %v1601
    %2606 = vmatmul.mubr.bf16.gmra.mxu0 %v1600
    %v2607 = vpop.f32.mrf.mxu0
    %v2608 = vadd.f32 %v1761, %v2607
    %v2609 = vpop.f32.mrf.mxu0
    %v2610 = vadd.f32 %v1765, %v2609
    %v2611 = vpop.f32.mrf.mxu0
    %v2612 = vadd.f32 %v1761, %v2611
    %v2613 = vpop.f32.mrf.mxu0
    %v2614 = vadd.f32 %v1765, %v2613
    %2615 = vmatprep.mubr.bf16.mxu0 %v1603
    %2616 = vmatmul.mubr.bf16.gmra.mxu0 %v1602
    %v2617 = vpop.f32.mrf.mxu0
    %v2618 = vadd.f32 %v1761, %v2617
    %v2619 = vpop.f32.mrf.mxu0
    %v2620 = vadd.f32 %v1765, %v2619
    %v2621 = vpop.f32.mrf.mxu0
    %v2622 = vadd.f32 %v1761, %v2621
    %v2623 = vpop.f32.mrf.mxu0
    %v2624 = vadd.f32 %v1765, %v2623
    %2625 = vdwg.mxu0
    %v2626 = vmul.f32 %v2449, 0.5
    %v2627 = vmul.f32 %v2451, 0.5
    %v2628 = vmul.f32 %v2502, 0.5
    %v2629 = vmul.f32 %v2504, 0.5
    %v2630 = vmul.f32 %v2555, 0.5
    %v2631 = vmul.f32 %v2557, 0.5
    %v2632 = vmul.f32 %v2608, 0.5
    %v2633 = vmul.f32 %v2610, 0.5
    %v2634 = vmul.f32 %v2453, 0.5
    %v2635 = vmul.f32 %v2455, 0.5
    %v2636 = vmul.f32 %v2506, 0.5
    %v2637 = vmul.f32 %v2508, 0.5
    %v2638 = vmul.f32 %v2559, 0.5
    %v2639 = vmul.f32 %v2561, 0.5
    %v2640 = vmul.f32 %v2612, 0.5
    %v2641 = vmul.f32 %v2614, 0.5
    %v2642 = vmul.f32 %v2459, 0.5
    %v2643 = vmul.f32 %v2461, 0.5
    %v2644 = vmul.f32 %v2512, 0.5
    %v2645 = vmul.f32 %v2514, 0.5
    %v2646 = vmul.f32 %v2565, 0.5
    %v2647 = vmul.f32 %v2567, 0.5
    %v2648 = vmul.f32 %v2618, 0.5
    %v2649 = vmul.f32 %v2620, 0.5
    %v2650 = vmul.f32 %v2463, 0.5
    %v2651 = vmul.f32 %v2465, 0.5
    %v2652 = vmul.f32 %v2516, 0.5
    %v2653 = vmul.f32 %v2518, 0.5
    %v2654 = vmul.f32 %v2569, 0.5
    %v2655 = vmul.f32 %v2571, 0.5
    %v2656 = vmul.f32 %v2622, 0.5
    %v2657 = vmul.f32 %v2624, 0.5
    %v2658 = vmul.f32 %v2449, 0.70710677
    %v2659 = vmul.f32 %v2451, 0.70710677
    %v2660 = vmul.f32 %v2502, 0.70710677
    %v2661 = vmul.f32 %v2504, 0.70710677
    %v2662 = vmul.f32 %v2555, 0.70710677
    %v2663 = vmul.f32 %v2557, 0.70710677
    %v2664 = vmul.f32 %v2608, 0.70710677
    %v2665 = vmul.f32 %v2610, 0.70710677
    %v2666 = vmul.f32 %v2453, 0.70710677
    %v2667 = vmul.f32 %v2455, 0.70710677
    %v2668 = vmul.f32 %v2506, 0.70710677
    %v2669 = vmul.f32 %v2508, 0.70710677
    %v2670 = vmul.f32 %v2559, 0.70710677
    %v2671 = vmul.f32 %v2561, 0.70710677
    %v2672 = vmul.f32 %v2612, 0.70710677
    %v2673 = vmul.f32 %v2614, 0.70710677
    %v2674 = vmul.f32 %v2459, 0.70710677
    %v2675 = vmul.f32 %v2461, 0.70710677
    %v2676 = vmul.f32 %v2512, 0.70710677
    %v2677 = vmul.f32 %v2514, 0.70710677
    %v2678 = vmul.f32 %v2565, 0.70710677
    %v2679 = vmul.f32 %v2567, 0.70710677
    %v2680 = vmul.f32 %v2618, 0.70710677
    %v2681 = vmul.f32 %v2620, 0.70710677
    %v2682 = vmul.f32 %v2463, 0.70710677
    %v2683 = vmul.f32 %v2465, 0.70710677
    %v2684 = vmul.f32 %v2516, 0.70710677
    %v2685 = vmul.f32 %v2518, 0.70710677
    %v2686 = vmul.f32 %v2569, 0.70710677
    %v2687 = vmul.f32 %v2571, 0.70710677
    %v2688 = vmul.f32 %v2622, 0.70710677
    %v2689 = vmul.f32 %v2624, 0.70710677
    %vm2690 = vcmp.ge.f32.partialorder %v2658, 0.0
    %vm2691 = vcmp.ge.f32.partialorder %v2659, 0.0
    %vm2692 = vcmp.ge.f32.partialorder %v2660, 0.0
    %vm2693 = vcmp.ge.f32.partialorder %v2661, 0.0
    %vm2694 = vcmp.ge.f32.partialorder %v2662, 0.0
    %vm2695 = vcmp.ge.f32.partialorder %v2663, 0.0
    %vm2696 = vcmp.ge.f32.partialorder %v2664, 0.0
    %vm2697 = vcmp.ge.f32.partialorder %v2665, 0.0
    %vm2698 = vcmp.ge.f32.partialorder %v2666, 0.0
    %vm2699 = vcmp.ge.f32.partialorder %v2667, 0.0
    %vm2700 = vcmp.ge.f32.partialorder %v2668, 0.0
    %vm2701 = vcmp.ge.f32.partialorder %v2669, 0.0
    %vm2702 = vcmp.ge.f32.partialorder %v2670, 0.0
    %vm2703 = vcmp.ge.f32.partialorder %v2671, 0.0
    %vm2704 = vcmp.ge.f32.partialorder %v2672, 0.0
    %vm2705 = vcmp.ge.f32.partialorder %v2673, 0.0
    %vm2706 = vcmp.ge.f32.partialorder %v2674, 0.0
    %vm2707 = vcmp.ge.f32.partialorder %v2675, 0.0
    %vm2708 = vcmp.ge.f32.partialorder %v2676, 0.0
    %vm2709 = vcmp.ge.f32.partialorder %v2677, 0.0
    %vm2710 = vcmp.ge.f32.partialorder %v2678, 0.0
    %vm2711 = vcmp.ge.f32.partialorder %v2679, 0.0
    %vm2712 = vcmp.ge.f32.partialorder %v2680, 0.0
    %vm2713 = vcmp.ge.f32.partialorder %v2681, 0.0
    %vm2714 = vcmp.ge.f32.partialorder %v2682, 0.0
    %vm2715 = vcmp.ge.f32.partialorder %v2683, 0.0
    %vm2716 = vcmp.ge.f32.partialorder %v2684, 0.0
    %vm2717 = vcmp.ge.f32.partialorder %v2685, 0.0
    %vm2718 = vcmp.ge.f32.partialorder %v2686, 0.0
    %vm2719 = vcmp.ge.f32.partialorder %v2687, 0.0
    %vm2720 = vcmp.ge.f32.partialorder %v2688, 0.0
    %vm2721 = vcmp.ge.f32.partialorder %v2689, 0.0
    %v2722 = vsel %vm2690, 1.0, -1.0
    %v2723 = vsel %vm2691, 1.0, -1.0
    %v2724 = vsel %vm2692, 1.0, -1.0
    %v2725 = vsel %vm2693, 1.0, -1.0
    %v2726 = vsel %vm2694, 1.0, -1.0
    %v2727 = vsel %vm2695, 1.0, -1.0
    %v2728 = vsel %vm2696, 1.0, -1.0
    %v2729 = vsel %vm2697, 1.0, -1.0
    %v2730 = vsel %vm2698, 1.0, -1.0
    %v2731 = vsel %vm2699, 1.0, -1.0
    %v2732 = vsel %vm2700, 1.0, -1.0
    %v2733 = vsel %vm2701, 1.0, -1.0
    %v2734 = vsel %vm2702, 1.0, -1.0
    %v2735 = vsel %vm2703, 1.0, -1.0
    %v2736 = vsel %vm2704, 1.0, -1.0
    %v2737 = vsel %vm2705, 1.0, -1.0
    %v2738 = vsel %vm2706, 1.0, -1.0
    %v2739 = vsel %vm2707, 1.0, -1.0
    %v2740 = vsel %vm2708, 1.0, -1.0
    %v2741 = vsel %vm2709, 1.0, -1.0
    %v2742 = vsel %vm2710, 1.0, -1.0
    %v2743 = vsel %vm2711, 1.0, -1.0
    %v2744 = vsel %vm2712, 1.0, -1.0
    %v2745 = vsel %vm2713, 1.0, -1.0
    %v2746 = vsel %vm2714, 1.0, -1.0
    %v2747 = vsel %vm2715, 1.0, -1.0
    %v2748 = vsel %vm2716, 1.0, -1.0
    %v2749 = vsel %vm2717, 1.0, -1.0
    %v2750 = vsel %vm2718, 1.0, -1.0
    %v2751 = vsel %vm2719, 1.0, -1.0
    %v2752 = vsel %vm2720, 1.0, -1.0
    %v2753 = vsel %vm2721, 1.0, -1.0
    %v2754 = vand.u32 2147483647, %v2658
    %v2755 = vand.u32 2147483647, %v2659
    %v2756 = vand.u32 2147483647, %v2660
    %v2757 = vand.u32 2147483647, %v2661
    %v2758 = vand.u32 2147483647, %v2662
    %v2759 = vand.u32 2147483647, %v2663
    %v2760 = vand.u32 2147483647, %v2664
    %v2761 = vand.u32 2147483647, %v2665
    %v2762 = vand.u32 2147483647, %v2666
    %v2763 = vand.u32 2147483647, %v2667
    %v2764 = vand.u32 2147483647, %v2668
    %v2765 = vand.u32 2147483647, %v2669
    %v2766 = vand.u32 2147483647, %v2670
    %v2767 = vand.u32 2147483647, %v2671
    %v2768 = vand.u32 2147483647, %v2672
    %v2769 = vand.u32 2147483647, %v2673
    %v2770 = vand.u32 2147483647, %v2674
    %v2771 = vand.u32 2147483647, %v2675
    %v2772 = vand.u32 2147483647, %v2676
    %v2773 = vand.u32 2147483647, %v2677
    %v2774 = vand.u32 2147483647, %v2678
    %v2775 = vand.u32 2147483647, %v2679
    %v2776 = vand.u32 2147483647, %v2680
    %v2777 = vand.u32 2147483647, %v2681
    %v2778 = vand.u32 2147483647, %v2682
    %v2779 = vand.u32 2147483647, %v2683
    %v2780 = vand.u32 2147483647, %v2684
    %v2781 = vand.u32 2147483647, %v2685
    %v2782 = vand.u32 2147483647, %v2686
    %v2783 = vand.u32 2147483647, %v2687
    %v2784 = vand.u32 2147483647, %v2688
    %v2785 = vand.u32 2147483647, %v2689
    %v2786 = vmul.f32 %v2754, 0.3275911
    %v2787 = vmul.f32 %v2755, 0.3275911
    %v2788 = vmul.f32 %v2756, 0.3275911
    %v2789 = vmul.f32 %v2757, 0.3275911
    %v2790 = vmul.f32 %v2758, 0.3275911
    %v2791 = vmul.f32 %v2759, 0.3275911
    %v2792 = vmul.f32 %v2760, 0.3275911
    %v2793 = vmul.f32 %v2761, 0.3275911
    %v2794 = vmul.f32 %v2762, 0.3275911
    %v2795 = vmul.f32 %v2763, 0.3275911
    %v2796 = vmul.f32 %v2764, 0.3275911
    %v2797 = vmul.f32 %v2765, 0.3275911
    %v2798 = vmul.f32 %v2766, 0.3275911
    %v2799 = vmul.f32 %v2767, 0.3275911
    %v2800 = vmul.f32 %v2768, 0.3275911
    %v2801 = vmul.f32 %v2769, 0.3275911
    %v2802 = vmul.f32 %v2770, 0.3275911
    %v2803 = vmul.f32 %v2771, 0.3275911
    %v2804 = vmul.f32 %v2772, 0.3275911
    %v2805 = vmul.f32 %v2773, 0.3275911
    %v2806 = vmul.f32 %v2774, 0.3275911
    %v2807 = vmul.f32 %v2775, 0.3275911
    %v2808 = vmul.f32 %v2776, 0.3275911
    %v2809 = vmul.f32 %v2777, 0.3275911
    %v2810 = vmul.f32 %v2778, 0.3275911
    %v2811 = vmul.f32 %v2779, 0.3275911
    %v2812 = vmul.f32 %v2780, 0.3275911
    %v2813 = vmul.f32 %v2781, 0.3275911
    %v2814 = vmul.f32 %v2782, 0.3275911
    %v2815 = vmul.f32 %v2783, 0.3275911
    %v2816 = vmul.f32 %v2784, 0.3275911
    %v2817 = vmul.f32 %v2785, 0.3275911
    %v2818 = vadd.f32 %v2786, 1.0
    %v2819 = vadd.f32 %v2787, 1.0
    %v2820 = vadd.f32 %v2788, 1.0
    %v2821 = vadd.f32 %v2789, 1.0
    %v2822 = vadd.f32 %v2790, 1.0
    %v2823 = vadd.f32 %v2791, 1.0
    %v2824 = vadd.f32 %v2792, 1.0
    %v2825 = vadd.f32 %v2793, 1.0
    %v2826 = vadd.f32 %v2794, 1.0
    %v2827 = vadd.f32 %v2795, 1.0
    %v2828 = vadd.f32 %v2796, 1.0
    %v2829 = vadd.f32 %v2797, 1.0
    %v2830 = vadd.f32 %v2798, 1.0
    %v2831 = vadd.f32 %v2799, 1.0
    %v2832 = vadd.f32 %v2800, 1.0
    %v2833 = vadd.f32 %v2801, 1.0
    %v2834 = vadd.f32 %v2802, 1.0
    %v2835 = vadd.f32 %v2803, 1.0
    %v2836 = vadd.f32 %v2804, 1.0
    %v2837 = vadd.f32 %v2805, 1.0
    %v2838 = vadd.f32 %v2806, 1.0
    %v2839 = vadd.f32 %v2807, 1.0
    %v2840 = vadd.f32 %v2808, 1.0
    %v2841 = vadd.f32 %v2809, 1.0
    %v2842 = vadd.f32 %v2810, 1.0
    %v2843 = vadd.f32 %v2811, 1.0
    %v2844 = vadd.f32 %v2812, 1.0
    %v2845 = vadd.f32 %v2813, 1.0
    %v2846 = vadd.f32 %v2814, 1.0
    %v2847 = vadd.f32 %v2815, 1.0
    %v2848 = vadd.f32 %v2816, 1.0
    %v2849 = vadd.f32 %v2817, 1.0
    %v2850 = vrcp.pop %v2818
    %v2851 = vrcp.pop %v2819
    %v2852 = vrcp.pop %v2820
    %v2853 = vrcp.pop %v2821
    %v2854 = vrcp.pop %v2822
    %v2855 = vrcp.pop %v2823
    %v2856 = vrcp.pop %v2824
    %v2857 = vrcp.pop %v2825
    %v2858 = vrcp.pop %v2826
    %v2859 = vrcp.pop %v2827
    %v2860 = vrcp.pop %v2828
    %v2861 = vrcp.pop %v2829
    %v2862 = vrcp.pop %v2830
    %v2863 = vrcp.pop %v2831
    %v2864 = vrcp.pop %v2832
    %v2865 = vrcp.pop %v2833
    %v2866 = vrcp.pop %v2834
    %v2867 = vrcp.pop %v2835
    %v2868 = vrcp.pop %v2836
    %v2869 = vrcp.pop %v2837
    %v2870 = vrcp.pop %v2838
    %v2871 = vrcp.pop %v2839
    %v2872 = vrcp.pop %v2840
    %v2873 = vrcp.pop %v2841
    %v2874 = vrcp.pop %v2842
    %v2875 = vrcp.pop %v2843
    %v2876 = vrcp.pop %v2844
    %v2877 = vrcp.pop %v2845
    %v2878 = vrcp.pop %v2846
    %v2879 = vrcp.pop %v2847
    %v2880 = vrcp.pop %v2848
    %v2881 = vrcp.pop %v2849
    %v2882 = vmul.f32 %v2850, 1.0614054
    %v2883 = vmul.f32 %v2851, 1.0614054
    %v2884 = vmul.f32 %v2852, 1.0614054
    %v2885 = vmul.f32 %v2853, 1.0614054
    %v2886 = vmul.f32 %v2854, 1.0614054
    %v2887 = vmul.f32 %v2855, 1.0614054
    %v2888 = vmul.f32 %v2856, 1.0614054
    %v2889 = vmul.f32 %v2857, 1.0614054
    %v2890 = vmul.f32 %v2858, 1.0614054
    %v2891 = vmul.f32 %v2859, 1.0614054
    %v2892 = vmul.f32 %v2860, 1.0614054
    %v2893 = vmul.f32 %v2861, 1.0614054
    %v2894 = vmul.f32 %v2862, 1.0614054
    %v2895 = vmul.f32 %v2863, 1.0614054
    %v2896 = vmul.f32 %v2864, 1.0614054
    %v2897 = vmul.f32 %v2865, 1.0614054
    %v2898 = vmul.f32 %v2866, 1.0614054
    %v2899 = vmul.f32 %v2867, 1.0614054
    %v2900 = vmul.f32 %v2868, 1.0614054
    %v2901 = vmul.f32 %v2869, 1.0614054
    %v2902 = vmul.f32 %v2870, 1.0614054
    %v2903 = vmul.f32 %v2871, 1.0614054
    %v2904 = vmul.f32 %v2872, 1.0614054
    %v2905 = vmul.f32 %v2873, 1.0614054
    %v2906 = vmul.f32 %v2874, 1.0614054
    %v2907 = vmul.f32 %v2875, 1.0614054
    %v2908 = vmul.f32 %v2876, 1.0614054
    %v2909 = vmul.f32 %v2877, 1.0614054
    %v2910 = vmul.f32 %v2878, 1.0614054
    %v2911 = vmul.f32 %v2879, 1.0614054
    %v2912 = vmul.f32 %v2880, 1.0614054
    %v2913 = vmul.f32 %v2881, 1.0614054
    %v2914 = vadd.f32 %v2882, -1.4531521
    %v2915 = vadd.f32 %v2883, -1.4531521
    %v2916 = vadd.f32 %v2884, -1.4531521
    %v2917 = vadd.f32 %v2885, -1.4531521
    %v2918 = vadd.f32 %v2886, -1.4531521
    %v2919 = vadd.f32 %v2887, -1.4531521
    %v2920 = vadd.f32 %v2888, -1.4531521
    %v2921 = vadd.f32 %v2889, -1.4531521
    %v2922 = vadd.f32 %v2890, -1.4531521
    %v2923 = vadd.f32 %v2891, -1.4531521
    %v2924 = vadd.f32 %v2892, -1.4531521
    %v2925 = vadd.f32 %v2893, -1.4531521
    %v2926 = vadd.f32 %v2894, -1.4531521
    %v2927 = vadd.f32 %v2895, -1.4531521
    %v2928 = vadd.f32 %v2896, -1.4531521
    %v2929 = vadd.f32 %v2897, -1.4531521
    %v2930 = vadd.f32 %v2898, -1.4531521
    %v2931 = vadd.f32 %v2899, -1.4531521
    %v2932 = vadd.f32 %v2900, -1.4531521
    %v2933 = vadd.f32 %v2901, -1.4531521
    %v2934 = vadd.f32 %v2902, -1.4531521
    %v2935 = vadd.f32 %v2903, -1.4531521
    %v2936 = vadd.f32 %v2904, -1.4531521
    %v2937 = vadd.f32 %v2905, -1.4531521
    %v2938 = vadd.f32 %v2906, -1.4531521
    %v2939 = vadd.f32 %v2907, -1.4531521
    %v2940 = vadd.f32 %v2908, -1.4531521
    %v2941 = vadd.f32 %v2909, -1.4531521
    %v2942 = vadd.f32 %v2910, -1.4531521
    %v2943 = vadd.f32 %v2911, -1.4531521
    %v2944 = vadd.f32 %v2912, -1.4531521
    %v2945 = vadd.f32 %v2913, -1.4531521
    %v2946 = vmul.f32 %v2914, %v2850
    %v2947 = vmul.f32 %v2915, %v2851
    %v2948 = vmul.f32 %v2916, %v2852
    %v2949 = vmul.f32 %v2917, %v2853
    %v2950 = vmul.f32 %v2918, %v2854
    %v2951 = vmul.f32 %v2919, %v2855
    %v2952 = vmul.f32 %v2920, %v2856
    %v2953 = vmul.f32 %v2921, %v2857
    %v2954 = vmul.f32 %v2922, %v2858
    %v2955 = vmul.f32 %v2923, %v2859
    %v2956 = vmul.f32 %v2924, %v2860
    %v2957 = vmul.f32 %v2925, %v2861
    %v2958 = vmul.f32 %v2926, %v2862
    %v2959 = vmul.f32 %v2927, %v2863
    %v2960 = vmul.f32 %v2928, %v2864
    %v2961 = vmul.f32 %v2929, %v2865
    %v2962 = vmul.f32 %v2930, %v2866
    %v2963 = vmul.f32 %v2931, %v2867
    %v2964 = vmul.f32 %v2932, %v2868
    %v2965 = vmul.f32 %v2933, %v2869
    %v2966 = vmul.f32 %v2934, %v2870
    %v2967 = vmul.f32 %v2935, %v2871
    %v2968 = vmul.f32 %v2936, %v2872
    %v2969 = vmul.f32 %v2937, %v2873
    %v2970 = vmul.f32 %v2938, %v2874
    %v2971 = vmul.f32 %v2939, %v2875
    %v2972 = vmul.f32 %v2940, %v2876
    %v2973 = vmul.f32 %v2941, %v2877
    %v2974 = vmul.f32 %v2942, %v2878
    %v2975 = vmul.f32 %v2943, %v2879
    %v2976 = vmul.f32 %v2944, %v2880
    %v2977 = vmul.f32 %v2945, %v2881
    %v2978 = vadd.f32 %v2946, 1.4214138
    %v2979 = vadd.f32 %v2947, 1.4214138
    %v2980 = vadd.f32 %v2948, 1.4214138
    %v2981 = vadd.f32 %v2949, 1.4214138
    %v2982 = vadd.f32 %v2950, 1.4214138
    %v2983 = vadd.f32 %v2951, 1.4214138
    %v2984 = vadd.f32 %v2952, 1.4214138
    %v2985 = vadd.f32 %v2953, 1.4214138
    %v2986 = vadd.f32 %v2954, 1.4214138
    %v2987 = vadd.f32 %v2955, 1.4214138
    %v2988 = vadd.f32 %v2956, 1.4214138
    %v2989 = vadd.f32 %v2957, 1.4214138
    %v2990 = vadd.f32 %v2958, 1.4214138
    %v2991 = vadd.f32 %v2959, 1.4214138
    %v2992 = vadd.f32 %v2960, 1.4214138
    %v2993 = vadd.f32 %v2961, 1.4214138
    %v2994 = vadd.f32 %v2962, 1.4214138
    %v2995 = vadd.f32 %v2963, 1.4214138
    %v2996 = vadd.f32 %v2964, 1.4214138
    %v2997 = vadd.f32 %v2965, 1.4214138
    %v2998 = vadd.f32 %v2966, 1.4214138
    %v2999 = vadd.f32 %v2967, 1.4214138
    %v3000 = vadd.f32 %v2968, 1.4214138
    %v3001 = vadd.f32 %v2969, 1.4214138
    %v3002 = vadd.f32 %v2970, 1.4214138
    %v3003 = vadd.f32 %v2971, 1.4214138
    %v3004 = vadd.f32 %v2972, 1.4214138
    %v3005 = vadd.f32 %v2973, 1.4214138
    %v3006 = vadd.f32 %v2974, 1.4214138
    %v3007 = vadd.f32 %v2975, 1.4214138
    %v3008 = vadd.f32 %v2976, 1.4214138
    %v3009 = vadd.f32 %v2977, 1.4214138
    %v3010 = vmul.f32 %v2978, %v2850
    %v3011 = vmul.f32 %v2979, %v2851
    %v3012 = vmul.f32 %v2980, %v2852
    %v3013 = vmul.f32 %v2981, %v2853
    %v3014 = vmul.f32 %v2982, %v2854
    %v3015 = vmul.f32 %v2983, %v2855
    %v3016 = vmul.f32 %v2984, %v2856
    %v3017 = vmul.f32 %v2985, %v2857
    %v3018 = vmul.f32 %v2986, %v2858
    %v3019 = vmul.f32 %v2987, %v2859
    %v3020 = vmul.f32 %v2988, %v2860
    %v3021 = vmul.f32 %v2989, %v2861
    %v3022 = vmul.f32 %v2990, %v2862
    %v3023 = vmul.f32 %v2991, %v2863
    %v3024 = vmul.f32 %v2992, %v2864
    %v3025 = vmul.f32 %v2993, %v2865
    %v3026 = vmul.f32 %v2994, %v2866
    %v3027 = vmul.f32 %v2995, %v2867
    %v3028 = vmul.f32 %v2996, %v2868
    %v3029 = vmul.f32 %v2997, %v2869
    %v3030 = vmul.f32 %v2998, %v2870
    %v3031 = vmul.f32 %v2999, %v2871
    %v3032 = vmul.f32 %v3000, %v2872
    %v3033 = vmul.f32 %v3001, %v2873
    %v3034 = vmul.f32 %v3002, %v2874
    %v3035 = vmul.f32 %v3003, %v2875
    %v3036 = vmul.f32 %v3004, %v2876
    %v3037 = vmul.f32 %v3005, %v2877
    %v3038 = vmul.f32 %v3006, %v2878
    %v3039 = vmul.f32 %v3007, %v2879
    %v3040 = vmul.f32 %v3008, %v2880
    %v3041 = vmul.f32 %v3009, %v2881
    %v3042 = vadd.f32 %v3010, -0.28449672
    %v3043 = vadd.f32 %v3011, -0.28449672
    %v3044 = vadd.f32 %v3012, -0.28449672
    %v3045 = vadd.f32 %v3013, -0.28449672
    %v3046 = vadd.f32 %v3014, -0.28449672
    %v3047 = vadd.f32 %v3015, -0.28449672
    %v3048 = vadd.f32 %v3016, -0.28449672
    %v3049 = vadd.f32 %v3017, -0.28449672
    %v3050 = vadd.f32 %v3018, -0.28449672
    %v3051 = vadd.f32 %v3019, -0.28449672
    %v3052 = vadd.f32 %v3020, -0.28449672
    %v3053 = vadd.f32 %v3021, -0.28449672
    %v3054 = vadd.f32 %v3022, -0.28449672
    %v3055 = vadd.f32 %v3023, -0.28449672
    %v3056 = vadd.f32 %v3024, -0.28449672
    %v3057 = vadd.f32 %v3025, -0.28449672
    %v3058 = vadd.f32 %v3026, -0.28449672
    %v3059 = vadd.f32 %v3027, -0.28449672
    %v3060 = vadd.f32 %v3028, -0.28449672
    %v3061 = vadd.f32 %v3029, -0.28449672
    %v3062 = vadd.f32 %v3030, -0.28449672
    %v3063 = vadd.f32 %v3031, -0.28449672
    %v3064 = vadd.f32 %v3032, -0.28449672
    %v3065 = vadd.f32 %v3033, -0.28449672
    %v3066 = vadd.f32 %v3034, -0.28449672
    %v3067 = vadd.f32 %v3035, -0.28449672
    %v3068 = vadd.f32 %v3036, -0.28449672
    %v3069 = vadd.f32 %v3037, -0.28449672
    %v3070 = vadd.f32 %v3038, -0.28449672
    %v3071 = vadd.f32 %v3039, -0.28449672
    %v3072 = vadd.f32 %v3040, -0.28449672
    %v3073 = vadd.f32 %v3041, -0.28449672
    %v3074 = vmul.f32 %v3042, %v2850
    %v3075 = vmul.f32 %v3043, %v2851
    %v3076 = vmul.f32 %v3044, %v2852
    %v3077 = vmul.f32 %v3045, %v2853
    %v3078 = vmul.f32 %v3046, %v2854
    %v3079 = vmul.f32 %v3047, %v2855
    %v3080 = vmul.f32 %v3048, %v2856
    %v3081 = vmul.f32 %v3049, %v2857
    %v3082 = vmul.f32 %v3050, %v2858
    %v3083 = vmul.f32 %v3051, %v2859
    %v3084 = vmul.f32 %v3052, %v2860
    %v3085 = vmul.f32 %v3053, %v2861
    %v3086 = vmul.f32 %v3054, %v2862
    %v3087 = vmul.f32 %v3055, %v2863
    %v3088 = vmul.f32 %v3056, %v2864
    %v3089 = vmul.f32 %v3057, %v2865
    %v3090 = vmul.f32 %v3058, %v2866
    %v3091 = vmul.f32 %v3059, %v2867
    %v3092 = vmul.f32 %v3060, %v2868
    %v3093 = vmul.f32 %v3061, %v2869
    %v3094 = vmul.f32 %v3062, %v2870
    %v3095 = vmul.f32 %v3063, %v2871
    %v3096 = vmul.f32 %v3064, %v2872
    %v3097 = vmul.f32 %v3065, %v2873
    %v3098 = vmul.f32 %v3066, %v2874
    %v3099 = vmul.f32 %v3067, %v2875
    %v3100 = vmul.f32 %v3068, %v2876
    %v3101 = vmul.f32 %v3069, %v2877
    %v3102 = vmul.f32 %v3070, %v2878
    %v3103 = vmul.f32 %v3071, %v2879
    %v3104 = vmul.f32 %v3072, %v2880
    %v3105 = vmul.f32 %v3073, %v2881
    %v3106 = vadd.f32 %v3074, 0.2548296
    %v3107 = vadd.f32 %v3075, 0.2548296
    %v3108 = vadd.f32 %v3076, 0.2548296
    %v3109 = vadd.f32 %v3077, 0.2548296
    %v3110 = vadd.f32 %v3078, 0.2548296
    %v3111 = vadd.f32 %v3079, 0.2548296
    %v3112 = vadd.f32 %v3080, 0.2548296
    %v3113 = vadd.f32 %v3081, 0.2548296
    %v3114 = vadd.f32 %v3082, 0.2548296
    %v3115 = vadd.f32 %v3083, 0.2548296
    %v3116 = vadd.f32 %v3084, 0.2548296
    %v3117 = vadd.f32 %v3085, 0.2548296
    %v3118 = vadd.f32 %v3086, 0.2548296
    %v3119 = vadd.f32 %v3087, 0.2548296
    %v3120 = vadd.f32 %v3088, 0.2548296
    %v3121 = vadd.f32 %v3089, 0.2548296
    %v3122 = vadd.f32 %v3090, 0.2548296
    %v3123 = vadd.f32 %v3091, 0.2548296
    %v3124 = vadd.f32 %v3092, 0.2548296
    %v3125 = vadd.f32 %v3093, 0.2548296
    %v3126 = vadd.f32 %v3094, 0.2548296
    %v3127 = vadd.f32 %v3095, 0.2548296
    %v3128 = vadd.f32 %v3096, 0.2548296
    %v3129 = vadd.f32 %v3097, 0.2548296
    %v3130 = vadd.f32 %v3098, 0.2548296
    %v3131 = vadd.f32 %v3099, 0.2548296
    %v3132 = vadd.f32 %v3100, 0.2548296
    %v3133 = vadd.f32 %v3101, 0.2548296
    %v3134 = vadd.f32 %v3102, 0.2548296
    %v3135 = vadd.f32 %v3103, 0.2548296
    %v3136 = vadd.f32 %v3104, 0.2548296
    %v3137 = vadd.f32 %v3105, 0.2548296
    %v3138 = vmul.f32 %v3106, %v2850
    %v3139 = vmul.f32 %v3107, %v2851
    %v3140 = vmul.f32 %v3108, %v2852
    %v3141 = vmul.f32 %v3109, %v2853
    %v3142 = vmul.f32 %v3110, %v2854
    %v3143 = vmul.f32 %v3111, %v2855
    %v3144 = vmul.f32 %v3112, %v2856
    %v3145 = vmul.f32 %v3113, %v2857
    %v3146 = vmul.f32 %v3114, %v2858
    %v3147 = vmul.f32 %v3115, %v2859
    %v3148 = vmul.f32 %v3116, %v2860
    %v3149 = vmul.f32 %v3117, %v2861
    %v3150 = vmul.f32 %v3118, %v2862
    %v3151 = vmul.f32 %v3119, %v2863
    %v3152 = vmul.f32 %v3120, %v2864
    %v3153 = vmul.f32 %v3121, %v2865
    %v3154 = vmul.f32 %v3122, %v2866
    %v3155 = vmul.f32 %v3123, %v2867
    %v3156 = vmul.f32 %v3124, %v2868
    %v3157 = vmul.f32 %v3125, %v2869
    %v3158 = vmul.f32 %v3126, %v2870
    %v3159 = vmul.f32 %v3127, %v2871
    %v3160 = vmul.f32 %v3128, %v2872
    %v3161 = vmul.f32 %v3129, %v2873
    %v3162 = vmul.f32 %v3130, %v2874
    %v3163 = vmul.f32 %v3131, %v2875
    %v3164 = vmul.f32 %v3132, %v2876
    %v3165 = vmul.f32 %v3133, %v2877
    %v3166 = vmul.f32 %v3134, %v2878
    %v3167 = vmul.f32 %v3135, %v2879
    %v3168 = vmul.f32 %v3136, %v2880
    %v3169 = vmul.f32 %v3137, %v2881
    %v3170 = vsub.f32 0.0, %v2754
    %v3171 = vsub.f32 0.0, %v2755
    %v3172 = vsub.f32 0.0, %v2756
    %v3173 = vsub.f32 0.0, %v2757
    %v3174 = vsub.f32 0.0, %v2758
    %v3175 = vsub.f32 0.0, %v2759
    %v3176 = vsub.f32 0.0, %v2760
    %v3177 = vsub.f32 0.0, %v2761
    %v3178 = vsub.f32 0.0, %v2762
    %v3179 = vsub.f32 0.0, %v2763
    %v3180 = vsub.f32 0.0, %v2764
    %v3181 = vsub.f32 0.0, %v2765
    %v3182 = vsub.f32 0.0, %v2766
    %v3183 = vsub.f32 0.0, %v2767
    %v3184 = vsub.f32 0.0, %v2768
    %v3185 = vsub.f32 0.0, %v2769
    %v3186 = vsub.f32 0.0, %v2770
    %v3187 = vsub.f32 0.0, %v2771
    %v3188 = vsub.f32 0.0, %v2772
    %v3189 = vsub.f32 0.0, %v2773
    %v3190 = vsub.f32 0.0, %v2774
    %v3191 = vsub.f32 0.0, %v2775
    %v3192 = vsub.f32 0.0, %v2776
    %v3193 = vsub.f32 0.0, %v2777
    %v3194 = vsub.f32 0.0, %v2778
    %v3195 = vsub.f32 0.0, %v2779
    %v3196 = vsub.f32 0.0, %v2780
    %v3197 = vsub.f32 0.0, %v2781
    %v3198 = vsub.f32 0.0, %v2782
    %v3199 = vsub.f32 0.0, %v2783
    %v3200 = vsub.f32 0.0, %v2784
    %v3201 = vsub.f32 0.0, %v2785
    %v3202 = vmul.f32 %v3170, %v2754
    %v3203 = vmul.f32 %v3171, %v2755
    %v3204 = vmul.f32 %v3172, %v2756
    %v3205 = vmul.f32 %v3173, %v2757
    %v3206 = vmul.f32 %v3174, %v2758
    %v3207 = vmul.f32 %v3175, %v2759
    %v3208 = vmul.f32 %v3176, %v2760
    %v3209 = vmul.f32 %v3177, %v2761
    %v3210 = vmul.f32 %v3178, %v2762
    %v3211 = vmul.f32 %v3179, %v2763
    %v3212 = vmul.f32 %v3180, %v2764
    %v3213 = vmul.f32 %v3181, %v2765
    %v3214 = vmul.f32 %v3182, %v2766
    %v3215 = vmul.f32 %v3183, %v2767
    %v3216 = vmul.f32 %v3184, %v2768
    %v3217 = vmul.f32 %v3185, %v2769
    %v3218 = vmul.f32 %v3186, %v2770
    %v3219 = vmul.f32 %v3187, %v2771
    %v3220 = vmul.f32 %v3188, %v2772
    %v3221 = vmul.f32 %v3189, %v2773
    %v3222 = vmul.f32 %v3190, %v2774
    %v3223 = vmul.f32 %v3191, %v2775
    %v3224 = vmul.f32 %v3192, %v2776
    %v3225 = vmul.f32 %v3193, %v2777
    %v3226 = vmul.f32 %v3194, %v2778
    %v3227 = vmul.f32 %v3195, %v2779
    %v3228 = vmul.f32 %v3196, %v2780
    %v3229 = vmul.f32 %v3197, %v2781
    %v3230 = vmul.f32 %v3198, %v2782
    %v3231 = vmul.f32 %v3199, %v2783
    %v3232 = vmul.f32 %v3200, %v2784
    %v3233 = vmul.f32 %v3201, %v2785
    %v3234 = vmul.f32 %v3202, 1.442695
    %v3235 = vpow.pop %v3234
    %v3236 = vmul.f32 %v3203, 1.442695
    %v3237 = vpow.pop %v3236
    %v3238 = vmul.f32 %v3204, 1.442695
    %v3239 = vpow.pop %v3238
    %v3240 = vmul.f32 %v3205, 1.442695
    %v3241 = vpow.pop %v3240
    %v3242 = vmul.f32 %v3206, 1.442695
    %v3243 = vpow.pop %v3242
    %v3244 = vmul.f32 %v3207, 1.442695
    %v3245 = vpow.pop %v3244
    %v3246 = vmul.f32 %v3208, 1.442695
    %v3247 = vpow.pop %v3246
    %v3248 = vmul.f32 %v3209, 1.442695
    %v3249 = vpow.pop %v3248
    %v3250 = vmul.f32 %v3210, 1.442695
    %v3251 = vpow.pop %v3250
    %v3252 = vmul.f32 %v3211, 1.442695
    %v3253 = vpow.pop %v3252
    %v3254 = vmul.f32 %v3212, 1.442695
    %v3255 = vpow.pop %v3254
    %v3256 = vmul.f32 %v3213, 1.442695
    %v3257 = vpow.pop %v3256
    %v3258 = vmul.f32 %v3214, 1.442695
    %v3259 = vpow.pop %v3258
    %v3260 = vmul.f32 %v3215, 1.442695
    %v3261 = vpow.pop %v3260
    %v3262 = vmul.f32 %v3216, 1.442695
    %v3263 = vpow.pop %v3262
    %v3264 = vmul.f32 %v3217, 1.442695
    %v3265 = vpow.pop %v3264
    %v3266 = vmul.f32 %v3218, 1.442695
    %v3267 = vpow.pop %v3266
    %v3268 = vmul.f32 %v3219, 1.442695
    %v3269 = vpow.pop %v3268
    %v3270 = vmul.f32 %v3220, 1.442695
    %v3271 = vpow.pop %v3270
    %v3272 = vmul.f32 %v3221, 1.442695
    %v3273 = vpow.pop %v3272
    %v3274 = vmul.f32 %v3222, 1.442695
    %v3275 = vpow.pop %v3274
    %v3276 = vmul.f32 %v3223, 1.442695
    %v3277 = vpow.pop %v3276
    %v3278 = vmul.f32 %v3224, 1.442695
    %v3279 = vpow.pop %v3278
    %v3280 = vmul.f32 %v3225, 1.442695
    %v3281 = vpow.pop %v3280
    %v3282 = vmul.f32 %v3226, 1.442695
    %v3283 = vpow.pop %v3282
    %v3284 = vmul.f32 %v3227, 1.442695
    %v3285 = vpow.pop %v3284
    %v3286 = vmul.f32 %v3228, 1.442695
    %v3287 = vpow.pop %v3286
    %v3288 = vmul.f32 %v3229, 1.442695
    %v3289 = vpow.pop %v3288
    %v3290 = vmul.f32 %v3230, 1.442695
    %v3291 = vpow.pop %v3290
    %v3292 = vmul.f32 %v3231, 1.442695
    %v3293 = vpow.pop %v3292
    %v3294 = vmul.f32 %v3232, 1.442695
    %v3295 = vpow.pop %v3294
    %v3296 = vmul.f32 %v3233, 1.442695
    %v3297 = vpow.pop %v3296
    %v3298 = vmul.f32 %v3138, %v3235
    %v3299 = vmul.f32 %v3139, %v3237
    %v3300 = vmul.f32 %v3140, %v3239
    %v3301 = vmul.f32 %v3141, %v3241
    %v3302 = vmul.f32 %v3142, %v3243
    %v3303 = vmul.f32 %v3143, %v3245
    %v3304 = vmul.f32 %v3144, %v3247
    %v3305 = vmul.f32 %v3145, %v3249
    %v3306 = vmul.f32 %v3146, %v3251
    %v3307 = vmul.f32 %v3147, %v3253
    %v3308 = vmul.f32 %v3148, %v3255
    %v3309 = vmul.f32 %v3149, %v3257
    %v3310 = vmul.f32 %v3150, %v3259
    %v3311 = vmul.f32 %v3151, %v3261
    %v3312 = vmul.f32 %v3152, %v3263
    %v3313 = vmul.f32 %v3153, %v3265
    %v3314 = vmul.f32 %v3154, %v3267
    %v3315 = vmul.f32 %v3155, %v3269
    %v3316 = vmul.f32 %v3156, %v3271
    %v3317 = vmul.f32 %v3157, %v3273
    %v3318 = vmul.f32 %v3158, %v3275
    %v3319 = vmul.f32 %v3159, %v3277
    %v3320 = vmul.f32 %v3160, %v3279
    %v3321 = vmul.f32 %v3161, %v3281
    %v3322 = vmul.f32 %v3162, %v3283
    %v3323 = vmul.f32 %v3163, %v3285
    %v3324 = vmul.f32 %v3164, %v3287
    %v3325 = vmul.f32 %v3165, %v3289
    %v3326 = vmul.f32 %v3166, %v3291
    %v3327 = vmul.f32 %v3167, %v3293
    %v3328 = vmul.f32 %v3168, %v3295
    %v3329 = vmul.f32 %v3169, %v3297
    %v3330 = vsub.f32 1.0, %v3298
    %v3331 = vsub.f32 1.0, %v3299
    %v3332 = vsub.f32 1.0, %v3300
    %v3333 = vsub.f32 1.0, %v3301
    %v3334 = vsub.f32 1.0, %v3302
    %v3335 = vsub.f32 1.0, %v3303
    %v3336 = vsub.f32 1.0, %v3304
    %v3337 = vsub.f32 1.0, %v3305
    %v3338 = vsub.f32 1.0, %v3306
    %v3339 = vsub.f32 1.0, %v3307
    %v3340 = vsub.f32 1.0, %v3308
    %v3341 = vsub.f32 1.0, %v3309
    %v3342 = vsub.f32 1.0, %v3310
    %v3343 = vsub.f32 1.0, %v3311
    %v3344 = vsub.f32 1.0, %v3312
    %v3345 = vsub.f32 1.0, %v3313
    %v3346 = vsub.f32 1.0, %v3314
    %v3347 = vsub.f32 1.0, %v3315
    %v3348 = vsub.f32 1.0, %v3316
    %v3349 = vsub.f32 1.0, %v3317
    %v3350 = vsub.f32 1.0, %v3318
    %v3351 = vsub.f32 1.0, %v3319
    %v3352 = vsub.f32 1.0, %v3320
    %v3353 = vsub.f32 1.0, %v3321
    %v3354 = vsub.f32 1.0, %v3322
    %v3355 = vsub.f32 1.0, %v3323
    %v3356 = vsub.f32 1.0, %v3324
    %v3357 = vsub.f32 1.0, %v3325
    %v3358 = vsub.f32 1.0, %v3326
    %v3359 = vsub.f32 1.0, %v3327
    %v3360 = vsub.f32 1.0, %v3328
    %v3361 = vsub.f32 1.0, %v3329
    %v3362 = vmul.f32 %v2722, %v3330
    %v3363 = vmul.f32 %v2723, %v3331
    %v3364 = vmul.f32 %v2724, %v3332
    %v3365 = vmul.f32 %v2725, %v3333
    %v3366 = vmul.f32 %v2726, %v3334
    %v3367 = vmul.f32 %v2727, %v3335
    %v3368 = vmul.f32 %v2728, %v3336
    %v3369 = vmul.f32 %v2729, %v3337
    %v3370 = vmul.f32 %v2730, %v3338
    %v3371 = vmul.f32 %v2731, %v3339
    %v3372 = vmul.f32 %v2732, %v3340
    %v3373 = vmul.f32 %v2733, %v3341
    %v3374 = vmul.f32 %v2734, %v3342
    %v3375 = vmul.f32 %v2735, %v3343
    %v3376 = vmul.f32 %v2736, %v3344
    %v3377 = vmul.f32 %v2737, %v3345
    %v3378 = vmul.f32 %v2738, %v3346
    %v3379 = vmul.f32 %v2739, %v3347
    %v3380 = vmul.f32 %v2740, %v3348
    %v3381 = vmul.f32 %v2741, %v3349
    %v3382 = vmul.f32 %v2742, %v3350
    %v3383 = vmul.f32 %v2743, %v3351
    %v3384 = vmul.f32 %v2744, %v3352
    %v3385 = vmul.f32 %v2745, %v3353
    %v3386 = vmul.f32 %v2746, %v3354
    %v3387 = vmul.f32 %v2747, %v3355
    %v3388 = vmul.f32 %v2748, %v3356
    %v3389 = vmul.f32 %v2749, %v3357
    %v3390 = vmul.f32 %v2750, %v3358
    %v3391 = vmul.f32 %v2751, %v3359
    %v3392 = vmul.f32 %v2752, %v3360
    %v3393 = vmul.f32 %v2753, %v3361
    %v3394 = vadd.f32 %v3362, 1.0
    %v3395 = vadd.f32 %v3363, 1.0
    %v3396 = vadd.f32 %v3364, 1.0
    %v3397 = vadd.f32 %v3365, 1.0
    %v3398 = vadd.f32 %v3366, 1.0
    %v3399 = vadd.f32 %v3367, 1.0
    %v3400 = vadd.f32 %v3368, 1.0
    %v3401 = vadd.f32 %v3369, 1.0
    %v3402 = vadd.f32 %v3370, 1.0
    %v3403 = vadd.f32 %v3371, 1.0
    %v3404 = vadd.f32 %v3372, 1.0
    %v3405 = vadd.f32 %v3373, 1.0
    %v3406 = vadd.f32 %v3374, 1.0
    %v3407 = vadd.f32 %v3375, 1.0
    %v3408 = vadd.f32 %v3376, 1.0
    %v3409 = vadd.f32 %v3377, 1.0
    %v3410 = vadd.f32 %v3378, 1.0
    %v3411 = vadd.f32 %v3379, 1.0
    %v3412 = vadd.f32 %v3380, 1.0
    %v3413 = vadd.f32 %v3381, 1.0
    %v3414 = vadd.f32 %v3382, 1.0
    %v3415 = vadd.f32 %v3383, 1.0
    %v3416 = vadd.f32 %v3384, 1.0
    %v3417 = vadd.f32 %v3385, 1.0
    %v3418 = vadd.f32 %v3386, 1.0
    %v3419 = vadd.f32 %v3387, 1.0
    %v3420 = vadd.f32 %v3388, 1.0
    %v3421 = vadd.f32 %v3389, 1.0
    %v3422 = vadd.f32 %v3390, 1.0
    %v3423 = vadd.f32 %v3391, 1.0
    %v3424 = vadd.f32 %v3392, 1.0
    %v3425 = vadd.f32 %v3393, 1.0
    %v3426 = vmul.f32 %v2626, %v3394
    %v3427 = vmul.f32 %v2627, %v3395
    %v3428 = vmul.f32 %v2628, %v3396
    %v3429 = vmul.f32 %v2629, %v3397
    %v3430 = vmul.f32 %v2630, %v3398
    %v3431 = vmul.f32 %v2631, %v3399
    %v3432 = vmul.f32 %v2632, %v3400
    %v3433 = vmul.f32 %v2633, %v3401
    %v3434 = vmul.f32 %v2634, %v3402
    %v3435 = vmul.f32 %v2635, %v3403
    %v3436 = vmul.f32 %v2636, %v3404
    %v3437 = vmul.f32 %v2637, %v3405
    %v3438 = vmul.f32 %v2638, %v3406
    %v3439 = vmul.f32 %v2639, %v3407
    %v3440 = vmul.f32 %v2640, %v3408
    %v3441 = vmul.f32 %v2641, %v3409
    %v3442 = vmul.f32 %v2642, %v3410
    %v3443 = vmul.f32 %v2643, %v3411
    %v3444 = vmul.f32 %v2644, %v3412
    %v3445 = vmul.f32 %v2645, %v3413
    %v3446 = vmul.f32 %v2646, %v3414
    %v3447 = vmul.f32 %v2647, %v3415
    %v3448 = vmul.f32 %v2648, %v3416
    %v3449 = vmul.f32 %v2649, %v3417
    %v3450 = vmul.f32 %v2650, %v3418
    %v3451 = vmul.f32 %v2651, %v3419
    %v3452 = vmul.f32 %v2652, %v3420
    %v3453 = vmul.f32 %v2653, %v3421
    %v3454 = vmul.f32 %v2654, %v3422
    %v3455 = vmul.f32 %v2655, %v3423
    %v3456 = vmul.f32 %v2656, %v3424
    %v3457 = vmul.f32 %v2657, %v3425
    %v3458 = vpack.c.bf16 %v3434, %v3426
    %v3459 = vpack.c.bf16 %v3435, %v3427
    %v3460 = vpack.c.bf16 %v3436, %v3428
    %v3461 = vpack.c.bf16 %v3437, %v3429
    %v3462 = vpack.c.bf16 %v3438, %v3430
    %v3463 = vpack.c.bf16 %v3439, %v3431
    %v3464 = vpack.c.bf16 %v3440, %v3432
    %v3465 = vpack.c.bf16 %v3441, %v3433
    %v3466 = vpack.c.bf16 %v3450, %v3442
    %v3467 = vpack.c.bf16 %v3451, %v3443
    %v3468 = vpack.c.bf16 %v3452, %v3444
    %v3469 = vpack.c.bf16 %v3453, %v3445
    %v3470 = vpack.c.bf16 %v3454, %v3446
    %v3471 = vpack.c.bf16 %v3455, %v3447
    %v3472 = vpack.c.bf16 %v3456, %v3448
    %v3473 = vpack.c.bf16 %v3457, %v3449
    %v3474 = vld [vmem:[#allocation11] sm:$0xff]
    %v3475 = vld [vmem:[#allocation11 + $0x8] sm:$0xff]
    %v3476 = vld [vmem:[#allocation11 + $0x10] sm:$0xff]
    %v3477 = vld [vmem:[#allocation11 + $0x18] sm:$0xff]
    %v3478 = vld [vmem:[#allocation11 + $0x20] sm:$0xff]
    %v3479 = vld [vmem:[#allocation11 + $0x28] sm:$0xff]
    %v3480 = vld [vmem:[#allocation11 + $0x30] sm:$0xff]
    %v3481 = vld [vmem:[#allocation11 + $0x38] sm:$0xff]
    %v3482 = vld [vmem:[#allocation11 + $0x40] sm:$0xff]
    %v3483 = vld [vmem:[#allocation11 + $0x48] sm:$0xff]
    %v3484 = vld [vmem:[#allocation11 + $0x50] sm:$0xff]
    %v3485 = vld [vmem:[#allocation11 + $0x58] sm:$0xff]
    %v3486 = vld [vmem:[#allocation11 + $0x60] sm:$0xff]
    %v3487 = vld [vmem:[#allocation11 + $0x68] sm:$0xff]
    %v3488 = vld [vmem:[#allocation11 + $0x70] sm:$0xff]
    %v3489 = vld [vmem:[#allocation11 + $0x78] sm:$0xff]
    %v3490 = vld [vmem:[#allocation11 + $0x80] sm:$0xff]
    %v3491 = vld [vmem:[#allocation11 + $0x88] sm:$0xff]
    %v3492 = vld [vmem:[#allocation11 + $0x90] sm:$0xff]
    %v3493 = vld [vmem:[#allocation11 + $0x98] sm:$0xff]
    %v3494 = vld [vmem:[#allocation11 + $0xa0] sm:$0xff]
    %v3495 = vld [vmem:[#allocation11 + $0xa8] sm:$0xff]
    %v3496 = vld [vmem:[#allocation11 + $0xb0] sm:$0xff]
    %v3497 = vld [vmem:[#allocation11 + $0xb8] sm:$0xff]
    %v3498 = vld [vmem:[#allocation11 + $0xc0] sm:$0xff]
    %v3499 = vld [vmem:[#allocation11 + $0xc8] sm:$0xff]
    %v3500 = vld [vmem:[#allocation11 + $0xd0] sm:$0xff]
    %v3501 = vld [vmem:[#allocation11 + $0xd8] sm:$0xff]
    %v3502 = vld [vmem:[#allocation11 + $0xe0] sm:$0xff]
    %v3503 = vld [vmem:[#allocation11 + $0xe8] sm:$0xff]
    %v3504 = vld [vmem:[#allocation11 + $0xf0] sm:$0xff]
    %v3505 = vld [vmem:[#allocation11 + $0xf8] sm:$0xff]
    %v3506 = vld [vmem:[#allocation11 + $0x100] sm:$0xff]
    %v3507 = vld [vmem:[#allocation11 + $0x108] sm:$0xff]
    %v3508 = vld [vmem:[#allocation11 + $0x110] sm:$0xff]
    %v3509 = vld [vmem:[#allocation11 + $0x118] sm:$0xff]
    %v3510 = vld [vmem:[#allocation11 + $0x120] sm:$0xff]
    %v3511 = vld [vmem:[#allocation11 + $0x128] sm:$0xff]
    %v3512 = vld [vmem:[#allocation11 + $0x130] sm:$0xff]
    %v3513 = vld [vmem:[#allocation11 + $0x138] sm:$0xff]
    %v3514 = vld [vmem:[#allocation11 + $0x140] sm:$0xff]
    %v3515 = vld [vmem:[#allocation11 + $0x148] sm:$0xff]
    %v3516 = vld [vmem:[#allocation11 + $0x150] sm:$0xff]
    %v3517 = vld [vmem:[#allocation11 + $0x158] sm:$0xff]
    %v3518 = vld [vmem:[#allocation11 + $0x160] sm:$0xff]
    %v3519 = vld [vmem:[#allocation11 + $0x168] sm:$0xff]
    %v3520 = vld [vmem:[#allocation11 + $0x170] sm:$0xff]
    %v3521 = vld [vmem:[#allocation11 + $0x178] sm:$0xff]
    %v3522 = vld [vmem:[#allocation11 + $0x180] sm:$0xff]
    %v3523 = vld [vmem:[#allocation11 + $0x188] sm:$0xff]
    %v3524 = vld [vmem:[#allocation11 + $0x190] sm:$0xff]
    %v3525 = vld [vmem:[#allocation11 + $0x198] sm:$0xff]
    %v3526 = vld [vmem:[#allocation11 + $0x1a0] sm:$0xff]
    %v3527 = vld [vmem:[#allocation11 + $0x1a8] sm:$0xff]
    %v3528 = vld [vmem:[#allocation11 + $0x1b0] sm:$0xff]
    %v3529 = vld [vmem:[#allocation11 + $0x1b8] sm:$0xff]
    %v3530 = vld [vmem:[#allocation11 + $0x1c0] sm:$0xff]
    %v3531 = vld [vmem:[#allocation11 + $0x1c8] sm:$0xff]
    %v3532 = vld [vmem:[#allocation11 + $0x1d0] sm:$0xff]
    %v3533 = vld [vmem:[#allocation11 + $0x1d8] sm:$0xff]
    %v3534 = vld [vmem:[#allocation11 + $0x1e0] sm:$0xff]
    %v3535 = vld [vmem:[#allocation11 + $0x1e8] sm:$0xff]
    %v3536 = vld [vmem:[#allocation11 + $0x1f0] sm:$0xff]
    %v3537 = vld [vmem:[#allocation11 + $0x1f8] sm:$0xff]
    %v3538 = vld [vmem:[#allocation11 + $0x200] sm:$0xff]
    %v3539 = vld [vmem:[#allocation11 + $0x208] sm:$0xff]
    %v3540 = vld [vmem:[#allocation11 + $0x210] sm:$0xff]
    %v3541 = vld [vmem:[#allocation11 + $0x218] sm:$0xff]
    %v3542 = vld [vmem:[#allocation11 + $0x220] sm:$0xff]
    %v3543 = vld [vmem:[#allocation11 + $0x228] sm:$0xff]
    %v3544 = vld [vmem:[#allocation11 + $0x230] sm:$0xff]
    %v3545 = vld [vmem:[#allocation11 + $0x238] sm:$0xff]
    %v3546 = vld [vmem:[#allocation11 + $0x240] sm:$0xff]
    %v3547 = vld [vmem:[#allocation11 + $0x248] sm:$0xff]
    %v3548 = vld [vmem:[#allocation11 + $0x250] sm:$0xff]
    %v3549 = vld [vmem:[#allocation11 + $0x258] sm:$0xff]
    %v3550 = vld [vmem:[#allocation11 + $0x260] sm:$0xff]
    %v3551 = vld [vmem:[#allocation11 + $0x268] sm:$0xff]
    %v3552 = vld [vmem:[#allocation11 + $0x270] sm:$0xff]
    %v3553 = vld [vmem:[#allocation11 + $0x278] sm:$0xff]
    %v3554 = vld [vmem:[#allocation11 + $0x280] sm:$0xff]
    %v3555 = vld [vmem:[#allocation11 + $0x288] sm:$0xff]
    %v3556 = vld [vmem:[#allocation11 + $0x290] sm:$0xff]
    %v3557 = vld [vmem:[#allocation11 + $0x298] sm:$0xff]
    %v3558 = vld [vmem:[#allocation11 + $0x2a0] sm:$0xff]
    %v3559 = vld [vmem:[#allocation11 + $0x2a8] sm:$0xff]
    %v3560 = vld [vmem:[#allocation11 + $0x2b0] sm:$0xff]
    %v3561 = vld [vmem:[#allocation11 + $0x2b8] sm:$0xff]
    %v3562 = vld [vmem:[#allocation11 + $0x2c0] sm:$0xff]
    %v3563 = vld [vmem:[#allocation11 + $0x2c8] sm:$0xff]
    %v3564 = vld [vmem:[#allocation11 + $0x2d0] sm:$0xff]
    %v3565 = vld [vmem:[#allocation11 + $0x2d8] sm:$0xff]
    %v3566 = vld [vmem:[#allocation11 + $0x2e0] sm:$0xff]
    %v3567 = vld [vmem:[#allocation11 + $0x2e8] sm:$0xff]
    %v3568 = vld [vmem:[#allocation11 + $0x2f0] sm:$0xff]
    %v3569 = vld [vmem:[#allocation11 + $0x2f8] sm:$0xff]
    %v3570 = vld [vmem:[#allocation11 + $0x300] sm:$0xff]
    %v3571 = vld [vmem:[#allocation11 + $0x308] sm:$0xff]
    %v3572 = vld [vmem:[#allocation11 + $0x310] sm:$0xff]
    %v3573 = vld [vmem:[#allocation11 + $0x318] sm:$0xff]
    %v3574 = vld [vmem:[#allocation11 + $0x320] sm:$0xff]
    %v3575 = vld [vmem:[#allocation11 + $0x328] sm:$0xff]
    %v3576 = vld [vmem:[#allocation11 + $0x330] sm:$0xff]
    %v3577 = vld [vmem:[#allocation11 + $0x338] sm:$0xff]
    %v3578 = vld [vmem:[#allocation11 + $0x340] sm:$0xff]
    %v3579 = vld [vmem:[#allocation11 + $0x348] sm:$0xff]
    %v3580 = vld [vmem:[#allocation11 + $0x350] sm:$0xff]
    %v3581 = vld [vmem:[#allocation11 + $0x358] sm:$0xff]
    %v3582 = vld [vmem:[#allocation11 + $0x360] sm:$0xff]
    %v3583 = vld [vmem:[#allocation11 + $0x368] sm:$0xff]
    %v3584 = vld [vmem:[#allocation11 + $0x370] sm:$0xff]
    %v3585 = vld [vmem:[#allocation11 + $0x378] sm:$0xff]
    %v3586 = vld [vmem:[#allocation11 + $0x380] sm:$0xff]
    %v3587 = vld [vmem:[#allocation11 + $0x388] sm:$0xff]
    %v3588 = vld [vmem:[#allocation11 + $0x390] sm:$0xff]
    %v3589 = vld [vmem:[#allocation11 + $0x398] sm:$0xff]
    %v3590 = vld [vmem:[#allocation11 + $0x3a0] sm:$0xff]
    %v3591 = vld [vmem:[#allocation11 + $0x3a8] sm:$0xff]
    %v3592 = vld [vmem:[#allocation11 + $0x3b0] sm:$0xff]
    %v3593 = vld [vmem:[#allocation11 + $0x3b8] sm:$0xff]
    %v3594 = vld [vmem:[#allocation11 + $0x3c0] sm:$0xff]
    %v3595 = vld [vmem:[#allocation11 + $0x3c8] sm:$0xff]
    %v3596 = vld [vmem:[#allocation11 + $0x3d0] sm:$0xff]
    %v3597 = vld [vmem:[#allocation11 + $0x3d8] sm:$0xff]
    %v3598 = vld [vmem:[#allocation11 + $0x3e0] sm:$0xff]
    %v3599 = vld [vmem:[#allocation11 + $0x3e8] sm:$0xff]
    %v3600 = vld [vmem:[#allocation11 + $0x3f0] sm:$0xff]
    %v3601 = vld [vmem:[#allocation11 + $0x3f8] sm:$0xff]
    %v3602 = vld [vmem:[%s7] sm:$0x3]
    %v3604 = vlaneseq
    %v3605 = vshrl.u32 %v3604, 7
    %v3606 = vsub.s32 0, %v3605
    %v3607 = vrot.slane %v3602, %v3606
    %v3608 = vlaneseq
    %v3609 = vshrl.u32 %v3608, 7
    %v3610 = vsub.s32 1, %v3609
    %v3611 = vrot.slane %v3602, %v3610
    %v3742 = vunpack.c.l.b16 %v3474
    %v3743 = vunpack.c.h.b16 %v3474
    %v3744 = vunpack.c.l.b16 %v3475
    %v3745 = vunpack.c.h.b16 %v3475
    %v3746 = vunpack.c.l.b16 %v3476
    %v3747 = vunpack.c.h.b16 %v3476
    %v3748 = vunpack.c.l.b16 %v3477
    %v3749 = vunpack.c.h.b16 %v3477
    %v3750 = vunpack.c.l.b16 %v3478
    %v3751 = vunpack.c.h.b16 %v3478
    %v3752 = vunpack.c.l.b16 %v3479
    %v3753 = vunpack.c.h.b16 %v3479
    %v3754 = vunpack.c.l.b16 %v3480
    %v3755 = vunpack.c.h.b16 %v3480
    %v3756 = vunpack.c.l.b16 %v3481
    %v3757 = vunpack.c.h.b16 %v3481
    %v3758 = vunpack.c.l.b16 %v3482
    %v3759 = vunpack.c.h.b16 %v3482
    %v3760 = vunpack.c.l.b16 %v3483
    %v3761 = vunpack.c.h.b16 %v3483
    %v3762 = vunpack.c.l.b16 %v3484
    %v3763 = vunpack.c.h.b16 %v3484
    %v3764 = vunpack.c.l.b16 %v3485
    %v3765 = vunpack.c.h.b16 %v3485
    %v3766 = vunpack.c.l.b16 %v3486
    %v3767 = vunpack.c.h.b16 %v3486
    %v3768 = vunpack.c.l.b16 %v3487
    %v3769 = vunpack.c.h.b16 %v3487
    %v3770 = vunpack.c.l.b16 %v3488
    %v3771 = vunpack.c.h.b16 %v3488
    %v3772 = vunpack.c.l.b16 %v3489
    %v3773 = vunpack.c.h.b16 %v3489
    %v3774 = vunpack.c.l.b16 %v3490
    %v3775 = vunpack.c.h.b16 %v3490
    %v3776 = vunpack.c.l.b16 %v3491
    %v3777 = vunpack.c.h.b16 %v3491
    %v3778 = vunpack.c.l.b16 %v3492
    %v3779 = vunpack.c.h.b16 %v3492
    %v3780 = vunpack.c.l.b16 %v3493
    %v3781 = vunpack.c.h.b16 %v3493
    %v3782 = vunpack.c.l.b16 %v3494
    %v3783 = vunpack.c.h.b16 %v3494
    %v3784 = vunpack.c.l.b16 %v3495
    %v3785 = vunpack.c.h.b16 %v3495
    %v3786 = vunpack.c.l.b16 %v3496
    %v3787 = vunpack.c.h.b16 %v3496
    %v3788 = vunpack.c.l.b16 %v3497
    %v3789 = vunpack.c.h.b16 %v3497
    %v3790 = vunpack.c.l.b16 %v3498
    %v3791 = vunpack.c.h.b16 %v3498
    %v3792 = vunpack.c.l.b16 %v3499
    %v3793 = vunpack.c.h.b16 %v3499
    %v3794 = vunpack.c.l.b16 %v3500
    %v3795 = vunpack.c.h.b16 %v3500
    %v3796 = vunpack.c.l.b16 %v3501
    %v3797 = vunpack.c.h.b16 %v3501
    %v3798 = vunpack.c.l.b16 %v3502
    %v3799 = vunpack.c.h.b16 %v3502
    %v3800 = vunpack.c.l.b16 %v3503
    %v3801 = vunpack.c.h.b16 %v3503
    %v3802 = vunpack.c.l.b16 %v3504
    %v3803 = vunpack.c.h.b16 %v3504
    %v3804 = vunpack.c.l.b16 %v3505
    %v3805 = vunpack.c.h.b16 %v3505
    %v3806 = vunpack.c.l.b16 %v3506
    %v3807 = vunpack.c.h.b16 %v3506
    %v3808 = vunpack.c.l.b16 %v3507
    %v3809 = vunpack.c.h.b16 %v3507
    %v3810 = vunpack.c.l.b16 %v3508
    %v3811 = vunpack.c.h.b16 %v3508
    %v3812 = vunpack.c.l.b16 %v3509
    %v3813 = vunpack.c.h.b16 %v3509
    %v3814 = vunpack.c.l.b16 %v3510
    %v3815 = vunpack.c.h.b16 %v3510
    %v3816 = vunpack.c.l.b16 %v3511
    %v3817 = vunpack.c.h.b16 %v3511
    %v3818 = vunpack.c.l.b16 %v3512
    %v3819 = vunpack.c.h.b16 %v3512
    %v3820 = vunpack.c.l.b16 %v3513
    %v3821 = vunpack.c.h.b16 %v3513
    %v3822 = vunpack.c.l.b16 %v3514
    %v3823 = vunpack.c.h.b16 %v3514
    %v3824 = vunpack.c.l.b16 %v3515
    %v3825 = vunpack.c.h.b16 %v3515
    %v3826 = vunpack.c.l.b16 %v3516
    %v3827 = vunpack.c.h.b16 %v3516
    %v3828 = vunpack.c.l.b16 %v3517
    %v3829 = vunpack.c.h.b16 %v3517
    %v3830 = vunpack.c.l.b16 %v3518
    %v3831 = vunpack.c.h.b16 %v3518
    %v3832 = vunpack.c.l.b16 %v3519
    %v3833 = vunpack.c.h.b16 %v3519
    %v3834 = vunpack.c.l.b16 %v3520
    %v3835 = vunpack.c.h.b16 %v3520
    %v3836 = vunpack.c.l.b16 %v3521
    %v3837 = vunpack.c.h.b16 %v3521
    %v3838 = vunpack.c.l.b16 %v3522
    %v3839 = vunpack.c.h.b16 %v3522
    %v3840 = vunpack.c.l.b16 %v3523
    %v3841 = vunpack.c.h.b16 %v3523
    %v3842 = vunpack.c.l.b16 %v3524
    %v3843 = vunpack.c.h.b16 %v3524
    %v3844 = vunpack.c.l.b16 %v3525
    %v3845 = vunpack.c.h.b16 %v3525
    %v3846 = vunpack.c.l.b16 %v3526
    %v3847 = vunpack.c.h.b16 %v3526
    %v3848 = vunpack.c.l.b16 %v3527
    %v3849 = vunpack.c.h.b16 %v3527
    %v3850 = vunpack.c.l.b16 %v3528
    %v3851 = vunpack.c.h.b16 %v3528
    %v3852 = vunpack.c.l.b16 %v3529
    %v3853 = vunpack.c.h.b16 %v3529
    %v3854 = vunpack.c.l.b16 %v3530
    %v3855 = vunpack.c.h.b16 %v3530
    %v3856 = vunpack.c.l.b16 %v3531
    %v3857 = vunpack.c.h.b16 %v3531
    %v3858 = vunpack.c.l.b16 %v3532
    %v3859 = vunpack.c.h.b16 %v3532
    %v3860 = vunpack.c.l.b16 %v3533
    %v3861 = vunpack.c.h.b16 %v3533
    %v3862 = vunpack.c.l.b16 %v3534
    %v3863 = vunpack.c.h.b16 %v3534
    %v3864 = vunpack.c.l.b16 %v3535
    %v3865 = vunpack.c.h.b16 %v3535
    %v3866 = vunpack.c.l.b16 %v3536
    %v3867 = vunpack.c.h.b16 %v3536
    %v3868 = vunpack.c.l.b16 %v3537
    %v3869 = vunpack.c.h.b16 %v3537
    %v3870 = vunpack.c.l.b16 %v3538
    %v3871 = vunpack.c.h.b16 %v3538
    %v3872 = vunpack.c.l.b16 %v3539
    %v3873 = vunpack.c.h.b16 %v3539
    %v3874 = vunpack.c.l.b16 %v3540
    %v3875 = vunpack.c.h.b16 %v3540
    %v3876 = vunpack.c.l.b16 %v3541
    %v3877 = vunpack.c.h.b16 %v3541
    %v3878 = vunpack.c.l.b16 %v3542
    %v3879 = vunpack.c.h.b16 %v3542
    %v3880 = vunpack.c.l.b16 %v3543
    %v3881 = vunpack.c.h.b16 %v3543
    %v3882 = vunpack.c.l.b16 %v3544
    %v3883 = vunpack.c.h.b16 %v3544
    %v3884 = vunpack.c.l.b16 %v3545
    %v3885 = vunpack.c.h.b16 %v3545
    %v3886 = vunpack.c.l.b16 %v3546
    %v3887 = vunpack.c.h.b16 %v3546
    %v3888 = vunpack.c.l.b16 %v3547
    %v3889 = vunpack.c.h.b16 %v3547
    %v3890 = vunpack.c.l.b16 %v3548
    %v3891 = vunpack.c.h.b16 %v3548
    %v3892 = vunpack.c.l.b16 %v3549
    %v3893 = vunpack.c.h.b16 %v3549
    %v3894 = vunpack.c.l.b16 %v3550
    %v3895 = vunpack.c.h.b16 %v3550
    %v3896 = vunpack.c.l.b16 %v3551
    %v3897 = vunpack.c.h.b16 %v3551
    %v3898 = vunpack.c.l.b16 %v3552
    %v3899 = vunpack.c.h.b16 %v3552
    %v3900 = vunpack.c.l.b16 %v3553
    %v3901 = vunpack.c.h.b16 %v3553
    %v3902 = vunpack.c.l.b16 %v3554
    %v3903 = vunpack.c.h.b16 %v3554
    %v3904 = vunpack.c.l.b16 %v3555
    %v3905 = vunpack.c.h.b16 %v3555
    %v3906 = vunpack.c.l.b16 %v3556
    %v3907 = vunpack.c.h.b16 %v3556
    %v3908 = vunpack.c.l.b16 %v3557
    %v3909 = vunpack.c.h.b16 %v3557
    %v3910 = vunpack.c.l.b16 %v3558
    %v3911 = vunpack.c.h.b16 %v3558
    %v3912 = vunpack.c.l.b16 %v3559
    %v3913 = vunpack.c.h.b16 %v3559
    %v3914 = vunpack.c.l.b16 %v3560
    %v3915 = vunpack.c.h.b16 %v3560
    %v3916 = vunpack.c.l.b16 %v3561
    %v3917 = vunpack.c.h.b16 %v3561
    %v3918 = vunpack.c.l.b16 %v3562
    %v3919 = vunpack.c.h.b16 %v3562
    %v3920 = vunpack.c.l.b16 %v3563
    %v3921 = vunpack.c.h.b16 %v3563
    %v3922 = vunpack.c.l.b16 %v3564
    %v3923 = vunpack.c.h.b16 %v3564
    %v3924 = vunpack.c.l.b16 %v3565
    %v3925 = vunpack.c.h.b16 %v3565
    %v3926 = vunpack.c.l.b16 %v3566
    %v3927 = vunpack.c.h.b16 %v3566
    %v3928 = vunpack.c.l.b16 %v3567
    %v3929 = vunpack.c.h.b16 %v3567
    %v3930 = vunpack.c.l.b16 %v3568
    %v3931 = vunpack.c.h.b16 %v3568
    %v3932 = vunpack.c.l.b16 %v3569
    %v3933 = vunpack.c.h.b16 %v3569
    %v3934 = vunpack.c.l.b16 %v3570
    %v3935 = vunpack.c.h.b16 %v3570
    %v3936 = vunpack.c.l.b16 %v3571
    %v3937 = vunpack.c.h.b16 %v3571
    %v3938 = vunpack.c.l.b16 %v3572
    %v3939 = vunpack.c.h.b16 %v3572
    %v3940 = vunpack.c.l.b16 %v3573
    %v3941 = vunpack.c.h.b16 %v3573
    %v3942 = vunpack.c.l.b16 %v3574
    %v3943 = vunpack.c.h.b16 %v3574
    %v3944 = vunpack.c.l.b16 %v3575
    %v3945 = vunpack.c.h.b16 %v3575
    %v3946 = vunpack.c.l.b16 %v3576
    %v3947 = vunpack.c.h.b16 %v3576
    %v3948 = vunpack.c.l.b16 %v3577
    %v3949 = vunpack.c.h.b16 %v3577
    %v3950 = vunpack.c.l.b16 %v3578
    %v3951 = vunpack.c.h.b16 %v3578
    %v3952 = vunpack.c.l.b16 %v3579
    %v3953 = vunpack.c.h.b16 %v3579
    %v3954 = vunpack.c.l.b16 %v3580
    %v3955 = vunpack.c.h.b16 %v3580
    %v3956 = vunpack.c.l.b16 %v3581
    %v3957 = vunpack.c.h.b16 %v3581
    %v3958 = vunpack.c.l.b16 %v3582
    %v3959 = vunpack.c.h.b16 %v3582
    %v3960 = vunpack.c.l.b16 %v3583
    %v3961 = vunpack.c.h.b16 %v3583
    %v3962 = vunpack.c.l.b16 %v3584
    %v3963 = vunpack.c.h.b16 %v3584
    %v3964 = vunpack.c.l.b16 %v3585
    %v3965 = vunpack.c.h.b16 %v3585
    %v3966 = vunpack.c.l.b16 %v3586
    %v3967 = vunpack.c.h.b16 %v3586
    %v3968 = vunpack.c.l.b16 %v3587
    %v3969 = vunpack.c.h.b16 %v3587
    %v3970 = vunpack.c.l.b16 %v3588
    %v3971 = vunpack.c.h.b16 %v3588
    %v3972 = vunpack.c.l.b16 %v3589
    %v3973 = vunpack.c.h.b16 %v3589
    %v3974 = vunpack.c.l.b16 %v3590
    %v3975 = vunpack.c.h.b16 %v3590
    %v3976 = vunpack.c.l.b16 %v3591
    %v3977 = vunpack.c.h.b16 %v3591
    %v3978 = vunpack.c.l.b16 %v3592
    %v3979 = vunpack.c.h.b16 %v3592
    %v3980 = vunpack.c.l.b16 %v3593
    %v3981 = vunpack.c.h.b16 %v3593
    %v3982 = vunpack.c.l.b16 %v3594
    %v3983 = vunpack.c.h.b16 %v3594
    %v3984 = vunpack.c.l.b16 %v3595
    %v3985 = vunpack.c.h.b16 %v3595
    %v3986 = vunpack.c.l.b16 %v3596
    %v3987 = vunpack.c.h.b16 %v3596
    %v3988 = vunpack.c.l.b16 %v3597
    %v3989 = vunpack.c.h.b16 %v3597
    %v3990 = vunpack.c.l.b16 %v3598
    %v3991 = vunpack.c.h.b16 %v3598
    %v3992 = vunpack.c.l.b16 %v3599
    %v3993 = vunpack.c.h.b16 %v3599
    %v3994 = vunpack.c.l.b16 %v3600
    %v3995 = vunpack.c.h.b16 %v3600
    %v3996 = vunpack.c.l.b16 %v3601
    %v3997 = vunpack.c.h.b16 %v3601
    %v3998 = vpack.c.b16 %v3744, %v3742
    %v3999 = vpack.c.b16 %v3745, %v3743
    %v4000 = vpack.c.b16 %v3748, %v3746
    %v4001 = vpack.c.b16 %v3749, %v3747
    %v4002 = vpack.c.b16 %v3752, %v3750
    %v4003 = vpack.c.b16 %v3753, %v3751
    %v4004 = vpack.c.b16 %v3756, %v3754
    %v4005 = vpack.c.b16 %v3757, %v3755
    %v4006 = vpack.c.b16 %v3760, %v3758
    %v4007 = vpack.c.b16 %v3761, %v3759
    %v4008 = vpack.c.b16 %v3764, %v3762
    %v4009 = vpack.c.b16 %v3765, %v3763
    %v4010 = vpack.c.b16 %v3768, %v3766
    %v4011 = vpack.c.b16 %v3769, %v3767
    %v4012 = vpack.c.b16 %v3772, %v3770
    %v4013 = vpack.c.b16 %v3773, %v3771
    %v4014 = vpack.c.b16 %v3776, %v3774
    %v4015 = vpack.c.b16 %v3777, %v3775
    %v4016 = vpack.c.b16 %v3780, %v3778
    %v4017 = vpack.c.b16 %v3781, %v3779
    %v4018 = vpack.c.b16 %v3784, %v3782
    %v4019 = vpack.c.b16 %v3785, %v3783
    %v4020 = vpack.c.b16 %v3788, %v3786
    %v4021 = vpack.c.b16 %v3789, %v3787
    %v4022 = vpack.c.b16 %v3792, %v3790
    %v4023 = vpack.c.b16 %v3793, %v3791
    %v4024 = vpack.c.b16 %v3796, %v3794
    %v4025 = vpack.c.b16 %v3797, %v3795
    %v4026 = vpack.c.b16 %v3800, %v3798
    %v4027 = vpack.c.b16 %v3801, %v3799
    %v4028 = vpack.c.b16 %v3804, %v3802
    %v4029 = vpack.c.b16 %v3805, %v3803
    %v4030 = vpack.c.b16 %v3808, %v3806
    %v4031 = vpack.c.b16 %v3809, %v3807
    %v4032 = vpack.c.b16 %v3812, %v3810
    %v4033 = vpack.c.b16 %v3813, %v3811
    %v4034 = vpack.c.b16 %v3816, %v3814
    %v4035 = vpack.c.b16 %v3817, %v3815
    %v4036 = vpack.c.b16 %v3820, %v3818
    %v4037 = vpack.c.b16 %v3821, %v3819
    %v4038 = vpack.c.b16 %v3824, %v3822
    %v4039 = vpack.c.b16 %v3825, %v3823
    %v4040 = vpack.c.b16 %v3828, %v3826
    %v4041 = vpack.c.b16 %v3829, %v3827
    %v4042 = vpack.c.b16 %v3832, %v3830
    %v4043 = vpack.c.b16 %v3833, %v3831
    %v4044 = vpack.c.b16 %v3836, %v3834
    %v4045 = vpack.c.b16 %v3837, %v3835
    %v4046 = vpack.c.b16 %v3840, %v3838
    %v4047 = vpack.c.b16 %v3841, %v3839
    %v4048 = vpack.c.b16 %v3844, %v3842
    %v4049 = vpack.c.b16 %v3845, %v3843
    %v4050 = vpack.c.b16 %v3848, %v3846
    %v4051 = vpack.c.b16 %v3849, %v3847
    %v4052 = vpack.c.b16 %v3852, %v3850
    %v4053 = vpack.c.b16 %v3853, %v3851
    %v4054 = vpack.c.b16 %v3856, %v3854
    %v4055 = vpack.c.b16 %v3857, %v3855
    %v4056 = vpack.c.b16 %v3860, %v3858
    %v4057 = vpack.c.b16 %v3861, %v3859
    %v4058 = vpack.c.b16 %v3864, %v3862
    %v4059 = vpack.c.b16 %v3865, %v3863
    %v4060 = vpack.c.b16 %v3868, %v3866
    %v4061 = vpack.c.b16 %v3869, %v3867
    %v4062 = vpack.c.b16 %v3872, %v3870
    %v4063 = vpack.c.b16 %v3873, %v3871
    %v4064 = vpack.c.b16 %v3876, %v3874
    %v4065 = vpack.c.b16 %v3877, %v3875
    %v4066 = vpack.c.b16 %v3880, %v3878
    %v4067 = vpack.c.b16 %v3881, %v3879
    %v4068 = vpack.c.b16 %v3884, %v3882
    %v4069 = vpack.c.b16 %v3885, %v3883
    %v4070 = vpack.c.b16 %v3888, %v3886
    %v4071 = vpack.c.b16 %v3889, %v3887
    %v4072 = vpack.c.b16 %v3892, %v3890
    %v4073 = vpack.c.b16 %v3893, %v3891
    %v4074 = vpack.c.b16 %v3896, %v3894
    %v4075 = vpack.c.b16 %v3897, %v3895
    %v4076 = vpack.c.b16 %v3900, %v3898
    %v4077 = vpack.c.b16 %v3901, %v3899
    %v4078 = vpack.c.b16 %v3904, %v3902
    %v4079 = vpack.c.b16 %v3905, %v3903
    %v4080 = vpack.c.b16 %v3908, %v3906
    %v4081 = vpack.c.b16 %v3909, %v3907
    %v4082 = vpack.c.b16 %v3912, %v3910
    %v4083 = vpack.c.b16 %v3913, %v3911
    %v4084 = vpack.c.b16 %v3916, %v3914
    %v4085 = vpack.c.b16 %v3917, %v3915
    %v4086 = vpack.c.b16 %v3920, %v3918
    %v4087 = vpack.c.b16 %v3921, %v3919
    %v4088 = vpack.c.b16 %v3924, %v3922
    %v4089 = vpack.c.b16 %v3925, %v3923
    %v4090 = vpack.c.b16 %v3928, %v3926
    %v4091 = vpack.c.b16 %v3929, %v3927
    %v4092 = vpack.c.b16 %v3932, %v3930
    %v4093 = vpack.c.b16 %v3933, %v3931
    %v4094 = vpack.c.b16 %v3936, %v3934
    %v4095 = vpack.c.b16 %v3937, %v3935
    %v4096 = vpack.c.b16 %v3940, %v3938
    %v4097 = vpack.c.b16 %v3941, %v3939
    %v4098 = vpack.c.b16 %v3944, %v3942
    %v4099 = vpack.c.b16 %v3945, %v3943
    %v4100 = vpack.c.b16 %v3948, %v3946
    %v4101 = vpack.c.b16 %v3949, %v3947
    %v4102 = vpack.c.b16 %v3952, %v3950
    %v4103 = vpack.c.b16 %v3953, %v3951
    %v4104 = vpack.c.b16 %v3956, %v3954
    %v4105 = vpack.c.b16 %v3957, %v3955
    %v4106 = vpack.c.b16 %v3960, %v3958
    %v4107 = vpack.c.b16 %v3961, %v3959
    %v4108 = vpack.c.b16 %v3964, %v3962
    %v4109 = vpack.c.b16 %v3965, %v3963
    %v4110 = vpack.c.b16 %v3968, %v3966
    %v4111 = vpack.c.b16 %v3969, %v3967
    %v4112 = vpack.c.b16 %v3972, %v3970
    %v4113 = vpack.c.b16 %v3973, %v3971
    %v4114 = vpack.c.b16 %v3976, %v3974
    %v4115 = vpack.c.b16 %v3977, %v3975
    %v4116 = vpack.c.b16 %v3980, %v3978
    %v4117 = vpack.c.b16 %v3981, %v3979
    %v4118 = vpack.c.b16 %v3984, %v3982
    %v4119 = vpack.c.b16 %v3985, %v3983
    %v4120 = vpack.c.b16 %v3988, %v3986
    %v4121 = vpack.c.b16 %v3989, %v3987
    %v4122 = vpack.c.b16 %v3992, %v3990
    %v4123 = vpack.c.b16 %v3993, %v3991
    %v4124 = vpack.c.b16 %v3996, %v3994
    %v4125 = vpack.c.b16 %v3997, %v3995
    %4254 = vmatprep.subr.bf16.mxu0 %v4013
    %4255 = vmatpush1.bf16.msra.mxu0 %v4012
    %4256 = vmatprep.subr.bf16.mxu0 %v4011
    %4257 = vmatpush1.bf16.msra.mxu0 %v4010
    %4258 = vmatprep.subr.bf16.mxu0 %v4009
    %4259 = vmatpush1.bf16.msra.mxu0 %v4008
    %4260 = vmatprep.subr.bf16.mxu0 %v4007
    %4261 = vmatpush1.bf16.msra.mxu0 %v4006
    %4262 = vmatprep.subr.bf16.mxu0 %v4005
    %4263 = vmatpush1.bf16.msra.mxu0 %v4004
    %4264 = vmatprep.subr.bf16.mxu0 %v4003
    %4265 = vmatpush1.bf16.msra.mxu0 %v4002
    %4266 = vmatprep.subr.bf16.mxu0 %v4001
    %4267 = vmatpush1.bf16.msra.mxu0 %v4000
    %4268 = vmatprep.subr.bf16.mxu0 %v3999
    %4269 = vmatpush1.bf16.msra.mxu0 %v3998
    %4270 = vmatprep.subr.bf16.mxu0 %v4029
    %4271 = vmatpush2.bf16.msra.mxu0 %v4028
    %4272 = vmatprep.subr.bf16.mxu0 %v4027
    %4273 = vmatpush2.bf16.msra.mxu0 %v4026
    %4274 = vmatprep.subr.bf16.mxu0 %v4025
    %4275 = vmatpush2.bf16.msra.mxu0 %v4024
    %4276 = vmatprep.subr.bf16.mxu0 %v4023
    %4277 = vmatpush2.bf16.msra.mxu0 %v4022
    %4278 = vmatprep.subr.bf16.mxu0 %v4021
    %4279 = vmatpush2.bf16.msra.mxu0 %v4020
    %4280 = vmatprep.subr.bf16.mxu0 %v4019
    %4281 = vmatpush2.bf16.msra.mxu0 %v4018
    %4282 = vmatprep.subr.bf16.mxu0 %v4017
    %4283 = vmatpush2.bf16.msra.mxu0 %v4016
    %4284 = vmatprep.subr.bf16.mxu0 %v4015
    %4285 = vmatpush2.bf16.msra.mxu0 %v4014
    %4286 = vmatprep.mubr.bf16.mxu0 %v3459
    %4287 = vmatmul.mubr.bf16.gmra.mxu0 %v3458
    %v4288 = vpop.f32.mrf.mxu0
    %v4289 = vadd.f32 %v3607, %v4288
    %v4290 = vpop.f32.mrf.mxu0
    %v4291 = vadd.f32 %v3611, %v4290
    %v4292 = vpop.f32.mrf.mxu0
    %v4293 = vadd.f32 %v3607, %v4292
    %v4294 = vpop.f32.mrf.mxu0
    %v4295 = vadd.f32 %v3611, %v4294
    %4296 = vmatprep.mubr.bf16.mxu0 %v3467
    %4297 = vmatmul.mubr.bf16.gmra.mxu0 %v3466
    %v4298 = vpop.f32.mrf.mxu0
    %v4299 = vadd.f32 %v3607, %v4298
    %v4300 = vpop.f32.mrf.mxu0
    %v4301 = vadd.f32 %v3611, %v4300
    %v4302 = vpop.f32.mrf.mxu0
    %v4303 = vadd.f32 %v3607, %v4302
    %v4304 = vpop.f32.mrf.mxu0
    %v4305 = vadd.f32 %v3611, %v4304
    %4306 = vdwg.mxu0
    %4307 = vmatprep.subr.bf16.mxu0 %v4045
    %4308 = vmatpush1.bf16.msra.mxu0 %v4044
    %4309 = vmatprep.subr.bf16.mxu0 %v4043
    %4310 = vmatpush1.bf16.msra.mxu0 %v4042
    %4311 = vmatprep.subr.bf16.mxu0 %v4041
    %4312 = vmatpush1.bf16.msra.mxu0 %v4040
    %4313 = vmatprep.subr.bf16.mxu0 %v4039
    %4314 = vmatpush1.bf16.msra.mxu0 %v4038
    %4315 = vmatprep.subr.bf16.mxu0 %v4037
    %4316 = vmatpush1.bf16.msra.mxu0 %v4036
    %4317 = vmatprep.subr.bf16.mxu0 %v4035
    %4318 = vmatpush1.bf16.msra.mxu0 %v4034
    %4319 = vmatprep.subr.bf16.mxu0 %v4033
    %4320 = vmatpush1.bf16.msra.mxu0 %v4032
    %4321 = vmatprep.subr.bf16.mxu0 %v4031
    %4322 = vmatpush1.bf16.msra.mxu0 %v4030
    %4323 = vmatprep.subr.bf16.mxu0 %v4061
    %4324 = vmatpush2.bf16.msra.mxu0 %v4060
    %4325 = vmatprep.subr.bf16.mxu0 %v4059
    %4326 = vmatpush2.bf16.msra.mxu0 %v4058
    %4327 = vmatprep.subr.bf16.mxu0 %v4057
    %4328 = vmatpush2.bf16.msra.mxu0 %v4056
    %4329 = vmatprep.subr.bf16.mxu0 %v4055
    %4330 = vmatpush2.bf16.msra.mxu0 %v4054
    %4331 = vmatprep.subr.bf16.mxu0 %v4053
    %4332 = vmatpush2.bf16.msra.mxu0 %v4052
    %4333 = vmatprep.subr.bf16.mxu0 %v4051
    %4334 = vmatpush2.bf16.msra.mxu0 %v4050
    %4335 = vmatprep.subr.bf16.mxu0 %v4049
    %4336 = vmatpush2.bf16.msra.mxu0 %v4048
    %4337 = vmatprep.subr.bf16.mxu0 %v4047
    %4338 = vmatpush2.bf16.msra.mxu0 %v4046
    %4339 = vmatprep.mubr.bf16.mxu0 %v3461
    %4340 = vmatmul.mubr.bf16.gmra.mxu0 %v3460
    %v4341 = vpop.f32.mrf.mxu0
    %v4342 = vadd.f32 %v4289, %v4341
    %v4343 = vpop.f32.mrf.mxu0
    %v4344 = vadd.f32 %v4291, %v4343
    %v4345 = vpop.f32.mrf.mxu0
    %v4346 = vadd.f32 %v4293, %v4345
    %v4347 = vpop.f32.mrf.mxu0
    %v4348 = vadd.f32 %v4295, %v4347
    %4349 = vmatprep.mubr.bf16.mxu0 %v3469
    %4350 = vmatmul.mubr.bf16.gmra.mxu0 %v3468
    %v4351 = vpop.f32.mrf.mxu0
    %v4352 = vadd.f32 %v4299, %v4351
    %v4353 = vpop.f32.mrf.mxu0
    %v4354 = vadd.f32 %v4301, %v4353
    %v4355 = vpop.f32.mrf.mxu0
    %v4356 = vadd.f32 %v4303, %v4355
    %v4357 = vpop.f32.mrf.mxu0
    %v4358 = vadd.f32 %v4305, %v4357
    %4359 = vdwg.mxu0
    %4360 = vmatprep.subr.bf16.mxu0 %v4077
    %4361 = vmatpush1.bf16.msra.mxu0 %v4076
    %4362 = vmatprep.subr.bf16.mxu0 %v4075
    %4363 = vmatpush1.bf16.msra.mxu0 %v4074
    %4364 = vmatprep.subr.bf16.mxu0 %v4073
    %4365 = vmatpush1.bf16.msra.mxu0 %v4072
    %4366 = vmatprep.subr.bf16.mxu0 %v4071
    %4367 = vmatpush1.bf16.msra.mxu0 %v4070
    %4368 = vmatprep.subr.bf16.mxu0 %v4069
    %4369 = vmatpush1.bf16.msra.mxu0 %v4068
    %4370 = vmatprep.subr.bf16.mxu0 %v4067
    %4371 = vmatpush1.bf16.msra.mxu0 %v4066
    %4372 = vmatprep.subr.bf16.mxu0 %v4065
    %4373 = vmatpush1.bf16.msra.mxu0 %v4064
    %4374 = vmatprep.subr.bf16.mxu0 %v4063
    %4375 = vmatpush1.bf16.msra.mxu0 %v4062
    %4376 = vmatprep.subr.bf16.mxu0 %v4093
    %4377 = vmatpush2.bf16.msra.mxu0 %v4092
    %4378 = vmatprep.subr.bf16.mxu0 %v4091
    %4379 = vmatpush2.bf16.msra.mxu0 %v4090
    %4380 = vmatprep.subr.bf16.mxu0 %v4089
    %4381 = vmatpush2.bf16.msra.mxu0 %v4088
    %4382 = vmatprep.subr.bf16.mxu0 %v4087
    %4383 = vmatpush2.bf16.msra.mxu0 %v4086
    %4384 = vmatprep.subr.bf16.mxu0 %v4085
    %4385 = vmatpush2.bf16.msra.mxu0 %v4084
    %4386 = vmatprep.subr.bf16.mxu0 %v4083
    %4387 = vmatpush2.bf16.msra.mxu0 %v4082
    %4388 = vmatprep.subr.bf16.mxu0 %v4081
    %4389 = vmatpush2.bf16.msra.mxu0 %v4080
    %4390 = vmatprep.subr.bf16.mxu0 %v4079
    %4391 = vmatpush2.bf16.msra.mxu0 %v4078
    %4392 = vmatprep.mubr.bf16.mxu0 %v3463
    %4393 = vmatmul.mubr.bf16.gmra.mxu0 %v3462
    %v4394 = vpop.f32.mrf.mxu0
    %v4395 = vadd.f32 %v4342, %v4394
    %v4396 = vpop.f32.mrf.mxu0
    %v4397 = vadd.f32 %v4344, %v4396
    %v4398 = vpop.f32.mrf.mxu0
    %v4399 = vadd.f32 %v4346, %v4398
    %v4400 = vpop.f32.mrf.mxu0
    %v4401 = vadd.f32 %v4348, %v4400
    %4402 = vmatprep.mubr.bf16.mxu0 %v3471
    %4403 = vmatmul.mubr.bf16.gmra.mxu0 %v3470
    %v4404 = vpop.f32.mrf.mxu0
    %v4405 = vadd.f32 %v4352, %v4404
    %v4406 = vpop.f32.mrf.mxu0
    %v4407 = vadd.f32 %v4354, %v4406
    %v4408 = vpop.f32.mrf.mxu0
    %v4409 = vadd.f32 %v4356, %v4408
    %v4410 = vpop.f32.mrf.mxu0
    %v4411 = vadd.f32 %v4358, %v4410
    %4412 = vdwg.mxu0
    %4413 = vmatprep.subr.bf16.mxu0 %v4109
    %4414 = vmatpush1.bf16.msra.mxu0 %v4108
    %4415 = vmatprep.subr.bf16.mxu0 %v4107
    %4416 = vmatpush1.bf16.msra.mxu0 %v4106
    %4417 = vmatprep.subr.bf16.mxu0 %v4105
    %4418 = vmatpush1.bf16.msra.mxu0 %v4104
    %4419 = vmatprep.subr.bf16.mxu0 %v4103
    %4420 = vmatpush1.bf16.msra.mxu0 %v4102
    %4421 = vmatprep.subr.bf16.mxu0 %v4101
    %4422 = vmatpush1.bf16.msra.mxu0 %v4100
    %4423 = vmatprep.subr.bf16.mxu0 %v4099
    %4424 = vmatpush1.bf16.msra.mxu0 %v4098
    %4425 = vmatprep.subr.bf16.mxu0 %v4097
    %4426 = vmatpush1.bf16.msra.mxu0 %v4096
    %4427 = vmatprep.subr.bf16.mxu0 %v4095
    %4428 = vmatpush1.bf16.msra.mxu0 %v4094
    %4429 = vmatprep.subr.bf16.mxu0 %v4125
    %4430 = vmatpush2.bf16.msra.mxu0 %v4124
    %4431 = vmatprep.subr.bf16.mxu0 %v4123
    %4432 = vmatpush2.bf16.msra.mxu0 %v4122
    %4433 = vmatprep.subr.bf16.mxu0 %v4121
    %4434 = vmatpush2.bf16.msra.mxu0 %v4120
    %4435 = vmatprep.subr.bf16.mxu0 %v4119
    %4436 = vmatpush2.bf16.msra.mxu0 %v4118
    %4437 = vmatprep.subr.bf16.mxu0 %v4117
    %4438 = vmatpush2.bf16.msra.mxu0 %v4116
    %4439 = vmatprep.subr.bf16.mxu0 %v4115
    %4440 = vmatpush2.bf16.msra.mxu0 %v4114
    %4441 = vmatprep.subr.bf16.mxu0 %v4113
    %4442 = vmatpush2.bf16.msra.mxu0 %v4112
    %4443 = vmatprep.subr.bf16.mxu0 %v4111
    %4444 = vmatpush2.bf16.msra.mxu0 %v4110
    %4445 = vmatprep.mubr.bf16.mxu0 %v3465
    %4446 = vmatmul.mubr.bf16.gmra.mxu0 %v3464
    %v4447 = vpop.f32.mrf.mxu0
    %v4448 = vadd.f32 %v4395, %v4447
    %v4449 = vpop.f32.mrf.mxu0
    %v4450 = vadd.f32 %v4397, %v4449
    %v4451 = vpop.f32.mrf.mxu0
    %v4452 = vadd.f32 %v4399, %v4451
    %v4453 = vpop.f32.mrf.mxu0
    %v4454 = vadd.f32 %v4401, %v4453
    %4455 = vmatprep.mubr.bf16.mxu0 %v3473
    %4456 = vmatmul.mubr.bf16.gmra.mxu0 %v3472
    %v4457 = vpop.f32.mrf.mxu0
    %v4458 = vadd.f32 %v4405, %v4457
    %v4459 = vpop.f32.mrf.mxu0
    %v4460 = vadd.f32 %v4407, %v4459
    %v4461 = vpop.f32.mrf.mxu0
    %v4462 = vadd.f32 %v4409, %v4461
    %v4463 = vpop.f32.mrf.mxu0
    %v4464 = vadd.f32 %v4411, %v4463
    %4465 = vdwg.mxu0
    %v4466 = vadd.f32 %v1476, %v4448
    %v4467 = vadd.f32 %v1477, %v4450
    %v4468 = vadd.f32 %v1478, %v4452
    %v4469 = vadd.f32 %v1479, %v4454
    %v4470 = vadd.f32 %v1480, %v4458
    %v4471 = vadd.f32 %v1481, %v4460
    %v4472 = vadd.f32 %v1482, %v4462
    %v4473 = vadd.f32 %v1483, %v4464
    %4474 = vst [vmem:[#allocation13] sm:$0xff] %v4466
    %4475 = vst [vmem:[#allocation13 + $0x8] sm:$0xff] %v4467
    %4476 = vst [vmem:[#allocation13 + $0x10] sm:$0xff] %v4468
    %4477 = vst [vmem:[#allocation13 + $0x18] sm:$0xff] %v4469
    %4478 = vst [vmem:[#allocation13 + $0x20] sm:$0xff] %v4470
    %4479 = vst [vmem:[#allocation13 + $0x28] sm:$0xff] %v4471
    %4480 = vst [vmem:[#allocation13 + $0x30] sm:$0xff] %v4472
    %4481 = vst [vmem:[#allocation13 + $0x38] sm:$0xff] %v4473
    // Predicated region
    $region58: #{tpu_custom_call.1} parent=1 // pred_check
      _
    $region59: #{tpu_custom_call.1} parent=1 // pred_check_branch
      %4483 = sbr.rel (0) target = $region61
    $region60: #{tpu_custom_call.1} parent=1 // pred_region
      %s4485 = ssub.s32 1024, 1024
      %4486 = vsyncadd [#allocation4], %s4485
      %s4487 = sshll.u32 [#allocation13], 4
      %s4488 = int_to_ptr.vmem [resolvable:$true] %s4487
      %4493 = dma.vmem_to_hbm [thread:$0]  %s4488, 1024, %s8, [#allocation4], 256, 256, 16
    $region61: #{tpu_custom_call.1} parent=1 // pred_fallthru
      _
    // Predicated region
    $region62: #{tpu_custom_call.1} parent=1 // pred_check
      _
    $region63: #{tpu_custom_call.1} parent=1 // pred_check_branch
      %4495 = sbr.rel (0) target = $region65
    $region64: #{tpu_custom_call.1} parent=1 // pred_region
      %4496 = dma.done [#allocation4], 1024
    $region65: #{tpu_custom_call.1} parent=1 // pred_fallthru
      _
    %4497 = vsyncpa [#allocation3], 1
    %4498 = vsyncpa [#allocation6], 1
    %4499 = vsyncpa [#allocation9], 1
    %4500 = vsyncpa [#allocation12], 1
    %4501 = vsyncpa [#allocation4], 1

</llo_original>
